<compile_context>
chip_gen: v6e
topology: v6e:2x2x1
jax: 0.10.0
libtpu: 0.0.40
codegen_flags: <defaults>
</compile_context>

<pallas_src>
import jax
import jax.numpy as jnp
from jax import lax
from jax.experimental import pallas as pl
from jax.experimental.pallas import tpu as pltpu


IN_DIM = 784
IN_PAD = 896          # 7 * 128 : lane-dense K for the first matmul
HID_DIM = 512
OUT_DIM = 10
OUT_PAD = 128         # lane-dense output stores + full MXU columns on layer 2
DROP_P = 0.2
KEEP_SCALE = 1.0 / (1.0 - DROP_P)          # 1.25
KEEP_THRESH_31 = int((1.0 - DROP_P) * (1 << 31))   # floor(0.8 * 2^31)
TB = 128              # batch tile (MXU-row aligned on all of v5e/v6e/v7x)


def mlp_kernel(seed_ref, x_ref, w1_ref, b1_ref, w2_ref, b2_ref, o_ref):
    # ---- Linear 1 + ReLU (MXU matmul, f32 accumulation) ----
    x = x_ref[...]                                                # (TB, IN_PAD)
    h = jnp.dot(x, w1_ref[...], preferred_element_type=jnp.float32)
    h = h + b1_ref[...]                                           # broadcast (1, 512)
    h = jnp.maximum(h, 0.0)

    # ---- Dropout(p=0.2), inverted scaling, per-tile-independent hash PRNG ----
    tb = h.shape[0]
    row = lax.broadcasted_iota(jnp.int32, h.shape, 0) + pl.program_id(0) * tb
    col = lax.broadcasted_iota(jnp.int32, h.shape, 1)
    lin = (row * HID_DIM + col).astype(jnp.uint32)                # unique per element
    seed_u = seed_ref[0].astype(jnp.uint32)
    k = lin ^ (seed_u * jnp.uint32(0x9E3779B9))
    # splitmix32-style avalanche (all VALU int ops)
    k = (k ^ (k >> 16)) * jnp.uint32(0x7FEB352D)
    k = (k ^ (k >> 15)) * jnp.uint32(0x846CA68B)
    k = k ^ (k >> 16)
    keep = (k >> 1) < jnp.uint32(KEEP_THRESH_31)                  # P(keep) = 0.8
    h = jnp.where(keep, h * jnp.float32(KEEP_SCALE), jnp.float32(0.0))

    # ---- Linear 2 (padded to 128 lanes) + Sigmoid + round to 4 decimals ----
    logits = jnp.dot(h, w2_ref[...], preferred_element_type=jnp.float32)
    logits = logits + b2_ref[...]                                 # broadcast (1, 128)
    y = jax.nn.sigmoid(logits)
    o_ref[...] = jnp.round(y * 1e4) / 1e4


def solution_forward(images, w1, b1, w2, b2, seed):
    """images: (B, 784) f32; w1: (784, 512); b1: (1, 512); w2: (512, 10); b2: (1, 10)."""
    B = images.shape[0]
    pad_b = (-B) % TB

    # Zero-pad to lane/tile-friendly shapes (pure layout plumbing, no numeric change).
    x_p = jnp.pad(images, ((0, pad_b), (0, IN_PAD - IN_DIM)))
    w1_p = jnp.pad(w1, ((0, IN_PAD - IN_DIM), (0, 0)))
    w2_p = jnp.pad(w2, ((0, 0), (0, OUT_PAD - OUT_DIM)))
    b2_p = jnp.pad(b2, ((0, 0), (0, OUT_PAD - OUT_DIM)))
    Bp = B + pad_b

    out = pl.pallas_call(
        mlp_kernel,
        out_shape=jax.ShapeDtypeStruct((Bp, OUT_PAD), jnp.float32),
        grid_spec=pltpu.PrefetchScalarGridSpec(
            num_scalar_prefetch=1,                      # seed lives in SMEM
            grid=(Bp // TB,),
            in_specs=[
                pl.BlockSpec((TB, IN_PAD), lambda i, seed: (i, 0)),      # x tile
                pl.BlockSpec((IN_PAD, HID_DIM), lambda i, seed: (0, 0)),  # w1 (resident)
                pl.BlockSpec((1, HID_DIM), lambda i, seed: (0, 0)),       # b1 (resident)
                pl.BlockSpec((HID_DIM, OUT_PAD), lambda i, seed: (0, 0)), # w2 (resident)
                pl.BlockSpec((1, OUT_PAD), lambda i, seed: (0, 0)),       # b2 (resident)
            ],
            out_specs=pl.BlockSpec((TB, OUT_PAD), lambda i, seed: (i, 0)),
        ),
        compiler_params=pltpu.CompilerParams(
            dimension_semantics=("parallel",),
        ),
    )(seed, x_p, w1_p, b1, w2_p, b2_p)

    return out[:B, :OUT_DIM]


def init_params(key):
    """Deterministic init mimicking nn.Linear default: U(-1/sqrt(fan_in), 1/sqrt(fan_in))."""
    k1, k2, k3, k4 = jax.random.split(key, 4)
    bound1 = 1.0 / (IN_DIM ** 0.5)
    bound2 = 1.0 / (HID_DIM ** 0.5)
    w1 = jax.random.uniform(k1, (IN_DIM, HID_DIM), jnp.float32, -bound1, bound1)
    b1 = jax.random.uniform(k2, (1, HID_DIM), jnp.float32, -bound1, bound1)
    w2 = jax.random.uniform(k3, (HID_DIM, OUT_DIM), jnp.float32, -bound2, bound2)
    b2 = jax.random.uniform(k4, (1, OUT_DIM), jnp.float32, -bound2, bound2)
    return w1, b1, w2, b2


if __name__ == "__main__":
    key = jax.random.PRNGKey(0)
    k_params, k_x = jax.random.split(key)

    w1, b1, w2, b2 = init_params(k_params)

    B = 256  # 2 grid steps of TB=128 to exercise the batch pipeline
    images = jax.random.uniform(k_x, (B, IN_DIM), jnp.float32)   # MNIST-like flattened digits
    seed = jnp.array([0], dtype=jnp.int32)

    out = solution_forward(images, w1, b1, w2, b2, seed)
    out = jax.block_until_ready(out)

    assert out.shape == (B, OUT_DIM)
    assert out.dtype == jnp.float32
    assert bool(jnp.all((out >= 0.0) & (out <= 1.0)))
    assert bool(jnp.all(jnp.isfinite(out)))

    print("KERNEL_OK")
</pallas_src>

<mosaic_0001>
module attributes {stable_mosaic.version = 11 : i64} {
  func.func @mlp_kernel(%arg0: i32, %arg1: memref<1xi32, #tpu.memory_space<smem>>, %arg2: memref<128x896xf32, #tpu.memory_space<vmem>>, %arg3: memref<896x512xf32, #tpu.memory_space<vmem>>, %arg4: memref<1x512xf32, #tpu.memory_space<vmem>>, %arg5: memref<512x128xf32, #tpu.memory_space<vmem>>, %arg6: memref<1x128xf32, #tpu.memory_space<vmem>>, %arg7: memref<128x128xf32, #tpu.memory_space<vmem>>) attributes {dimension_semantics = [#tpu.dimension_semantics<parallel>], iteration_bounds = array<i64: 2>, scalar_prefetch = 1 : i64, scratch_operands = 0 : i64, tpu.core_type = #tpu.core_type<tc>, window_params = [{transform_indices = @transform_0, window_bounds = array<i64: 128, 896>}, {pipeline_mode = #tpu.pipeline_mode<synchronous>, transform_indices = @transform_1, window_bounds = array<i64: 896, 512>}, {pipeline_mode = #tpu.pipeline_mode<synchronous>, transform_indices = @transform_2, window_bounds = array<i64: 1, 512>}, {pipeline_mode = #tpu.pipeline_mode<synchronous>, transform_indices = @transform_3, window_bounds = array<i64: 512, 128>}, {pipeline_mode = #tpu.pipeline_mode<synchronous>, transform_indices = @transform_4, window_bounds = array<i64: 1, 128>}, {transform_indices = @transform_5, window_bounds = array<i64: 128, 128>}]} {
    %c0 = arith.constant 0 : index
    %c0_0 = arith.constant 0 : index
    %0 = vector.load %arg2[%c0, %c0_0] : memref<128x896xf32, #tpu.memory_space<vmem>>, vector<128x896xf32>
    %c0_1 = arith.constant 0 : index
    %c0_2 = arith.constant 0 : index
    %1 = vector.load %arg3[%c0_1, %c0_2] : memref<896x512xf32, #tpu.memory_space<vmem>>, vector<896x512xf32>
    %cst = arith.constant dense<0.000000e+00> : vector<128x512xf32>
    %2 = tpu.matmul %0, %1, %cst {dimension_numbers = #tpu.dot_dimension_numbers<[1], [0], [0], [1], [0, 0, 1, 1], [], []>} : vector<128x896xf32>, vector<896x512xf32>, vector<128x512xf32> -> vector<128x512xf32>
    %c0_3 = arith.constant 0 : index
    %c0_4 = arith.constant 0 : index
    %3 = vector.load %arg4[%c0_3, %c0_4] : memref<1x512xf32, #tpu.memory_space<vmem>>, vector<1x512xf32>
    %4 = vector.broadcast %3 : vector<1x512xf32> to vector<128x512xf32>
    %5 = arith.addf %2, %4 : vector<128x512xf32>
    %cst_5 = arith.constant 0.000000e+00 : f32
    %6 = vector.broadcast %cst_5 : f32 to vector<128x512xf32>
    %7 = arith.maximumf %5, %6 : vector<128x512xf32>
    %8 = tpu.iota {dimensions = array<i32: 0>} : vector<128x512xi32>
    %c128_i32 = arith.constant 128 : i32
    %9 = arith.muli %arg0, %c128_i32 : i32
    %10 = vector.broadcast %9 : i32 to vector<128x512xi32>
    %11 = arith.addi %8, %10 : vector<128x512xi32>
    %12 = tpu.iota {dimensions = array<i32: 1>} : vector<128x512xi32>
    %c512_i32 = arith.constant 512 : i32
    %13 = vector.broadcast %c512_i32 : i32 to vector<128x512xi32>
    %14 = arith.muli %11, %13 : vector<128x512xi32>
    %15 = arith.addi %14, %12 : vector<128x512xi32>
    %c0_6 = arith.constant 0 : index
    %16 = memref.load %arg1[%c0_6] : memref<1xi32, #tpu.memory_space<smem>>
    %c-1640531527_i32 = arith.constant -1640531527 : i32
    %17 = arith.muli %16, %c-1640531527_i32 : i32
    %18 = vector.broadcast %17 : i32 to vector<128x512xi32>
    %19 = arith.xori %15, %18 : vector<128x512xi32>
    %c16_i32 = arith.constant 16 : i32
    %20 = vector.broadcast %c16_i32 : i32 to vector<128x512xi32>
    %21 = arith.shrui %19, %20 : vector<128x512xi32>
    %22 = arith.xori %19, %21 : vector<128x512xi32>
    %c2146121005_i32 = arith.constant 2146121005 : i32
    %23 = vector.broadcast %c2146121005_i32 : i32 to vector<128x512xi32>
    %24 = arith.muli %22, %23 : vector<128x512xi32>
    %c15_i32 = arith.constant 15 : i32
    %25 = vector.broadcast %c15_i32 : i32 to vector<128x512xi32>
    %26 = arith.shrui %24, %25 : vector<128x512xi32>
    %27 = arith.xori %24, %26 : vector<128x512xi32>
    %c-2073254261_i32 = arith.constant -2073254261 : i32
    %28 = vector.broadcast %c-2073254261_i32 : i32 to vector<128x512xi32>
    %29 = arith.muli %27, %28 : vector<128x512xi32>
    %c16_i32_7 = arith.constant 16 : i32
    %30 = vector.broadcast %c16_i32_7 : i32 to vector<128x512xi32>
    %31 = arith.shrui %29, %30 : vector<128x512xi32>
    %32 = arith.xori %29, %31 : vector<128x512xi32>
    %c1_i32 = arith.constant 1 : i32
    %33 = vector.broadcast %c1_i32 : i32 to vector<128x512xi32>
    %34 = arith.shrui %32, %33 : vector<128x512xi32>
    %c1717986918_i32 = arith.constant 1717986918 : i32
    %35 = vector.broadcast %c1717986918_i32 : i32 to vector<128x512xi32>
    %36 = arith.cmpi ult, %34, %35 : vector<128x512xi32>
    %cst_8 = arith.constant 1.250000e+00 : f32
    %37 = vector.broadcast %cst_8 : f32 to vector<128x512xf32>
    %38 = arith.mulf %7, %37 : vector<128x512xf32>
    %cst_9 = arith.constant 0.000000e+00 : f32
    %39 = vector.broadcast %cst_9 : f32 to vector<128x512xf32>
    %40 = arith.select %36, %38, %39 : vector<128x512xi1>, vector<128x512xf32>
    %c0_10 = arith.constant 0 : index
    %c0_11 = arith.constant 0 : index
    %41 = vector.load %arg5[%c0_10, %c0_11] : memref<512x128xf32, #tpu.memory_space<vmem>>, vector<512x128xf32>
    %cst_12 = arith.constant dense<0.000000e+00> : vector<128x128xf32>
    %42 = tpu.matmul %40, %41, %cst_12 {dimension_numbers = #tpu.dot_dimension_numbers<[1], [0], [0], [1], [0, 0, 1, 1], [], []>} : vector<128x512xf32>, vector<512x128xf32>, vector<128x128xf32> -> vector<128x128xf32>
    %c0_13 = arith.constant 0 : index
    %c0_14 = arith.constant 0 : index
    %43 = vector.load %arg6[%c0_13, %c0_14] : memref<1x128xf32, #tpu.memory_space<vmem>>, vector<1x128xf32>
    %44 = vector.broadcast %43 : vector<1x128xf32> to vector<128x128xf32>
    %45 = arith.addf %42, %44 : vector<128x128xf32>
    %46 = arith.negf %45 : vector<128x128xf32>
    %47 = math.exp %46 : vector<128x128xf32>
    %cst_15 = arith.constant 1.000000e+00 : f32
    %48 = vector.broadcast %cst_15 : f32 to vector<128x128xf32>
    %49 = arith.addf %48, %47 : vector<128x128xf32>
    %50 = arith.divf %48, %49 : vector<128x128xf32>
    %cst_16 = arith.constant 1.000000e+04 : f32
    %51 = vector.broadcast %cst_16 : f32 to vector<128x128xf32>
    %52 = arith.mulf %50, %51 : vector<128x128xf32>
    %53 = math.roundeven %52 : vector<128x128xf32>
    %cst_17 = arith.constant 1.000000e+04 : f32
    %54 = vector.broadcast %cst_17 : f32 to vector<128x128xf32>
    %55 = arith.divf %53, %54 : vector<128x128xf32>
    %c0_18 = arith.constant 0 : index
    %c0_19 = arith.constant 0 : index
    %56 = vector.load %arg7[%c0_18, %c0_19] : memref<128x128xf32, #tpu.memory_space<vmem>>, vector<128x128xf32>
    tpu.vector_store %arg7[%c0_18, %c0_19], %55 {strides = array<i32>} : memref<128x128xf32, #tpu.memory_space<vmem>>, vector<128x128xf32>,
    return
  }
  func.func @transform_0(%arg0: i32, %arg1: memref<1xi32, #tpu.memory_space<smem>>) -> (i32, i32) {
    %c0_i32 = arith.constant 0 : i32
    %c0_i32_0 = arith.constant 0 : i32
    return %arg0, %c0_i32 : i32, i32
  }
  func.func @transform_1(%arg0: i32, %arg1: memref<1xi32, #tpu.memory_space<smem>>) -> (i32, i32) {
    %c0_i32 = arith.constant 0 : i32
    %c0_i32_0 = arith.constant 0 : i32
    %c0_i32_1 = arith.constant 0 : i32
    return %c0_i32, %c0_i32_0 : i32, i32
  }
  func.func @transform_2(%arg0: i32, %arg1: memref<1xi32, #tpu.memory_space<smem>>) -> (i32, i32) {
    %c0_i32 = arith.constant 0 : i32
    %c0_i32_0 = arith.constant 0 : i32
    %c0_i32_1 = arith.constant 0 : i32
    return %c0_i32, %c0_i32_0 : i32, i32
  }
  func.func @transform_3(%arg0: i32, %arg1: memref<1xi32, #tpu.memory_space<smem>>) -> (i32, i32) {
    %c0_i32 = arith.constant 0 : i32
    %c0_i32_0 = arith.constant 0 : i32
    %c0_i32_1 = arith.constant 0 : i32
    return %c0_i32, %c0_i32_0 : i32, i32
  }
  func.func @transform_4(%arg0: i32, %arg1: memref<1xi32, #tpu.memory_space<smem>>) -> (i32, i32) {
    %c0_i32 = arith.constant 0 : i32
    %c0_i32_0 = arith.constant 0 : i32
    %c0_i32_1 = arith.constant 0 : i32
    return %c0_i32, %c0_i32_0 : i32, i32
  }
  func.func @transform_5(%arg0: i32, %arg1: memref<1xi32, #tpu.memory_space<smem>>) -> (i32, i32) {
    %c0_i32 = arith.constant 0 : i32
    %c0_i32_0 = arith.constant 0 : i32
    return %arg0, %c0_i32 : i32, i32
  }
}

</mosaic_0001>

<llo_original>
// kernel: tpu_custom_call.1
$region0: #{tpu_custom_call.1}
  #allocation0 [shape = 'u32[]', space=smem, size = 0x4, offset = 0x4, fixed_abs, tag = 'smem constant byte address 0x4 - core index']
  #allocation1 [shape = 'u32[144,128]{1,0:T(1,128)}', space=vmem, size = 0x12000, scoped, tag = 'internal scratch']
  #allocation2 [shape = 's32[1]{0}', space=sflag, size = 0x4, scoped, tag = 'scoped memory for tpu_custom_call.1']
  #allocation3 [shape = 's32[1]{0:T(128)S(6)}', space=smem, size = 0x200, scoped, tag = 'prefetched SMEM operand 0']
  %s0 = inlined_call_operand.<no memory space> [shape: s32[1], index: 0, kind: input, shape index: {}]
  %s1 = inlined_call_operand.hbm [shape: f32[256,896], index: 1, kind: input, shape index: {}]
  %s2 = inlined_call_operand.hbm [shape: f32[896,512], index: 2, kind: input, shape index: {}]
  %s3 = inlined_call_operand.hbm [shape: f32[1,512], index: 3, kind: input, shape index: {}]
  %s4 = inlined_call_operand.hbm [shape: f32[512,128], index: 4, kind: input, shape index: {}]
  %s5 = inlined_call_operand.hbm [shape: f32[1,128], index: 5, kind: input, shape index: {}]
  %s6 = inlined_call_operand.hbm [shape: f32[256,128], index: 6, kind: output, shape index: {}]
  %s7 = sld [smem:[#allocation0]]
  $region73: #{tpu_custom_call.1} parent=0
    _
  %s9 = ssub.s32 1, %s7
  %s10 = scalar_select 0, %s9, %s7
  %11 = sst [smem:[#allocation3]] %s0
  $region1: #{tpu_custom_call.1} parent=0
    #allocation4 [shape = 'u8[917504]{0}', space=vmem, size = 0xe0000, scoped, tag = 'input window, operand 1']
    #allocation5 [shape = 's32[2]{0}', space=sflag, size = 0x8, scoped, tag = 'scoped memory for tpu_custom_call.1']
    #allocation6 [shape = 's32[2]{0}', space=sflag, size = 0x8, scoped, tag = 'scoped memory for tpu_custom_call.1']
    #allocation7 [shape = 'u8[1835008]{0}', space=vmem, size = 0x1c0000, scoped, tag = 'input window, operand 2, single buffered']
    #allocation8 [shape = 's32[1]{0}', space=sflag, size = 0x4, scoped, tag = 'scoped memory for tpu_custom_call.1']
    #allocation9 [shape = 'u8[2048]{0}', space=vmem, size = 0x800, scoped, tag = 'input window, operand 3, single buffered']
    #allocation10 [shape = 'u8[262144]{0}', space=vmem, size = 0x40000, scoped, tag = 'input window, operand 4, single buffered']
    #allocation11 [shape = 's32[1]{0}', space=sflag, size = 0x4, scoped, tag = 'scoped memory for tpu_custom_call.1']
    #allocation12 [shape = 'u8[512]{0}', space=vmem, size = 0x400, scoped, tag = 'input window, operand 5, single buffered']
    #allocation13 [shape = 'u8[131072]{0}', space=vmem, size = 0x20000, scoped, tag = 'output window, operand 0']
    %12 = vsyncpa [#allocation5], 0
    %s13 = scalar_lea.sflag [#allocation5], 1
    %14 = vsyncpa %s13, 0
    %15 = vsyncpa [#allocation8], 0
    %16 = vsyncpa [#allocation11], 0
    %17 = vsyncpa [#allocation6], 0
    %s18 = scalar_lea.sflag [#allocation6], 1
    %19 = vsyncpa %s18, 0
    loop: start=0, step=1, limit=4
    $region2: #{tpu_custom_call.1} parent=1 // loop_pre_header
      _
    $region3: #{tpu_custom_call.1} parent=1 // loop_header
      %s21 = sphi 0, %s25
      %p22 = scmp.ge.s32.totalorder %s21, 4
      %s31 = sphi 0, %s33
      %s34 = sphi 0, %s31
      %s35 = sphi 0, %s34
      %s51 = sphi 0, %s35
      %s55 = sphi 0, %s55
      %s57 = sphi 0, %s55
      %s58 = sphi 0, %s57
      %s72 = sphi 0, %s58
      %s76 = sphi 0, %s76
      %s78 = sphi 0, %s76
      %s79 = sphi 0, %s78
      %s93 = sphi 0, %s79
      %s97 = sphi 0, %s97
      %s99 = sphi 0, %s97
      %s100 = sphi 0, %s99
      %s114 = sphi 0, %s100
      %s118 = sphi 0, %s118
      %s120 = sphi 0, %s118
      %s121 = sphi 0, %s120
      %s135 = sphi 0, %s121
      %s141 = sphi 0, %s143
      %s144 = sphi 0, %s141
      %s145 = sphi 0, %s144
      %s161 = sphi 0, %s145
    $region4: #{tpu_custom_call.1} parent=1 // loop_header_branch
      %24 = sbr.rel (%p22) target = $region8
    $region5: #{tpu_custom_call.1} parent=1 // loop_body
      %s26 = ssub.s32 %s21, 1
      %s27 = ssub.s32 %s21, 2
      %s28 = sadd.s32 %s21, 1
      %s29 = ssub.s32 %s21, %s28
      %p30 = scmp.eq.s32.totalorder %s29, 0
      %s32 = sadd.s32 %s31, 1
      %s33 = scalar_select %p30, %s31, %s32
      %p36 = pneg %p30
      %p37 = scmp.eq.s32.totalorder %s21, 1
      %p38 = por %p36, %p37
      %p39 = scmp.ne.s32.totalorder %s31, %s34
      %p40 = scmp.eq.s32.totalorder %s21, 0
      %p41 = por %p39, %p40
      %p42 = scmp.ne.s32.totalorder %s31, %s34
      %p43 = scmp.eq.s32.totalorder %s26, 1
      %p44 = por %p42, %p43
      %p45 = scmp.ne.s32.totalorder %s34, %s35
      %p46 = scmp.eq.s32.totalorder %s26, 0
      %p47 = por %p45, %p46
      %p48 = scmp.ne.s32.totalorder %s34, %s35
      %p49 = scmp.eq.s32.totalorder %s27, 1
      %p50 = por %p48, %p49
      %p52 = scmp.ne.s32.totalorder %s35, %s51
      %p53 = scmp.eq.s32.totalorder %s27, 0
      %p54 = por %p52, %p53
      %s56 = sadd.s32 %s55, 1
      %p59 = scmp.eq.s32.totalorder %s21, 1
      %p60 = scmp.ne.s32.totalorder %s55, %s57
      %p61 = scmp.eq.s32.totalorder %s21, 0
      %p62 = por %p60, %p61
      %p63 = scmp.ne.s32.totalorder %s55, %s57
      %p64 = scmp.eq.s32.totalorder %s26, 1
      %p65 = por %p63, %p64
      %p66 = scmp.ne.s32.totalorder %s57, %s58
      %p67 = scmp.eq.s32.totalorder %s26, 0
      %p68 = por %p66, %p67
      %p69 = scmp.ne.s32.totalorder %s57, %s58
      %p70 = scmp.eq.s32.totalorder %s27, 1
      %p71 = por %p69, %p70
      %p73 = scmp.ne.s32.totalorder %s58, %s72
      %p74 = scmp.eq.s32.totalorder %s27, 0
      %p75 = por %p73, %p74
      %s77 = sadd.s32 %s76, 1
      %p80 = scmp.eq.s32.totalorder %s21, 1
      %p81 = scmp.ne.s32.totalorder %s76, %s78
      %p82 = scmp.eq.s32.totalorder %s21, 0
      %p83 = por %p81, %p82
      %p84 = scmp.ne.s32.totalorder %s76, %s78
      %p85 = scmp.eq.s32.totalorder %s26, 1
      %p86 = por %p84, %p85
      %p87 = scmp.ne.s32.totalorder %s78, %s79
      %p88 = scmp.eq.s32.totalorder %s26, 0
      %p89 = por %p87, %p88
      %p90 = scmp.ne.s32.totalorder %s78, %s79
      %p91 = scmp.eq.s32.totalorder %s27, 1
      %p92 = por %p90, %p91
      %p94 = scmp.ne.s32.totalorder %s79, %s93
      %p95 = scmp.eq.s32.totalorder %s27, 0
      %p96 = por %p94, %p95
      %s98 = sadd.s32 %s97, 1
      %p101 = scmp.eq.s32.totalorder %s21, 1
      %p102 = scmp.ne.s32.totalorder %s97, %s99
      %p103 = scmp.eq.s32.totalorder %s21, 0
      %p104 = por %p102, %p103
      %p105 = scmp.ne.s32.totalorder %s97, %s99
      %p106 = scmp.eq.s32.totalorder %s26, 1
      %p107 = por %p105, %p106
      %p108 = scmp.ne.s32.totalorder %s99, %s100
      %p109 = scmp.eq.s32.totalorder %s26, 0
      %p110 = por %p108, %p109
      %p111 = scmp.ne.s32.totalorder %s99, %s100
      %p112 = scmp.eq.s32.totalorder %s27, 1
      %p113 = por %p111, %p112
      %p115 = scmp.ne.s32.totalorder %s100, %s114
      %p116 = scmp.eq.s32.totalorder %s27, 0
      %p117 = por %p115, %p116
      %s119 = sadd.s32 %s118, 1
      %p122 = scmp.eq.s32.totalorder %s21, 1
      %p123 = scmp.ne.s32.totalorder %s118, %s120
      %p124 = scmp.eq.s32.totalorder %s21, 0
      %p125 = por %p123, %p124
      %p126 = scmp.ne.s32.totalorder %s118, %s120
      %p127 = scmp.eq.s32.totalorder %s26, 1
      %p128 = por %p126, %p127
      %p129 = scmp.ne.s32.totalorder %s120, %s121
      %p130 = scmp.eq.s32.totalorder %s26, 0
      %p131 = por %p129, %p130
      %p132 = scmp.ne.s32.totalorder %s120, %s121
      %p133 = scmp.eq.s32.totalorder %s27, 1
      %p134 = por %p132, %p133
      %p136 = scmp.ne.s32.totalorder %s121, %s135
      %p137 = scmp.eq.s32.totalorder %s27, 0
      %p138 = por %p136, %p137
      %s139 = ssub.s32 %s21, %s28
      %p140 = scmp.eq.s32.totalorder %s139, 0
      %s142 = sadd.s32 %s141, 1
      %s143 = scalar_select %p140, %s141, %s142
      %p146 = pneg %p140
      %p147 = scmp.eq.s32.totalorder %s21, 1
      %p148 = por %p146, %p147
      %p149 = scmp.ne.s32.totalorder %s141, %s144
      %p150 = scmp.eq.s32.totalorder %s21, 0
      %p151 = por %p149, %p150
      %p152 = scmp.ne.s32.totalorder %s141, %s144
      %p153 = scmp.eq.s32.totalorder %s26, 1
      %p154 = por %p152, %p153
      %p155 = scmp.ne.s32.totalorder %s144, %s145
      %p156 = scmp.eq.s32.totalorder %s26, 0
      %p157 = por %p155, %p156
      %p158 = scmp.ne.s32.totalorder %s144, %s145
      %p159 = scmp.eq.s32.totalorder %s27, 1
      %p160 = por %p158, %p159
      %p162 = scmp.ne.s32.totalorder %s145, %s161
      %p163 = scmp.eq.s32.totalorder %s27, 0
      %p164 = por %p162, %p163
      %p165 = scmp.le.s32.totalorder 1, %s21
      %p166 = scmp.lt.s32.totalorder %s21, 3
      %p167 = pnand %p165, %p166
      %p168 = pneg %p167
      // Predicated region
      $region9: #{tpu_custom_call.1} parent=5 // pred_check
        _
      $region10: #{tpu_custom_call.1} parent=5 // pred_check_branch
        %170 = sbr.rel (%p167) target = $region12
      $region11: #{tpu_custom_call.1} parent=5 // pred_region
        %s171 = ssub.s32 %s21, 1
        // Predicated region
        $region13: #{tpu_custom_call.1} parent=11 // pred_check
          %p172 = pneg %p68
        $region14: #{tpu_custom_call.1} parent=11 // pred_check_branch
          %174 = sbr.rel (%p172) target = $region16
        $region15: #{tpu_custom_call.1} parent=11 // pred_region
          %s176 = ssub.s32 57344, 57344
          %177 = vsyncadd [#allocation8], %s176
          %s178 = sshll.u32 [#allocation7], 4
          %s179 = int_to_ptr.vmem [resolvable:$true] %s178
          %184 = dma.hbm_to_vmem [thread:$0]  %s2, 57344, %s179, [#allocation8], 512, 512, 32
        $region16: #{tpu_custom_call.1} parent=11 // pred_fallthru
          _
        // Predicated region
        $region17: #{tpu_custom_call.1} parent=11 // pred_check
          %p185 = pneg %p89
        $region18: #{tpu_custom_call.1} parent=11 // pred_check_branch
          %187 = sbr.rel (%p185) target = $region20
        $region19: #{tpu_custom_call.1} parent=11 // pred_region
          %s189 = ssub.s32 64, 64
          %190 = vsyncadd [#allocation8], %s189
          %s192 = sshll.u32 [#allocation9], 4
          %s193 = int_to_ptr.vmem [resolvable:$true] %s192
          %195 = dma.hbm_to_vmem [thread:$0]  %s3, 64, %s193, [#allocation8]
        $region20: #{tpu_custom_call.1} parent=11 // pred_fallthru
          _
        // Predicated region
        $region21: #{tpu_custom_call.1} parent=11 // pred_check
          %p196 = pneg %p110
        $region22: #{tpu_custom_call.1} parent=11 // pred_check_branch
          %198 = sbr.rel (%p196) target = $region24
        $region23: #{tpu_custom_call.1} parent=11 // pred_region
          %s200 = ssub.s32 8192, 8192
          %201 = vsyncadd [#allocation11], %s200
          %s202 = sshll.u32 [#allocation10], 4
          %s203 = int_to_ptr.vmem [resolvable:$true] %s202
          %208 = dma.hbm_to_vmem [thread:$0]  %s4, 8192, %s203, [#allocation11], 128, 128, 8
        $region24: #{tpu_custom_call.1} parent=11 // pred_fallthru
          _
        // Predicated region
        $region25: #{tpu_custom_call.1} parent=11 // pred_check
          %p209 = pneg %p131
        $region26: #{tpu_custom_call.1} parent=11 // pred_check_branch
          %211 = sbr.rel (%p209) target = $region28
        $region27: #{tpu_custom_call.1} parent=11 // pred_region
          %s213 = ssub.s32 16, 16
          %214 = vsyncadd [#allocation11], %s213
          %s216 = sshll.u32 [#allocation12], 4
          %s217 = int_to_ptr.vmem [resolvable:$true] %s216
          %219 = dma.hbm_to_vmem [thread:$0]  %s5, 16, %s217, [#allocation11]
        $region28: #{tpu_custom_call.1} parent=11 // pred_fallthru
          _
      $region12: #{tpu_custom_call.1} parent=5 // pred_fallthru
        _
      %p220 = scmp.lt.s32.totalorder %s21, 2
      // Predicated region
      $region29: #{tpu_custom_call.1} parent=5 // pred_check
        %p221 = pneg %p220
      $region30: #{tpu_custom_call.1} parent=5 // pred_check_branch
        %223 = sbr.rel (%p221) target = $region32
      $region31: #{tpu_custom_call.1} parent=5 // pred_region
        // Predicated region
        $region33: #{tpu_custom_call.1} parent=31 // pred_check
          %p224 = pneg %p41
        $region34: #{tpu_custom_call.1} parent=31 // pred_check_branch
          %226 = sbr.rel (%p224) target = $region36
        $region35: #{tpu_custom_call.1} parent=31 // pred_region
          %s227 = sand.u32 %s31, 1
          %s228 = scalar_lea.sflag [#allocation5], %s227
          %s229 = sand.u32 %s31, 1
          %s230 = smul.addr %s229, 896
          %s231 = scalar_lea.vmem [#allocation4], %s230
          %s232 = smul.u32 16, %s21
          %s234 = ssub.s32 14336, 14336
          %235 = vsyncadd %s228, %s234
          %s236 = smul.addr %s232, 7
          %s237 = smul.addr %s236, 128
          %s238 = scalar_lea.hbm %s1, %s237
          %s239 = sshll.u32 %s231, 4
          %s240 = int_to_ptr.vmem [resolvable:$true] %s239
          %245 = dma.hbm_to_vmem [thread:$0]  %s238, 14336, %s240, %s228, 896, 896, 56
        $region36: #{tpu_custom_call.1} parent=31 // pred_fallthru
          _
      $region32: #{tpu_custom_call.1} parent=5 // pred_fallthru
        _
      %p246 = scmp.le.s32.totalorder 1, %s21
      %p247 = scmp.lt.s32.totalorder %s21, 3
      %p248 = pnand %p246, %p247
      %p249 = pneg %p248
      // Predicated region
      $region37: #{tpu_custom_call.1} parent=5 // pred_check
        _
      $region38: #{tpu_custom_call.1} parent=5 // pred_check_branch
        %251 = sbr.rel (%p248) target = $region40
      $region39: #{tpu_custom_call.1} parent=5 // pred_region
        %s252 = ssub.s32 %s21, 1
        %s253 = sand.u32 %s34, 1
        %s254 = scalar_lea.sflag [#allocation5], %s253
        %s255 = sand.u32 %s34, 1
        %s256 = smul.addr %s255, 896
        %s257 = scalar_lea.vmem [#allocation4], %s256
        // Predicated region
        $region41: #{tpu_custom_call.1} parent=39 // pred_check
          %p258 = pneg %p47
        $region42: #{tpu_custom_call.1} parent=39 // pred_check_branch
          %260 = sbr.rel (%p258) target = $region44
        $region43: #{tpu_custom_call.1} parent=39 // pred_region
          %261 = dma.done %s254, 14336
        $region44: #{tpu_custom_call.1} parent=39 // pred_fallthru
          _
        // Predicated region
        $region45: #{tpu_custom_call.1} parent=39 // pred_check
          %p262 = pneg %p68
        $region46: #{tpu_custom_call.1} parent=39 // pred_check_branch
          %264 = sbr.rel (%p262) target = $region48
        $region47: #{tpu_custom_call.1} parent=39 // pred_region
          %265 = dma.done [#allocation8], 57344
        $region48: #{tpu_custom_call.1} parent=39 // pred_fallthru
          _
        // Predicated region
        $region49: #{tpu_custom_call.1} parent=39 // pred_check
          %p266 = pneg %p89
        $region50: #{tpu_custom_call.1} parent=39 // pred_check_branch
          %268 = sbr.rel (%p266) target = $region52
        $region51: #{tpu_custom_call.1} parent=39 // pred_region
          %269 = dma.done [#allocation8], 64
        $region52: #{tpu_custom_call.1} parent=39 // pred_fallthru
          _
        // Predicated region
        $region53: #{tpu_custom_call.1} parent=39 // pred_check
          %p270 = pneg %p110
        $region54: #{tpu_custom_call.1} parent=39 // pred_check_branch
          %272 = sbr.rel (%p270) target = $region56
        $region55: #{tpu_custom_call.1} parent=39 // pred_region
          %273 = dma.done [#allocation11], 8192
        $region56: #{tpu_custom_call.1} parent=39 // pred_fallthru
          _
        // Predicated region
        $region57: #{tpu_custom_call.1} parent=39 // pred_check
          %p274 = pneg %p131
        $region58: #{tpu_custom_call.1} parent=39 // pred_check_branch
          %276 = sbr.rel (%p274) target = $region60
        $region59: #{tpu_custom_call.1} parent=39 // pred_region
          %277 = dma.done [#allocation11], 16
        $region60: #{tpu_custom_call.1} parent=39 // pred_fallthru
          _
        %s278 = sand.u32 %s34, 1
        %s279 = scalar_lea.sflag [#allocation5], %s278
        %s280 = sand.u32 %s34, 1
        %s281 = smul.addr %s280, 896
        %s282 = scalar_lea.vmem [#allocation4], %s281
        %p283 = pneg %p47
        %p284 = pneg %p44
        %p285 = pneg %p68
        %p286 = pneg %p65
        %p287 = pneg %p89
        %p288 = pneg %p86
        %p289 = pneg %p110
        %p290 = pneg %p107
        %p291 = pneg %p131
        %p292 = pneg %p128
        %p293 = pneg %p157
        %p294 = pneg %p154
        %s295 = sand.u32 %s144, 1
        %s296 = scalar_lea.sflag [#allocation6], %s295
        %s297 = sand.u32 %s144, 1
        %s298 = smul.addr %s297, 128
        %s299 = scalar_lea.vmem [#allocation13], %s298
        %s300 = smul.u32 16, %s26
        %s301 = smul.u32 16, %s26
        %v302 = vld [vmem:[%s257] sm:$0xff]
        %v303 = vld [vmem:[%s257 + $0x8] sm:$0xff]
        %v304 = vld [vmem:[%s257 + $0x10] sm:$0xff]
        %v305 = vld [vmem:[%s257 + $0x18] sm:$0xff]
        %v306 = vld [vmem:[%s257 + $0x20] sm:$0xff]
        %v307 = vld [vmem:[%s257 + $0x28] sm:$0xff]
        %v308 = vld [vmem:[%s257 + $0x30] sm:$0xff]
        %v309 = vld [vmem:[%s257 + $0x38] sm:$0xff]
        %v310 = vld [vmem:[%s257 + $0x40] sm:$0xff]
        %v311 = vld [vmem:[%s257 + $0x48] sm:$0xff]
        %v312 = vld [vmem:[%s257 + $0x50] sm:$0xff]
        %v313 = vld [vmem:[%s257 + $0x58] sm:$0xff]
        %v314 = vld [vmem:[%s257 + $0x60] sm:$0xff]
        %v315 = vld [vmem:[%s257 + $0x68] sm:$0xff]
        %v316 = vld [vmem:[%s257 + $0x70] sm:$0xff]
        %v317 = vld [vmem:[%s257 + $0x78] sm:$0xff]
        %v318 = vld [vmem:[%s257 + $0x80] sm:$0xff]
        %v319 = vld [vmem:[%s257 + $0x88] sm:$0xff]
        %v320 = vld [vmem:[%s257 + $0x90] sm:$0xff]
        %v321 = vld [vmem:[%s257 + $0x98] sm:$0xff]
        %v322 = vld [vmem:[%s257 + $0xa0] sm:$0xff]
        %v323 = vld [vmem:[%s257 + $0xa8] sm:$0xff]
        %v324 = vld [vmem:[%s257 + $0xb0] sm:$0xff]
        %v325 = vld [vmem:[%s257 + $0xb8] sm:$0xff]
        %v326 = vld [vmem:[%s257 + $0xc0] sm:$0xff]
        %v327 = vld [vmem:[%s257 + $0xc8] sm:$0xff]
        %v328 = vld [vmem:[%s257 + $0xd0] sm:$0xff]
        %v329 = vld [vmem:[%s257 + $0xd8] sm:$0xff]
        %v330 = vld [vmem:[%s257 + $0xe0] sm:$0xff]
        %v331 = vld [vmem:[%s257 + $0xe8] sm:$0xff]
        %v332 = vld [vmem:[%s257 + $0xf0] sm:$0xff]
        %v333 = vld [vmem:[%s257 + $0xf8] sm:$0xff]
        %v334 = vld [vmem:[%s257 + $0x100] sm:$0xff]
        %v335 = vld [vmem:[%s257 + $0x108] sm:$0xff]
        %v336 = vld [vmem:[%s257 + $0x110] sm:$0xff]
        %v337 = vld [vmem:[%s257 + $0x118] sm:$0xff]
        %v338 = vld [vmem:[%s257 + $0x120] sm:$0xff]
        %v339 = vld [vmem:[%s257 + $0x128] sm:$0xff]
        %v340 = vld [vmem:[%s257 + $0x130] sm:$0xff]
        %v341 = vld [vmem:[%s257 + $0x138] sm:$0xff]
        %v342 = vld [vmem:[%s257 + $0x140] sm:$0xff]
        %v343 = vld [vmem:[%s257 + $0x148] sm:$0xff]
        %v344 = vld [vmem:[%s257 + $0x150] sm:$0xff]
        %v345 = vld [vmem:[%s257 + $0x158] sm:$0xff]
        %v346 = vld [vmem:[%s257 + $0x160] sm:$0xff]
        %v347 = vld [vmem:[%s257 + $0x168] sm:$0xff]
        %v348 = vld [vmem:[%s257 + $0x170] sm:$0xff]
        %v349 = vld [vmem:[%s257 + $0x178] sm:$0xff]
        %v350 = vld [vmem:[%s257 + $0x180] sm:$0xff]
        %v351 = vld [vmem:[%s257 + $0x188] sm:$0xff]
        %v352 = vld [vmem:[%s257 + $0x190] sm:$0xff]
        %v353 = vld [vmem:[%s257 + $0x198] sm:$0xff]
        %v354 = vld [vmem:[%s257 + $0x1a0] sm:$0xff]
        %v355 = vld [vmem:[%s257 + $0x1a8] sm:$0xff]
        %v356 = vld [vmem:[%s257 + $0x1b0] sm:$0xff]
        %v357 = vld [vmem:[%s257 + $0x1b8] sm:$0xff]
        %v358 = vld [vmem:[%s257 + $0x1c0] sm:$0xff]
        %v359 = vld [vmem:[%s257 + $0x1c8] sm:$0xff]
        %v360 = vld [vmem:[%s257 + $0x1d0] sm:$0xff]
        %v361 = vld [vmem:[%s257 + $0x1d8] sm:$0xff]
        %v362 = vld [vmem:[%s257 + $0x1e0] sm:$0xff]
        %v363 = vld [vmem:[%s257 + $0x1e8] sm:$0xff]
        %v364 = vld [vmem:[%s257 + $0x1f0] sm:$0xff]
        %v365 = vld [vmem:[%s257 + $0x1f8] sm:$0xff]
        %v366 = vld [vmem:[%s257 + $0x200] sm:$0xff]
        %v367 = vld [vmem:[%s257 + $0x208] sm:$0xff]
        %v368 = vld [vmem:[%s257 + $0x210] sm:$0xff]
        %v369 = vld [vmem:[%s257 + $0x218] sm:$0xff]
        %v370 = vld [vmem:[%s257 + $0x220] sm:$0xff]
        %v371 = vld [vmem:[%s257 + $0x228] sm:$0xff]
        %v372 = vld [vmem:[%s257 + $0x230] sm:$0xff]
        %v373 = vld [vmem:[%s257 + $0x238] sm:$0xff]
        %v374 = vld [vmem:[%s257 + $0x240] sm:$0xff]
        %v375 = vld [vmem:[%s257 + $0x248] sm:$0xff]
        %v376 = vld [vmem:[%s257 + $0x250] sm:$0xff]
        %v377 = vld [vmem:[%s257 + $0x258] sm:$0xff]
        %v378 = vld [vmem:[%s257 + $0x260] sm:$0xff]
        %v379 = vld [vmem:[%s257 + $0x268] sm:$0xff]
        %v380 = vld [vmem:[%s257 + $0x270] sm:$0xff]
        %v381 = vld [vmem:[%s257 + $0x278] sm:$0xff]
        %v382 = vld [vmem:[%s257 + $0x280] sm:$0xff]
        %v383 = vld [vmem:[%s257 + $0x288] sm:$0xff]
        %v384 = vld [vmem:[%s257 + $0x290] sm:$0xff]
        %v385 = vld [vmem:[%s257 + $0x298] sm:$0xff]
        %v386 = vld [vmem:[%s257 + $0x2a0] sm:$0xff]
        %v387 = vld [vmem:[%s257 + $0x2a8] sm:$0xff]
        %v388 = vld [vmem:[%s257 + $0x2b0] sm:$0xff]
        %v389 = vld [vmem:[%s257 + $0x2b8] sm:$0xff]
        %v390 = vld [vmem:[%s257 + $0x2c0] sm:$0xff]
        %v391 = vld [vmem:[%s257 + $0x2c8] sm:$0xff]
        %v392 = vld [vmem:[%s257 + $0x2d0] sm:$0xff]
        %v393 = vld [vmem:[%s257 + $0x2d8] sm:$0xff]
        %v394 = vld [vmem:[%s257 + $0x2e0] sm:$0xff]
        %v395 = vld [vmem:[%s257 + $0x2e8] sm:$0xff]
        %v396 = vld [vmem:[%s257 + $0x2f0] sm:$0xff]
        %v397 = vld [vmem:[%s257 + $0x2f8] sm:$0xff]
        %v398 = vld [vmem:[%s257 + $0x300] sm:$0xff]
        %v399 = vld [vmem:[%s257 + $0x308] sm:$0xff]
        %v400 = vld [vmem:[%s257 + $0x310] sm:$0xff]
        %v401 = vld [vmem:[%s257 + $0x318] sm:$0xff]
        %v402 = vld [vmem:[%s257 + $0x320] sm:$0xff]
        %v403 = vld [vmem:[%s257 + $0x328] sm:$0xff]
        %v404 = vld [vmem:[%s257 + $0x330] sm:$0xff]
        %v405 = vld [vmem:[%s257 + $0x338] sm:$0xff]
        %v406 = vld [vmem:[%s257 + $0x340] sm:$0xff]
        %v407 = vld [vmem:[%s257 + $0x348] sm:$0xff]
        %v408 = vld [vmem:[%s257 + $0x350] sm:$0xff]
        %v409 = vld [vmem:[%s257 + $0x358] sm:$0xff]
        %v410 = vld [vmem:[%s257 + $0x360] sm:$0xff]
        %v411 = vld [vmem:[%s257 + $0x368] sm:$0xff]
        %v412 = vld [vmem:[%s257 + $0x370] sm:$0xff]
        %v413 = vld [vmem:[%s257 + $0x378] sm:$0xff]
        %v414 = vld [vmem:[#allocation7] sm:$0xff]
        %v415 = vld [vmem:[#allocation7 + $0x8] sm:$0xff]
        %v416 = vld [vmem:[#allocation7 + $0x10] sm:$0xff]
        %v417 = vld [vmem:[#allocation7 + $0x18] sm:$0xff]
        %v418 = vld [vmem:[#allocation7 + $0x20] sm:$0xff]
        %v419 = vld [vmem:[#allocation7 + $0x28] sm:$0xff]
        %v420 = vld [vmem:[#allocation7 + $0x30] sm:$0xff]
        %v421 = vld [vmem:[#allocation7 + $0x38] sm:$0xff]
        %v422 = vld [vmem:[#allocation7 + $0x40] sm:$0xff]
        %v423 = vld [vmem:[#allocation7 + $0x48] sm:$0xff]
        %v424 = vld [vmem:[#allocation7 + $0x50] sm:$0xff]
        %v425 = vld [vmem:[#allocation7 + $0x58] sm:$0xff]
        %v426 = vld [vmem:[#allocation7 + $0x60] sm:$0xff]
        %v427 = vld [vmem:[#allocation7 + $0x68] sm:$0xff]
        %v428 = vld [vmem:[#allocation7 + $0x70] sm:$0xff]
        %v429 = vld [vmem:[#allocation7 + $0x78] sm:$0xff]
        %v430 = vld [vmem:[#allocation7 + $0x80] sm:$0xff]
        %v431 = vld [vmem:[#allocation7 + $0x88] sm:$0xff]
        %v432 = vld [vmem:[#allocation7 + $0x90] sm:$0xff]
        %v433 = vld [vmem:[#allocation7 + $0x98] sm:$0xff]
        %v434 = vld [vmem:[#allocation7 + $0xa0] sm:$0xff]
        %v435 = vld [vmem:[#allocation7 + $0xa8] sm:$0xff]
        %v436 = vld [vmem:[#allocation7 + $0xb0] sm:$0xff]
        %v437 = vld [vmem:[#allocation7 + $0xb8] sm:$0xff]
        %v438 = vld [vmem:[#allocation7 + $0xc0] sm:$0xff]
        %v439 = vld [vmem:[#allocation7 + $0xc8] sm:$0xff]
        %v440 = vld [vmem:[#allocation7 + $0xd0] sm:$0xff]
        %v441 = vld [vmem:[#allocation7 + $0xd8] sm:$0xff]
        %v442 = vld [vmem:[#allocation7 + $0xe0] sm:$0xff]
        %v443 = vld [vmem:[#allocation7 + $0xe8] sm:$0xff]
        %v444 = vld [vmem:[#allocation7 + $0xf0] sm:$0xff]
        %v445 = vld [vmem:[#allocation7 + $0xf8] sm:$0xff]
        %v446 = vld [vmem:[#allocation7 + $0x100] sm:$0xff]
        %v447 = vld [vmem:[#allocation7 + $0x108] sm:$0xff]
        %v448 = vld [vmem:[#allocation7 + $0x110] sm:$0xff]
        %v449 = vld [vmem:[#allocation7 + $0x118] sm:$0xff]
        %v450 = vld [vmem:[#allocation7 + $0x120] sm:$0xff]
        %v451 = vld [vmem:[#allocation7 + $0x128] sm:$0xff]
        %v452 = vld [vmem:[#allocation7 + $0x130] sm:$0xff]
        %v453 = vld [vmem:[#allocation7 + $0x138] sm:$0xff]
        %v454 = vld [vmem:[#allocation7 + $0x140] sm:$0xff]
        %v455 = vld [vmem:[#allocation7 + $0x148] sm:$0xff]
        %v456 = vld [vmem:[#allocation7 + $0x150] sm:$0xff]
        %v457 = vld [vmem:[#allocation7 + $0x158] sm:$0xff]
        %v458 = vld [vmem:[#allocation7 + $0x160] sm:$0xff]
        %v459 = vld [vmem:[#allocation7 + $0x168] sm:$0xff]
        %v460 = vld [vmem:[#allocation7 + $0x170] sm:$0xff]
        %v461 = vld [vmem:[#allocation7 + $0x178] sm:$0xff]
        %v462 = vld [vmem:[#allocation7 + $0x180] sm:$0xff]
        %v463 = vld [vmem:[#allocation7 + $0x188] sm:$0xff]
        %v464 = vld [vmem:[#allocation7 + $0x190] sm:$0xff]
        %v465 = vld [vmem:[#allocation7 + $0x198] sm:$0xff]
        %v466 = vld [vmem:[#allocation7 + $0x1a0] sm:$0xff]
        %v467 = vld [vmem:[#allocation7 + $0x1a8] sm:$0xff]
        %v468 = vld [vmem:[#allocation7 + $0x1b0] sm:$0xff]
        %v469 = vld [vmem:[#allocation7 + $0x1b8] sm:$0xff]
        %v470 = vld [vmem:[#allocation7 + $0x1c0] sm:$0xff]
        %v471 = vld [vmem:[#allocation7 + $0x1c8] sm:$0xff]
        %v472 = vld [vmem:[#allocation7 + $0x1d0] sm:$0xff]
        %v473 = vld [vmem:[#allocation7 + $0x1d8] sm:$0xff]
        %v474 = vld [vmem:[#allocation7 + $0x1e0] sm:$0xff]
        %v475 = vld [vmem:[#allocation7 + $0x1e8] sm:$0xff]
        %v476 = vld [vmem:[#allocation7 + $0x1f0] sm:$0xff]
        %v477 = vld [vmem:[#allocation7 + $0x1f8] sm:$0xff]
        %v478 = vld [vmem:[#allocation7 + $0x200] sm:$0xff]
        %v479 = vld [vmem:[#allocation7 + $0x208] sm:$0xff]
        %v480 = vld [vmem:[#allocation7 + $0x210] sm:$0xff]
        %v481 = vld [vmem:[#allocation7 + $0x218] sm:$0xff]
        %v482 = vld [vmem:[#allocation7 + $0x220] sm:$0xff]
        %v483 = vld [vmem:[#allocation7 + $0x228] sm:$0xff]
        %v484 = vld [vmem:[#allocation7 + $0x230] sm:$0xff]
        %v485 = vld [vmem:[#allocation7 + $0x238] sm:$0xff]
        %v486 = vld [vmem:[#allocation7 + $0x240] sm:$0xff]
        %v487 = vld [vmem:[#allocation7 + $0x248] sm:$0xff]
        %v488 = vld [vmem:[#allocation7 + $0x250] sm:$0xff]
        %v489 = vld [vmem:[#allocation7 + $0x258] sm:$0xff]
        %v490 = vld [vmem:[#allocation7 + $0x260] sm:$0xff]
        %v491 = vld [vmem:[#allocation7 + $0x268] sm:$0xff]
        %v492 = vld [vmem:[#allocation7 + $0x270] sm:$0xff]
        %v493 = vld [vmem:[#allocation7 + $0x278] sm:$0xff]
        %v494 = vld [vmem:[#allocation7 + $0x280] sm:$0xff]
        %v495 = vld [vmem:[#allocation7 + $0x288] sm:$0xff]
        %v496 = vld [vmem:[#allocation7 + $0x290] sm:$0xff]
        %v497 = vld [vmem:[#allocation7 + $0x298] sm:$0xff]
        %v498 = vld [vmem:[#allocation7 + $0x2a0] sm:$0xff]
        %v499 = vld [vmem:[#allocation7 + $0x2a8] sm:$0xff]
        %v500 = vld [vmem:[#allocation7 + $0x2b0] sm:$0xff]
        %v501 = vld [vmem:[#allocation7 + $0x2b8] sm:$0xff]
        %v502 = vld [vmem:[#allocation7 + $0x2c0] sm:$0xff]
        %v503 = vld [vmem:[#allocation7 + $0x2c8] sm:$0xff]
        %v504 = vld [vmem:[#allocation7 + $0x2d0] sm:$0xff]
        %v505 = vld [vmem:[#allocation7 + $0x2d8] sm:$0xff]
        %v506 = vld [vmem:[#allocation7 + $0x2e0] sm:$0xff]
        %v507 = vld [vmem:[#allocation7 + $0x2e8] sm:$0xff]
        %v508 = vld [vmem:[#allocation7 + $0x2f0] sm:$0xff]
        %v509 = vld [vmem:[#allocation7 + $0x2f8] sm:$0xff]
        %v510 = vld [vmem:[#allocation7 + $0x300] sm:$0xff]
        %v511 = vld [vmem:[#allocation7 + $0x308] sm:$0xff]
        %v512 = vld [vmem:[#allocation7 + $0x310] sm:$0xff]
        %v513 = vld [vmem:[#allocation7 + $0x318] sm:$0xff]
        %v514 = vld [vmem:[#allocation7 + $0x320] sm:$0xff]
        %v515 = vld [vmem:[#allocation7 + $0x328] sm:$0xff]
        %v516 = vld [vmem:[#allocation7 + $0x330] sm:$0xff]
        %v517 = vld [vmem:[#allocation7 + $0x338] sm:$0xff]
        %v518 = vld [vmem:[#allocation7 + $0x340] sm:$0xff]
        %v519 = vld [vmem:[#allocation7 + $0x348] sm:$0xff]
        %v520 = vld [vmem:[#allocation7 + $0x350] sm:$0xff]
        %v521 = vld [vmem:[#allocation7 + $0x358] sm:$0xff]
        %v522 = vld [vmem:[#allocation7 + $0x360] sm:$0xff]
        %v523 = vld [vmem:[#allocation7 + $0x368] sm:$0xff]
        %v524 = vld [vmem:[#allocation7 + $0x370] sm:$0xff]
        %v525 = vld [vmem:[#allocation7 + $0x378] sm:$0xff]
        %v526 = vld [vmem:[#allocation7 + $0x380] sm:$0xff]
        %v527 = vld [vmem:[#allocation7 + $0x388] sm:$0xff]
        %v528 = vld [vmem:[#allocation7 + $0x390] sm:$0xff]
        %v529 = vld [vmem:[#allocation7 + $0x398] sm:$0xff]
        %v530 = vld [vmem:[#allocation7 + $0x3a0] sm:$0xff]
        %v531 = vld [vmem:[#allocation7 + $0x3a8] sm:$0xff]
        %v532 = vld [vmem:[#allocation7 + $0x3b0] sm:$0xff]
        %v533 = vld [vmem:[#allocation7 + $0x3b8] sm:$0xff]
        %v534 = vld [vmem:[#allocation7 + $0x3c0] sm:$0xff]
        %v535 = vld [vmem:[#allocation7 + $0x3c8] sm:$0xff]
        %v536 = vld [vmem:[#allocation7 + $0x3d0] sm:$0xff]
        %v537 = vld [vmem:[#allocation7 + $0x3d8] sm:$0xff]
        %v538 = vld [vmem:[#allocation7 + $0x3e0] sm:$0xff]
        %v539 = vld [vmem:[#allocation7 + $0x3e8] sm:$0xff]
        %v540 = vld [vmem:[#allocation7 + $0x3f0] sm:$0xff]
        %v541 = vld [vmem:[#allocation7 + $0x3f8] sm:$0xff]
        %v542 = vld [vmem:[#allocation7 + $0x400] sm:$0xff]
        %v543 = vld [vmem:[#allocation7 + $0x408] sm:$0xff]
        %v544 = vld [vmem:[#allocation7 + $0x410] sm:$0xff]
        %v545 = vld [vmem:[#allocation7 + $0x418] sm:$0xff]
        %v546 = vld [vmem:[#allocation7 + $0x420] sm:$0xff]
        %v547 = vld [vmem:[#allocation7 + $0x428] sm:$0xff]
        %v548 = vld [vmem:[#allocation7 + $0x430] sm:$0xff]
        %v549 = vld [vmem:[#allocation7 + $0x438] sm:$0xff]
        %v550 = vld [vmem:[#allocation7 + $0x440] sm:$0xff]
        %v551 = vld [vmem:[#allocation7 + $0x448] sm:$0xff]
        %v552 = vld [vmem:[#allocation7 + $0x450] sm:$0xff]
        %v553 = vld [vmem:[#allocation7 + $0x458] sm:$0xff]
        %v554 = vld [vmem:[#allocation7 + $0x460] sm:$0xff]
        %v555 = vld [vmem:[#allocation7 + $0x468] sm:$0xff]
        %v556 = vld [vmem:[#allocation7 + $0x470] sm:$0xff]
        %v557 = vld [vmem:[#allocation7 + $0x478] sm:$0xff]
        %v558 = vld [vmem:[#allocation7 + $0x480] sm:$0xff]
        %v559 = vld [vmem:[#allocation7 + $0x488] sm:$0xff]
        %v560 = vld [vmem:[#allocation7 + $0x490] sm:$0xff]
        %v561 = vld [vmem:[#allocation7 + $0x498] sm:$0xff]
        %v562 = vld [vmem:[#allocation7 + $0x4a0] sm:$0xff]
        %v563 = vld [vmem:[#allocation7 + $0x4a8] sm:$0xff]
        %v564 = vld [vmem:[#allocation7 + $0x4b0] sm:$0xff]
        %v565 = vld [vmem:[#allocation7 + $0x4b8] sm:$0xff]
        %v566 = vld [vmem:[#allocation7 + $0x4c0] sm:$0xff]
        %v567 = vld [vmem:[#allocation7 + $0x4c8] sm:$0xff]
        %v568 = vld [vmem:[#allocation7 + $0x4d0] sm:$0xff]
        %v569 = vld [vmem:[#allocation7 + $0x4d8] sm:$0xff]
        %v570 = vld [vmem:[#allocation7 + $0x4e0] sm:$0xff]
        %v571 = vld [vmem:[#allocation7 + $0x4e8] sm:$0xff]
        %v572 = vld [vmem:[#allocation7 + $0x4f0] sm:$0xff]
        %v573 = vld [vmem:[#allocation7 + $0x4f8] sm:$0xff]
        %v574 = vld [vmem:[#allocation7 + $0x500] sm:$0xff]
        %v575 = vld [vmem:[#allocation7 + $0x508] sm:$0xff]
        %v576 = vld [vmem:[#allocation7 + $0x510] sm:$0xff]
        %v577 = vld [vmem:[#allocation7 + $0x518] sm:$0xff]
        %v578 = vld [vmem:[#allocation7 + $0x520] sm:$0xff]
        %v579 = vld [vmem:[#allocation7 + $0x528] sm:$0xff]
        %v580 = vld [vmem:[#allocation7 + $0x530] sm:$0xff]
        %v581 = vld [vmem:[#allocation7 + $0x538] sm:$0xff]
        %v582 = vld [vmem:[#allocation7 + $0x540] sm:$0xff]
        %v583 = vld [vmem:[#allocation7 + $0x548] sm:$0xff]
        %v584 = vld [vmem:[#allocation7 + $0x550] sm:$0xff]
        %v585 = vld [vmem:[#allocation7 + $0x558] sm:$0xff]
        %v586 = vld [vmem:[#allocation7 + $0x560] sm:$0xff]
        %v587 = vld [vmem:[#allocation7 + $0x568] sm:$0xff]
        %v588 = vld [vmem:[#allocation7 + $0x570] sm:$0xff]
        %v589 = vld [vmem:[#allocation7 + $0x578] sm:$0xff]
        %v590 = vld [vmem:[#allocation7 + $0x580] sm:$0xff]
        %v591 = vld [vmem:[#allocation7 + $0x588] sm:$0xff]
        %v592 = vld [vmem:[#allocation7 + $0x590] sm:$0xff]
        %v593 = vld [vmem:[#allocation7 + $0x598] sm:$0xff]
        %v594 = vld [vmem:[#allocation7 + $0x5a0] sm:$0xff]
        %v595 = vld [vmem:[#allocation7 + $0x5a8] sm:$0xff]
        %v596 = vld [vmem:[#allocation7 + $0x5b0] sm:$0xff]
        %v597 = vld [vmem:[#allocation7 + $0x5b8] sm:$0xff]
        %v598 = vld [vmem:[#allocation7 + $0x5c0] sm:$0xff]
        %v599 = vld [vmem:[#allocation7 + $0x5c8] sm:$0xff]
        %v600 = vld [vmem:[#allocation7 + $0x5d0] sm:$0xff]
        %v601 = vld [vmem:[#allocation7 + $0x5d8] sm:$0xff]
        %v602 = vld [vmem:[#allocation7 + $0x5e0] sm:$0xff]
        %v603 = vld [vmem:[#allocation7 + $0x5e8] sm:$0xff]
        %v604 = vld [vmem:[#allocation7 + $0x5f0] sm:$0xff]
        %v605 = vld [vmem:[#allocation7 + $0x5f8] sm:$0xff]
        %v606 = vld [vmem:[#allocation7 + $0x600] sm:$0xff]
        %v607 = vld [vmem:[#allocation7 + $0x608] sm:$0xff]
        %v608 = vld [vmem:[#allocation7 + $0x610] sm:$0xff]
        %v609 = vld [vmem:[#allocation7 + $0x618] sm:$0xff]
        %v610 = vld [vmem:[#allocation7 + $0x620] sm:$0xff]
        %v611 = vld [vmem:[#allocation7 + $0x628] sm:$0xff]
        %v612 = vld [vmem:[#allocation7 + $0x630] sm:$0xff]
        %v613 = vld [vmem:[#allocation7 + $0x638] sm:$0xff]
        %v614 = vld [vmem:[#allocation7 + $0x640] sm:$0xff]
        %v615 = vld [vmem:[#allocation7 + $0x648] sm:$0xff]
        %v616 = vld [vmem:[#allocation7 + $0x650] sm:$0xff]
        %v617 = vld [vmem:[#allocation7 + $0x658] sm:$0xff]
        %v618 = vld [vmem:[#allocation7 + $0x660] sm:$0xff]
        %v619 = vld [vmem:[#allocation7 + $0x668] sm:$0xff]
        %v620 = vld [vmem:[#allocation7 + $0x670] sm:$0xff]
        %v621 = vld [vmem:[#allocation7 + $0x678] sm:$0xff]
        %v622 = vld [vmem:[#allocation7 + $0x680] sm:$0xff]
        %v623 = vld [vmem:[#allocation7 + $0x688] sm:$0xff]
        %v624 = vld [vmem:[#allocation7 + $0x690] sm:$0xff]
        %v625 = vld [vmem:[#allocation7 + $0x698] sm:$0xff]
        %v626 = vld [vmem:[#allocation7 + $0x6a0] sm:$0xff]
        %v627 = vld [vmem:[#allocation7 + $0x6a8] sm:$0xff]
        %v628 = vld [vmem:[#allocation7 + $0x6b0] sm:$0xff]
        %v629 = vld [vmem:[#allocation7 + $0x6b8] sm:$0xff]
        %v630 = vld [vmem:[#allocation7 + $0x6c0] sm:$0xff]
        %v631 = vld [vmem:[#allocation7 + $0x6c8] sm:$0xff]
        %v632 = vld [vmem:[#allocation7 + $0x6d0] sm:$0xff]
        %v633 = vld [vmem:[#allocation7 + $0x6d8] sm:$0xff]
        %v634 = vld [vmem:[#allocation7 + $0x6e0] sm:$0xff]
        %v635 = vld [vmem:[#allocation7 + $0x6e8] sm:$0xff]
        %v636 = vld [vmem:[#allocation7 + $0x6f0] sm:$0xff]
        %v637 = vld [vmem:[#allocation7 + $0x6f8] sm:$0xff]
        %v638 = vld [vmem:[#allocation7 + $0x700] sm:$0xff]
        %v639 = vld [vmem:[#allocation7 + $0x708] sm:$0xff]
        %v640 = vld [vmem:[#allocation7 + $0x710] sm:$0xff]
        %v641 = vld [vmem:[#allocation7 + $0x718] sm:$0xff]
        %v642 = vld [vmem:[#allocation7 + $0x720] sm:$0xff]
        %v643 = vld [vmem:[#allocation7 + $0x728] sm:$0xff]
        %v644 = vld [vmem:[#allocation7 + $0x730] sm:$0xff]
        %v645 = vld [vmem:[#allocation7 + $0x738] sm:$0xff]
        %v646 = vld [vmem:[#allocation7 + $0x740] sm:$0xff]
        %v647 = vld [vmem:[#allocation7 + $0x748] sm:$0xff]
        %v648 = vld [vmem:[#allocation7 + $0x750] sm:$0xff]
        %v649 = vld [vmem:[#allocation7 + $0x758] sm:$0xff]
        %v650 = vld [vmem:[#allocation7 + $0x760] sm:$0xff]
        %v651 = vld [vmem:[#allocation7 + $0x768] sm:$0xff]
        %v652 = vld [vmem:[#allocation7 + $0x770] sm:$0xff]
        %v653 = vld [vmem:[#allocation7 + $0x778] sm:$0xff]
        %v654 = vld [vmem:[#allocation7 + $0x780] sm:$0xff]
        %v655 = vld [vmem:[#allocation7 + $0x788] sm:$0xff]
        %v656 = vld [vmem:[#allocation7 + $0x790] sm:$0xff]
        %v657 = vld [vmem:[#allocation7 + $0x798] sm:$0xff]
        %v658 = vld [vmem:[#allocation7 + $0x7a0] sm:$0xff]
        %v659 = vld [vmem:[#allocation7 + $0x7a8] sm:$0xff]
        %v660 = vld [vmem:[#allocation7 + $0x7b0] sm:$0xff]
        %v661 = vld [vmem:[#allocation7 + $0x7b8] sm:$0xff]
        %v662 = vld [vmem:[#allocation7 + $0x7c0] sm:$0xff]
        %v663 = vld [vmem:[#allocation7 + $0x7c8] sm:$0xff]
        %v664 = vld [vmem:[#allocation7 + $0x7d0] sm:$0xff]
        %v665 = vld [vmem:[#allocation7 + $0x7d8] sm:$0xff]
        %v666 = vld [vmem:[#allocation7 + $0x7e0] sm:$0xff]
        %v667 = vld [vmem:[#allocation7 + $0x7e8] sm:$0xff]
        %v668 = vld [vmem:[#allocation7 + $0x7f0] sm:$0xff]
        %v669 = vld [vmem:[#allocation7 + $0x7f8] sm:$0xff]
        %v670 = vld [vmem:[#allocation7 + $0x800] sm:$0xff]
        %v671 = vld [vmem:[#allocation7 + $0x808] sm:$0xff]
        %v672 = vld [vmem:[#allocation7 + $0x810] sm:$0xff]
        %v673 = vld [vmem:[#allocation7 + $0x818] sm:$0xff]
        %v674 = vld [vmem:[#allocation7 + $0x820] sm:$0xff]
        %v675 = vld [vmem:[#allocation7 + $0x828] sm:$0xff]
        %v676 = vld [vmem:[#allocation7 + $0x830] sm:$0xff]
        %v677 = vld [vmem:[#allocation7 + $0x838] sm:$0xff]
        %v678 = vld [vmem:[#allocation7 + $0x840] sm:$0xff]
        %v679 = vld [vmem:[#allocation7 + $0x848] sm:$0xff]
        %v680 = vld [vmem:[#allocation7 + $0x850] sm:$0xff]
        %v681 = vld [vmem:[#allocation7 + $0x858] sm:$0xff]
        %v682 = vld [vmem:[#allocation7 + $0x860] sm:$0xff]
        %v683 = vld [vmem:[#allocation7 + $0x868] sm:$0xff]
        %v684 = vld [vmem:[#allocation7 + $0x870] sm:$0xff]
        %v685 = vld [vmem:[#allocation7 + $0x878] sm:$0xff]
        %v686 = vld [vmem:[#allocation7 + $0x880] sm:$0xff]
        %v687 = vld [vmem:[#allocation7 + $0x888] sm:$0xff]
        %v688 = vld [vmem:[#allocation7 + $0x890] sm:$0xff]
        %v689 = vld [vmem:[#allocation7 + $0x898] sm:$0xff]
        %v690 = vld [vmem:[#allocation7 + $0x8a0] sm:$0xff]
        %v691 = vld [vmem:[#allocation7 + $0x8a8] sm:$0xff]
        %v692 = vld [vmem:[#allocation7 + $0x8b0] sm:$0xff]
        %v693 = vld [vmem:[#allocation7 + $0x8b8] sm:$0xff]
        %v694 = vld [vmem:[#allocation7 + $0x8c0] sm:$0xff]
        %v695 = vld [vmem:[#allocation7 + $0x8c8] sm:$0xff]
        %v696 = vld [vmem:[#allocation7 + $0x8d0] sm:$0xff]
        %v697 = vld [vmem:[#allocation7 + $0x8d8] sm:$0xff]
        %v698 = vld [vmem:[#allocation7 + $0x8e0] sm:$0xff]
        %v699 = vld [vmem:[#allocation7 + $0x8e8] sm:$0xff]
        %v700 = vld [vmem:[#allocation7 + $0x8f0] sm:$0xff]
        %v701 = vld [vmem:[#allocation7 + $0x8f8] sm:$0xff]
        %v702 = vld [vmem:[#allocation7 + $0x900] sm:$0xff]
        %v703 = vld [vmem:[#allocation7 + $0x908] sm:$0xff]
        %v704 = vld [vmem:[#allocation7 + $0x910] sm:$0xff]
        %v705 = vld [vmem:[#allocation7 + $0x918] sm:$0xff]
        %v706 = vld [vmem:[#allocation7 + $0x920] sm:$0xff]
        %v707 = vld [vmem:[#allocation7 + $0x928] sm:$0xff]
        %v708 = vld [vmem:[#allocation7 + $0x930] sm:$0xff]
        %v709 = vld [vmem:[#allocation7 + $0x938] sm:$0xff]
        %v710 = vld [vmem:[#allocation7 + $0x940] sm:$0xff]
        %v711 = vld [vmem:[#allocation7 + $0x948] sm:$0xff]
        %v712 = vld [vmem:[#allocation7 + $0x950] sm:$0xff]
        %v713 = vld [vmem:[#allocation7 + $0x958] sm:$0xff]
        %v714 = vld [vmem:[#allocation7 + $0x960] sm:$0xff]
        %v715 = vld [vmem:[#allocation7 + $0x968] sm:$0xff]
        %v716 = vld [vmem:[#allocation7 + $0x970] sm:$0xff]
        %v717 = vld [vmem:[#allocation7 + $0x978] sm:$0xff]
        %v718 = vld [vmem:[#allocation7 + $0x980] sm:$0xff]
        %v719 = vld [vmem:[#allocation7 + $0x988] sm:$0xff]
        %v720 = vld [vmem:[#allocation7 + $0x990] sm:$0xff]
        %v721 = vld [vmem:[#allocation7 + $0x998] sm:$0xff]
        %v722 = vld [vmem:[#allocation7 + $0x9a0] sm:$0xff]
        %v723 = vld [vmem:[#allocation7 + $0x9a8] sm:$0xff]
        %v724 = vld [vmem:[#allocation7 + $0x9b0] sm:$0xff]
        %v725 = vld [vmem:[#allocation7 + $0x9b8] sm:$0xff]
        %v726 = vld [vmem:[#allocation7 + $0x9c0] sm:$0xff]
        %v727 = vld [vmem:[#allocation7 + $0x9c8] sm:$0xff]
        %v728 = vld [vmem:[#allocation7 + $0x9d0] sm:$0xff]
        %v729 = vld [vmem:[#allocation7 + $0x9d8] sm:$0xff]
        %v730 = vld [vmem:[#allocation7 + $0x9e0] sm:$0xff]
        %v731 = vld [vmem:[#allocation7 + $0x9e8] sm:$0xff]
        %v732 = vld [vmem:[#allocation7 + $0x9f0] sm:$0xff]
        %v733 = vld [vmem:[#allocation7 + $0x9f8] sm:$0xff]
        %v734 = vld [vmem:[#allocation7 + $0xa00] sm:$0xff]
        %v735 = vld [vmem:[#allocation7 + $0xa08] sm:$0xff]
        %v736 = vld [vmem:[#allocation7 + $0xa10] sm:$0xff]
        %v737 = vld [vmem:[#allocation7 + $0xa18] sm:$0xff]
        %v738 = vld [vmem:[#allocation7 + $0xa20] sm:$0xff]
        %v739 = vld [vmem:[#allocation7 + $0xa28] sm:$0xff]
        %v740 = vld [vmem:[#allocation7 + $0xa30] sm:$0xff]
        %v741 = vld [vmem:[#allocation7 + $0xa38] sm:$0xff]
        %v742 = vld [vmem:[#allocation7 + $0xa40] sm:$0xff]
        %v743 = vld [vmem:[#allocation7 + $0xa48] sm:$0xff]
        %v744 = vld [vmem:[#allocation7 + $0xa50] sm:$0xff]
        %v745 = vld [vmem:[#allocation7 + $0xa58] sm:$0xff]
        %v746 = vld [vmem:[#allocation7 + $0xa60] sm:$0xff]
        %v747 = vld [vmem:[#allocation7 + $0xa68] sm:$0xff]
        %v748 = vld [vmem:[#allocation7 + $0xa70] sm:$0xff]
        %v749 = vld [vmem:[#allocation7 + $0xa78] sm:$0xff]
        %v750 = vld [vmem:[#allocation7 + $0xa80] sm:$0xff]
        %v751 = vld [vmem:[#allocation7 + $0xa88] sm:$0xff]
        %v752 = vld [vmem:[#allocation7 + $0xa90] sm:$0xff]
        %v753 = vld [vmem:[#allocation7 + $0xa98] sm:$0xff]
        %v754 = vld [vmem:[#allocation7 + $0xaa0] sm:$0xff]
        %v755 = vld [vmem:[#allocation7 + $0xaa8] sm:$0xff]
        %v756 = vld [vmem:[#allocation7 + $0xab0] sm:$0xff]
        %v757 = vld [vmem:[#allocation7 + $0xab8] sm:$0xff]
        %v758 = vld [vmem:[#allocation7 + $0xac0] sm:$0xff]
        %v759 = vld [vmem:[#allocation7 + $0xac8] sm:$0xff]
        %v760 = vld [vmem:[#allocation7 + $0xad0] sm:$0xff]
        %v761 = vld [vmem:[#allocation7 + $0xad8] sm:$0xff]
        %v762 = vld [vmem:[#allocation7 + $0xae0] sm:$0xff]
        %v763 = vld [vmem:[#allocation7 + $0xae8] sm:$0xff]
        %v764 = vld [vmem:[#allocation7 + $0xaf0] sm:$0xff]
        %v765 = vld [vmem:[#allocation7 + $0xaf8] sm:$0xff]
        %v766 = vld [vmem:[#allocation7 + $0xb00] sm:$0xff]
        %v767 = vld [vmem:[#allocation7 + $0xb08] sm:$0xff]
        %v768 = vld [vmem:[#allocation7 + $0xb10] sm:$0xff]
        %v769 = vld [vmem:[#allocation7 + $0xb18] sm:$0xff]
        %v770 = vld [vmem:[#allocation7 + $0xb20] sm:$0xff]
        %v771 = vld [vmem:[#allocation7 + $0xb28] sm:$0xff]
        %v772 = vld [vmem:[#allocation7 + $0xb30] sm:$0xff]
        %v773 = vld [vmem:[#allocation7 + $0xb38] sm:$0xff]
        %v774 = vld [vmem:[#allocation7 + $0xb40] sm:$0xff]
        %v775 = vld [vmem:[#allocation7 + $0xb48] sm:$0xff]
        %v776 = vld [vmem:[#allocation7 + $0xb50] sm:$0xff]
        %v777 = vld [vmem:[#allocation7 + $0xb58] sm:$0xff]
        %v778 = vld [vmem:[#allocation7 + $0xb60] sm:$0xff]
        %v779 = vld [vmem:[#allocation7 + $0xb68] sm:$0xff]
        %v780 = vld [vmem:[#allocation7 + $0xb70] sm:$0xff]
        %v781 = vld [vmem:[#allocation7 + $0xb78] sm:$0xff]
        %v782 = vld [vmem:[#allocation7 + $0xb80] sm:$0xff]
        %v783 = vld [vmem:[#allocation7 + $0xb88] sm:$0xff]
        %v784 = vld [vmem:[#allocation7 + $0xb90] sm:$0xff]
        %v785 = vld [vmem:[#allocation7 + $0xb98] sm:$0xff]
        %v786 = vld [vmem:[#allocation7 + $0xba0] sm:$0xff]
        %v787 = vld [vmem:[#allocation7 + $0xba8] sm:$0xff]
        %v788 = vld [vmem:[#allocation7 + $0xbb0] sm:$0xff]
        %v789 = vld [vmem:[#allocation7 + $0xbb8] sm:$0xff]
        %v790 = vld [vmem:[#allocation7 + $0xbc0] sm:$0xff]
        %v791 = vld [vmem:[#allocation7 + $0xbc8] sm:$0xff]
        %v792 = vld [vmem:[#allocation7 + $0xbd0] sm:$0xff]
        %v793 = vld [vmem:[#allocation7 + $0xbd8] sm:$0xff]
        %v794 = vld [vmem:[#allocation7 + $0xbe0] sm:$0xff]
        %v795 = vld [vmem:[#allocation7 + $0xbe8] sm:$0xff]
        %v796 = vld [vmem:[#allocation7 + $0xbf0] sm:$0xff]
        %v797 = vld [vmem:[#allocation7 + $0xbf8] sm:$0xff]
        %v798 = vld [vmem:[#allocation7 + $0xc00] sm:$0xff]
        %v799 = vld [vmem:[#allocation7 + $0xc08] sm:$0xff]
        %v800 = vld [vmem:[#allocation7 + $0xc10] sm:$0xff]
        %v801 = vld [vmem:[#allocation7 + $0xc18] sm:$0xff]
        %v802 = vld [vmem:[#allocation7 + $0xc20] sm:$0xff]
        %v803 = vld [vmem:[#allocation7 + $0xc28] sm:$0xff]
        %v804 = vld [vmem:[#allocation7 + $0xc30] sm:$0xff]
        %v805 = vld [vmem:[#allocation7 + $0xc38] sm:$0xff]
        %v806 = vld [vmem:[#allocation7 + $0xc40] sm:$0xff]
        %v807 = vld [vmem:[#allocation7 + $0xc48] sm:$0xff]
        %v808 = vld [vmem:[#allocation7 + $0xc50] sm:$0xff]
        %v809 = vld [vmem:[#allocation7 + $0xc58] sm:$0xff]
        %v810 = vld [vmem:[#allocation7 + $0xc60] sm:$0xff]
        %v811 = vld [vmem:[#allocation7 + $0xc68] sm:$0xff]
        %v812 = vld [vmem:[#allocation7 + $0xc70] sm:$0xff]
        %v813 = vld [vmem:[#allocation7 + $0xc78] sm:$0xff]
        %v814 = vld [vmem:[#allocation7 + $0xc80] sm:$0xff]
        %v815 = vld [vmem:[#allocation7 + $0xc88] sm:$0xff]
        %v816 = vld [vmem:[#allocation7 + $0xc90] sm:$0xff]
        %v817 = vld [vmem:[#allocation7 + $0xc98] sm:$0xff]
        %v818 = vld [vmem:[#allocation7 + $0xca0] sm:$0xff]
        %v819 = vld [vmem:[#allocation7 + $0xca8] sm:$0xff]
        %v820 = vld [vmem:[#allocation7 + $0xcb0] sm:$0xff]
        %v821 = vld [vmem:[#allocation7 + $0xcb8] sm:$0xff]
        %v822 = vld [vmem:[#allocation7 + $0xcc0] sm:$0xff]
        %v823 = vld [vmem:[#allocation7 + $0xcc8] sm:$0xff]
        %v824 = vld [vmem:[#allocation7 + $0xcd0] sm:$0xff]
        %v825 = vld [vmem:[#allocation7 + $0xcd8] sm:$0xff]
        %v826 = vld [vmem:[#allocation7 + $0xce0] sm:$0xff]
        %v827 = vld [vmem:[#allocation7 + $0xce8] sm:$0xff]
        %v828 = vld [vmem:[#allocation7 + $0xcf0] sm:$0xff]
        %v829 = vld [vmem:[#allocation7 + $0xcf8] sm:$0xff]
        %v830 = vld [vmem:[#allocation7 + $0xd00] sm:$0xff]
        %v831 = vld [vmem:[#allocation7 + $0xd08] sm:$0xff]
        %v832 = vld [vmem:[#allocation7 + $0xd10] sm:$0xff]
        %v833 = vld [vmem:[#allocation7 + $0xd18] sm:$0xff]
        %v834 = vld [vmem:[#allocation7 + $0xd20] sm:$0xff]
        %v835 = vld [vmem:[#allocation7 + $0xd28] sm:$0xff]
        %v836 = vld [vmem:[#allocation7 + $0xd30] sm:$0xff]
        %v837 = vld [vmem:[#allocation7 + $0xd38] sm:$0xff]
        %v838 = vld [vmem:[#allocation7 + $0xd40] sm:$0xff]
        %v839 = vld [vmem:[#allocation7 + $0xd48] sm:$0xff]
        %v840 = vld [vmem:[#allocation7 + $0xd50] sm:$0xff]
        %v841 = vld [vmem:[#allocation7 + $0xd58] sm:$0xff]
        %v842 = vld [vmem:[#allocation7 + $0xd60] sm:$0xff]
        %v843 = vld [vmem:[#allocation7 + $0xd68] sm:$0xff]
        %v844 = vld [vmem:[#allocation7 + $0xd70] sm:$0xff]
        %v845 = vld [vmem:[#allocation7 + $0xd78] sm:$0xff]
        %v846 = vld [vmem:[#allocation7 + $0xd80] sm:$0xff]
        %v847 = vld [vmem:[#allocation7 + $0xd88] sm:$0xff]
        %v848 = vld [vmem:[#allocation7 + $0xd90] sm:$0xff]
        %v849 = vld [vmem:[#allocation7 + $0xd98] sm:$0xff]
        %v850 = vld [vmem:[#allocation7 + $0xda0] sm:$0xff]
        %v851 = vld [vmem:[#allocation7 + $0xda8] sm:$0xff]
        %v852 = vld [vmem:[#allocation7 + $0xdb0] sm:$0xff]
        %v853 = vld [vmem:[#allocation7 + $0xdb8] sm:$0xff]
        %v854 = vld [vmem:[#allocation7 + $0xdc0] sm:$0xff]
        %v855 = vld [vmem:[#allocation7 + $0xdc8] sm:$0xff]
        %v856 = vld [vmem:[#allocation7 + $0xdd0] sm:$0xff]
        %v857 = vld [vmem:[#allocation7 + $0xdd8] sm:$0xff]
        %v858 = vld [vmem:[#allocation7 + $0xde0] sm:$0xff]
        %v859 = vld [vmem:[#allocation7 + $0xde8] sm:$0xff]
        %v860 = vld [vmem:[#allocation7 + $0xdf0] sm:$0xff]
        %v861 = vld [vmem:[#allocation7 + $0xdf8] sm:$0xff]
        %v862 = vld [vmem:[#allocation9] sm:$0xf]
        %v864 = vlaneseq
        %v865 = vshrl.u32 %v864, 7
        %v866 = vsub.s32 0, %v865
        %v867 = vrot.slane %v862, %v866
        %v868 = vlaneseq
        %v869 = vshrl.u32 %v868, 7
        %v870 = vsub.s32 1, %v869
        %v871 = vrot.slane %v862, %v870
        %v872 = vlaneseq
        %v873 = vshrl.u32 %v872, 7
        %v874 = vsub.s32 2, %v873
        %v875 = vrot.slane %v862, %v874
        %v876 = vlaneseq
        %v877 = vshrl.u32 %v876, 7
        %v878 = vsub.s32 3, %v877
        %v879 = vrot.slane %v862, %v878
        %884 = vmatprep.subr.mxu0 %v475
        %885 = vmatpush1.msra.mxu0 %v474
        %886 = vmatprep.subr.mxu0 %v471
        %887 = vmatpush1.msra.mxu0 %v470
        %888 = vmatprep.subr.mxu0 %v467
        %889 = vmatpush1.msra.mxu0 %v466
        %890 = vmatprep.subr.mxu0 %v463
        %891 = vmatpush1.msra.mxu0 %v462
        %892 = vmatprep.subr.mxu0 %v459
        %893 = vmatpush1.msra.mxu0 %v458
        %894 = vmatprep.subr.mxu0 %v455
        %895 = vmatpush1.msra.mxu0 %v454
        %896 = vmatprep.subr.mxu0 %v451
        %897 = vmatpush1.msra.mxu0 %v450
        %898 = vmatprep.subr.mxu0 %v447
        %899 = vmatpush1.msra.mxu0 %v446
        %900 = vmatprep.subr.mxu0 %v443
        %901 = vmatpush1.msra.mxu0 %v442
        %902 = vmatprep.subr.mxu0 %v439
        %903 = vmatpush1.msra.mxu0 %v438
        %904 = vmatprep.subr.mxu0 %v435
        %905 = vmatpush1.msra.mxu0 %v434
        %906 = vmatprep.subr.mxu0 %v431
        %907 = vmatpush1.msra.mxu0 %v430
        %908 = vmatprep.subr.mxu0 %v427
        %909 = vmatpush1.msra.mxu0 %v426
        %910 = vmatprep.subr.mxu0 %v423
        %911 = vmatpush1.msra.mxu0 %v422
        %912 = vmatprep.subr.mxu0 %v419
        %913 = vmatpush1.msra.mxu0 %v418
        %914 = vmatprep.subr.mxu0 %v415
        %915 = vmatpush1.msra.mxu0 %v414
        %916 = vmatprep.subr.mxu0 %v539
        %917 = vmatpush2.msra.mxu0 %v538
        %918 = vmatprep.subr.mxu0 %v535
        %919 = vmatpush2.msra.mxu0 %v534
        %920 = vmatprep.subr.mxu0 %v531
        %921 = vmatpush2.msra.mxu0 %v530
        %922 = vmatprep.subr.mxu0 %v527
        %923 = vmatpush2.msra.mxu0 %v526
        %924 = vmatprep.subr.mxu0 %v523
        %925 = vmatpush2.msra.mxu0 %v522
        %926 = vmatprep.subr.mxu0 %v519
        %927 = vmatpush2.msra.mxu0 %v518
        %928 = vmatprep.subr.mxu0 %v515
        %929 = vmatpush2.msra.mxu0 %v514
        %930 = vmatprep.subr.mxu0 %v511
        %931 = vmatpush2.msra.mxu0 %v510
        %932 = vmatprep.subr.mxu0 %v507
        %933 = vmatpush2.msra.mxu0 %v506
        %934 = vmatprep.subr.mxu0 %v503
        %935 = vmatpush2.msra.mxu0 %v502
        %936 = vmatprep.subr.mxu0 %v499
        %937 = vmatpush2.msra.mxu0 %v498
        %938 = vmatprep.subr.mxu0 %v495
        %939 = vmatpush2.msra.mxu0 %v494
        %940 = vmatprep.subr.mxu0 %v491
        %941 = vmatpush2.msra.mxu0 %v490
        %942 = vmatprep.subr.mxu0 %v487
        %943 = vmatpush2.msra.mxu0 %v486
        %944 = vmatprep.subr.mxu0 %v483
        %945 = vmatpush2.msra.mxu0 %v482
        %946 = vmatprep.subr.mxu0 %v479
        %947 = vmatpush2.msra.mxu0 %v478
        %948 = vmatprep.mubr.f32.mxu0 %v303
        %949 = vmatmul.mubr.f32.gmra.mxu0 %v302
        %v950 = vpop.f32.mrf.mxu0
        %v951 = vadd.f32 %v867, %v950
        %v952 = vpop.f32.mrf.mxu0
        %v953 = vadd.f32 %v871, %v952
        %954 = vmatprep.mubr.f32.mxu0 %v310
        %955 = vmatmul.mubr.f32.gmra.mxu0 %v309
        %v956 = vpop.f32.mrf.mxu0
        %v957 = vadd.f32 %v867, %v956
        %v958 = vpop.f32.mrf.mxu0
        %v959 = vadd.f32 %v871, %v958
        %960 = vmatprep.mubr.f32.mxu0 %v317
        %961 = vmatmul.mubr.f32.gmra.mxu0 %v316
        %v962 = vpop.f32.mrf.mxu0
        %v963 = vadd.f32 %v867, %v962
        %v964 = vpop.f32.mrf.mxu0
        %v965 = vadd.f32 %v871, %v964
        %966 = vmatprep.mubr.f32.mxu0 %v324
        %967 = vmatmul.mubr.f32.gmra.mxu0 %v323
        %v968 = vpop.f32.mrf.mxu0
        %v969 = vadd.f32 %v867, %v968
        %v970 = vpop.f32.mrf.mxu0
        %v971 = vadd.f32 %v871, %v970
        %972 = vmatprep.mubr.f32.mxu0 %v331
        %973 = vmatmul.mubr.f32.gmra.mxu0 %v330
        %v974 = vpop.f32.mrf.mxu0
        %v975 = vadd.f32 %v867, %v974
        %v976 = vpop.f32.mrf.mxu0
        %v977 = vadd.f32 %v871, %v976
        %978 = vmatprep.mubr.f32.mxu0 %v338
        %979 = vmatmul.mubr.f32.gmra.mxu0 %v337
        %v980 = vpop.f32.mrf.mxu0
        %v981 = vadd.f32 %v867, %v980
        %v982 = vpop.f32.mrf.mxu0
        %v983 = vadd.f32 %v871, %v982
        %984 = vmatprep.mubr.f32.mxu0 %v345
        %985 = vmatmul.mubr.f32.gmra.mxu0 %v344
        %v986 = vpop.f32.mrf.mxu0
        %v987 = vadd.f32 %v867, %v986
        %v988 = vpop.f32.mrf.mxu0
        %v989 = vadd.f32 %v871, %v988
        %990 = vmatprep.mubr.f32.mxu0 %v352
        %991 = vmatmul.mubr.f32.gmra.mxu0 %v351
        %v992 = vpop.f32.mrf.mxu0
        %v993 = vadd.f32 %v867, %v992
        %v994 = vpop.f32.mrf.mxu0
        %v995 = vadd.f32 %v871, %v994
        %996 = vmatprep.mubr.f32.mxu0 %v359
        %997 = vmatmul.mubr.f32.gmra.mxu0 %v358
        %v998 = vpop.f32.mrf.mxu0
        %v999 = vadd.f32 %v867, %v998
        %v1000 = vpop.f32.mrf.mxu0
        %v1001 = vadd.f32 %v871, %v1000
        %1002 = vmatprep.mubr.f32.mxu0 %v366
        %1003 = vmatmul.mubr.f32.gmra.mxu0 %v365
        %v1004 = vpop.f32.mrf.mxu0
        %v1005 = vadd.f32 %v867, %v1004
        %v1006 = vpop.f32.mrf.mxu0
        %v1007 = vadd.f32 %v871, %v1006
        %1008 = vmatprep.mubr.f32.mxu0 %v373
        %1009 = vmatmul.mubr.f32.gmra.mxu0 %v372
        %v1010 = vpop.f32.mrf.mxu0
        %v1011 = vadd.f32 %v867, %v1010
        %v1012 = vpop.f32.mrf.mxu0
        %v1013 = vadd.f32 %v871, %v1012
        %1014 = vmatprep.mubr.f32.mxu0 %v380
        %1015 = vmatmul.mubr.f32.gmra.mxu0 %v379
        %v1016 = vpop.f32.mrf.mxu0
        %v1017 = vadd.f32 %v867, %v1016
        %v1018 = vpop.f32.mrf.mxu0
        %v1019 = vadd.f32 %v871, %v1018
        %1020 = vmatprep.mubr.f32.mxu0 %v387
        %1021 = vmatmul.mubr.f32.gmra.mxu0 %v386
        %v1022 = vpop.f32.mrf.mxu0
        %v1023 = vadd.f32 %v867, %v1022
        %v1024 = vpop.f32.mrf.mxu0
        %v1025 = vadd.f32 %v871, %v1024
        %1026 = vmatprep.mubr.f32.mxu0 %v394
        %1027 = vmatmul.mubr.f32.gmra.mxu0 %v393
        %v1028 = vpop.f32.mrf.mxu0
        %v1029 = vadd.f32 %v867, %v1028
        %v1030 = vpop.f32.mrf.mxu0
        %v1031 = vadd.f32 %v871, %v1030
        %1032 = vmatprep.mubr.f32.mxu0 %v401
        %1033 = vmatmul.mubr.f32.gmra.mxu0 %v400
        %v1034 = vpop.f32.mrf.mxu0
        %v1035 = vadd.f32 %v867, %v1034
        %v1036 = vpop.f32.mrf.mxu0
        %v1037 = vadd.f32 %v871, %v1036
        %1038 = vmatprep.mubr.f32.mxu0 %v408
        %1039 = vmatmul.mubr.f32.gmra.mxu0 %v407
        %v1040 = vpop.f32.mrf.mxu0
        %v1041 = vadd.f32 %v867, %v1040
        %v1042 = vpop.f32.mrf.mxu0
        %v1043 = vadd.f32 %v871, %v1042
        %1044 = vdwg.mxu0
        %1045 = vmatprep.subr.mxu0 %v603
        %1046 = vmatpush1.msra.mxu0 %v602
        %1047 = vmatprep.subr.mxu0 %v599
        %1048 = vmatpush1.msra.mxu0 %v598
        %1049 = vmatprep.subr.mxu0 %v595
        %1050 = vmatpush1.msra.mxu0 %v594
        %1051 = vmatprep.subr.mxu0 %v591
        %1052 = vmatpush1.msra.mxu0 %v590
        %1053 = vmatprep.subr.mxu0 %v587
        %1054 = vmatpush1.msra.mxu0 %v586
        %1055 = vmatprep.subr.mxu0 %v583
        %1056 = vmatpush1.msra.mxu0 %v582
        %1057 = vmatprep.subr.mxu0 %v579
        %1058 = vmatpush1.msra.mxu0 %v578
        %1059 = vmatprep.subr.mxu0 %v575
        %1060 = vmatpush1.msra.mxu0 %v574
        %1061 = vmatprep.subr.mxu0 %v571
        %1062 = vmatpush1.msra.mxu0 %v570
        %1063 = vmatprep.subr.mxu0 %v567
        %1064 = vmatpush1.msra.mxu0 %v566
        %1065 = vmatprep.subr.mxu0 %v563
        %1066 = vmatpush1.msra.mxu0 %v562
        %1067 = vmatprep.subr.mxu0 %v559
        %1068 = vmatpush1.msra.mxu0 %v558
        %1069 = vmatprep.subr.mxu0 %v555
        %1070 = vmatpush1.msra.mxu0 %v554
        %1071 = vmatprep.subr.mxu0 %v551
        %1072 = vmatpush1.msra.mxu0 %v550
        %1073 = vmatprep.subr.mxu0 %v547
        %1074 = vmatpush1.msra.mxu0 %v546
        %1075 = vmatprep.subr.mxu0 %v543
        %1076 = vmatpush1.msra.mxu0 %v542
        %1077 = vmatprep.subr.mxu0 %v667
        %1078 = vmatpush2.msra.mxu0 %v666
        %1079 = vmatprep.subr.mxu0 %v663
        %1080 = vmatpush2.msra.mxu0 %v662
        %1081 = vmatprep.subr.mxu0 %v659
        %1082 = vmatpush2.msra.mxu0 %v658
        %1083 = vmatprep.subr.mxu0 %v655
        %1084 = vmatpush2.msra.mxu0 %v654
        %1085 = vmatprep.subr.mxu0 %v651
        %1086 = vmatpush2.msra.mxu0 %v650
        %1087 = vmatprep.subr.mxu0 %v647
        %1088 = vmatpush2.msra.mxu0 %v646
        %1089 = vmatprep.subr.mxu0 %v643
        %1090 = vmatpush2.msra.mxu0 %v642
        %1091 = vmatprep.subr.mxu0 %v639
        %1092 = vmatpush2.msra.mxu0 %v638
        %1093 = vmatprep.subr.mxu0 %v635
        %1094 = vmatpush2.msra.mxu0 %v634
        %1095 = vmatprep.subr.mxu0 %v631
        %1096 = vmatpush2.msra.mxu0 %v630
        %1097 = vmatprep.subr.mxu0 %v627
        %1098 = vmatpush2.msra.mxu0 %v626
        %1099 = vmatprep.subr.mxu0 %v623
        %1100 = vmatpush2.msra.mxu0 %v622
        %1101 = vmatprep.subr.mxu0 %v619
        %1102 = vmatpush2.msra.mxu0 %v618
        %1103 = vmatprep.subr.mxu0 %v615
        %1104 = vmatpush2.msra.mxu0 %v614
        %1105 = vmatprep.subr.mxu0 %v611
        %1106 = vmatpush2.msra.mxu0 %v610
        %1107 = vmatprep.subr.mxu0 %v607
        %1108 = vmatpush2.msra.mxu0 %v606
        %1109 = vmatprep.mubr.f32.mxu0 %v305
        %1110 = vmatmul.mubr.f32.gmra.mxu0 %v304
        %v1111 = vpop.f32.mrf.mxu0
        %v1112 = vadd.f32 %v951, %v1111
        %v1113 = vpop.f32.mrf.mxu0
        %v1114 = vadd.f32 %v953, %v1113
        %1115 = vmatprep.mubr.f32.mxu0 %v312
        %1116 = vmatmul.mubr.f32.gmra.mxu0 %v311
        %v1117 = vpop.f32.mrf.mxu0
        %v1118 = vadd.f32 %v957, %v1117
        %v1119 = vpop.f32.mrf.mxu0
        %v1120 = vadd.f32 %v959, %v1119
        %1121 = vmatprep.mubr.f32.mxu0 %v319
        %1122 = vmatmul.mubr.f32.gmra.mxu0 %v318
        %v1123 = vpop.f32.mrf.mxu0
        %v1124 = vadd.f32 %v963, %v1123
        %v1125 = vpop.f32.mrf.mxu0
        %v1126 = vadd.f32 %v965, %v1125
        %1127 = vmatprep.mubr.f32.mxu0 %v326
        %1128 = vmatmul.mubr.f32.gmra.mxu0 %v325
        %v1129 = vpop.f32.mrf.mxu0
        %v1130 = vadd.f32 %v969, %v1129
        %v1131 = vpop.f32.mrf.mxu0
        %v1132 = vadd.f32 %v971, %v1131
        %1133 = vmatprep.mubr.f32.mxu0 %v333
        %1134 = vmatmul.mubr.f32.gmra.mxu0 %v332
        %v1135 = vpop.f32.mrf.mxu0
        %v1136 = vadd.f32 %v975, %v1135
        %v1137 = vpop.f32.mrf.mxu0
        %v1138 = vadd.f32 %v977, %v1137
        %1139 = vmatprep.mubr.f32.mxu0 %v340
        %1140 = vmatmul.mubr.f32.gmra.mxu0 %v339
        %v1141 = vpop.f32.mrf.mxu0
        %v1142 = vadd.f32 %v981, %v1141
        %v1143 = vpop.f32.mrf.mxu0
        %v1144 = vadd.f32 %v983, %v1143
        %1145 = vmatprep.mubr.f32.mxu0 %v347
        %1146 = vmatmul.mubr.f32.gmra.mxu0 %v346
        %v1147 = vpop.f32.mrf.mxu0
        %v1148 = vadd.f32 %v987, %v1147
        %v1149 = vpop.f32.mrf.mxu0
        %v1150 = vadd.f32 %v989, %v1149
        %1151 = vmatprep.mubr.f32.mxu0 %v354
        %1152 = vmatmul.mubr.f32.gmra.mxu0 %v353
        %v1153 = vpop.f32.mrf.mxu0
        %v1154 = vadd.f32 %v993, %v1153
        %v1155 = vpop.f32.mrf.mxu0
        %v1156 = vadd.f32 %v995, %v1155
        %1157 = vmatprep.mubr.f32.mxu0 %v361
        %1158 = vmatmul.mubr.f32.gmra.mxu0 %v360
        %v1159 = vpop.f32.mrf.mxu0
        %v1160 = vadd.f32 %v999, %v1159
        %v1161 = vpop.f32.mrf.mxu0
        %v1162 = vadd.f32 %v1001, %v1161
        %1163 = vmatprep.mubr.f32.mxu0 %v368
        %1164 = vmatmul.mubr.f32.gmra.mxu0 %v367
        %v1165 = vpop.f32.mrf.mxu0
        %v1166 = vadd.f32 %v1005, %v1165
        %v1167 = vpop.f32.mrf.mxu0
        %v1168 = vadd.f32 %v1007, %v1167
        %1169 = vmatprep.mubr.f32.mxu0 %v375
        %1170 = vmatmul.mubr.f32.gmra.mxu0 %v374
        %v1171 = vpop.f32.mrf.mxu0
        %v1172 = vadd.f32 %v1011, %v1171
        %v1173 = vpop.f32.mrf.mxu0
        %v1174 = vadd.f32 %v1013, %v1173
        %1175 = vmatprep.mubr.f32.mxu0 %v382
        %1176 = vmatmul.mubr.f32.gmra.mxu0 %v381
        %v1177 = vpop.f32.mrf.mxu0
        %v1178 = vadd.f32 %v1017, %v1177
        %v1179 = vpop.f32.mrf.mxu0
        %v1180 = vadd.f32 %v1019, %v1179
        %1181 = vmatprep.mubr.f32.mxu0 %v389
        %1182 = vmatmul.mubr.f32.gmra.mxu0 %v388
        %v1183 = vpop.f32.mrf.mxu0
        %v1184 = vadd.f32 %v1023, %v1183
        %v1185 = vpop.f32.mrf.mxu0
        %v1186 = vadd.f32 %v1025, %v1185
        %1187 = vmatprep.mubr.f32.mxu0 %v396
        %1188 = vmatmul.mubr.f32.gmra.mxu0 %v395
        %v1189 = vpop.f32.mrf.mxu0
        %v1190 = vadd.f32 %v1029, %v1189
        %v1191 = vpop.f32.mrf.mxu0
        %v1192 = vadd.f32 %v1031, %v1191
        %1193 = vmatprep.mubr.f32.mxu0 %v403
        %1194 = vmatmul.mubr.f32.gmra.mxu0 %v402
        %v1195 = vpop.f32.mrf.mxu0
        %v1196 = vadd.f32 %v1035, %v1195
        %v1197 = vpop.f32.mrf.mxu0
        %v1198 = vadd.f32 %v1037, %v1197
        %1199 = vmatprep.mubr.f32.mxu0 %v410
        %1200 = vmatmul.mubr.f32.gmra.mxu0 %v409
        %v1201 = vpop.f32.mrf.mxu0
        %v1202 = vadd.f32 %v1041, %v1201
        %v1203 = vpop.f32.mrf.mxu0
        %v1204 = vadd.f32 %v1043, %v1203
        %1205 = vdwg.mxu0
        %1206 = vmatprep.subr.mxu0 %v731
        %1207 = vmatpush1.msra.mxu0 %v730
        %1208 = vmatprep.subr.mxu0 %v727
        %1209 = vmatpush1.msra.mxu0 %v726
        %1210 = vmatprep.subr.mxu0 %v723
        %1211 = vmatpush1.msra.mxu0 %v722
        %1212 = vmatprep.subr.mxu0 %v719
        %1213 = vmatpush1.msra.mxu0 %v718
        %1214 = vmatprep.subr.mxu0 %v715
        %1215 = vmatpush1.msra.mxu0 %v714
        %1216 = vmatprep.subr.mxu0 %v711
        %1217 = vmatpush1.msra.mxu0 %v710
        %1218 = vmatprep.subr.mxu0 %v707
        %1219 = vmatpush1.msra.mxu0 %v706
        %1220 = vmatprep.subr.mxu0 %v703
        %1221 = vmatpush1.msra.mxu0 %v702
        %1222 = vmatprep.subr.mxu0 %v699
        %1223 = vmatpush1.msra.mxu0 %v698
        %1224 = vmatprep.subr.mxu0 %v695
        %1225 = vmatpush1.msra.mxu0 %v694
        %1226 = vmatprep.subr.mxu0 %v691
        %1227 = vmatpush1.msra.mxu0 %v690
        %1228 = vmatprep.subr.mxu0 %v687
        %1229 = vmatpush1.msra.mxu0 %v686
        %1230 = vmatprep.subr.mxu0 %v683
        %1231 = vmatpush1.msra.mxu0 %v682
        %1232 = vmatprep.subr.mxu0 %v679
        %1233 = vmatpush1.msra.mxu0 %v678
        %1234 = vmatprep.subr.mxu0 %v675
        %1235 = vmatpush1.msra.mxu0 %v674
        %1236 = vmatprep.subr.mxu0 %v671
        %1237 = vmatpush1.msra.mxu0 %v670
        %1238 = vmatprep.subr.mxu0 %v795
        %1239 = vmatpush2.msra.mxu0 %v794
        %1240 = vmatprep.subr.mxu0 %v791
        %1241 = vmatpush2.msra.mxu0 %v790
        %1242 = vmatprep.subr.mxu0 %v787
        %1243 = vmatpush2.msra.mxu0 %v786
        %1244 = vmatprep.subr.mxu0 %v783
        %1245 = vmatpush2.msra.mxu0 %v782
        %1246 = vmatprep.subr.mxu0 %v779
        %1247 = vmatpush2.msra.mxu0 %v778
        %1248 = vmatprep.subr.mxu0 %v775
        %1249 = vmatpush2.msra.mxu0 %v774
        %1250 = vmatprep.subr.mxu0 %v771
        %1251 = vmatpush2.msra.mxu0 %v770
        %1252 = vmatprep.subr.mxu0 %v767
        %1253 = vmatpush2.msra.mxu0 %v766
        %1254 = vmatprep.subr.mxu0 %v763
        %1255 = vmatpush2.msra.mxu0 %v762
        %1256 = vmatprep.subr.mxu0 %v759
        %1257 = vmatpush2.msra.mxu0 %v758
        %1258 = vmatprep.subr.mxu0 %v755
        %1259 = vmatpush2.msra.mxu0 %v754
        %1260 = vmatprep.subr.mxu0 %v751
        %1261 = vmatpush2.msra.mxu0 %v750
        %1262 = vmatprep.subr.mxu0 %v747
        %1263 = vmatpush2.msra.mxu0 %v746
        %1264 = vmatprep.subr.mxu0 %v743
        %1265 = vmatpush2.msra.mxu0 %v742
        %1266 = vmatprep.subr.mxu0 %v739
        %1267 = vmatpush2.msra.mxu0 %v738
        %1268 = vmatprep.subr.mxu0 %v735
        %1269 = vmatpush2.msra.mxu0 %v734
        %1270 = vmatprep.mubr.f32.mxu0 %v307
        %1271 = vmatmul.mubr.f32.gmra.mxu0 %v306
        %v1272 = vpop.f32.mrf.mxu0
        %v1273 = vadd.f32 %v1112, %v1272
        %v1274 = vpop.f32.mrf.mxu0
        %v1275 = vadd.f32 %v1114, %v1274
        %1276 = vmatprep.mubr.f32.mxu0 %v314
        %1277 = vmatmul.mubr.f32.gmra.mxu0 %v313
        %v1278 = vpop.f32.mrf.mxu0
        %v1279 = vadd.f32 %v1118, %v1278
        %v1280 = vpop.f32.mrf.mxu0
        %v1281 = vadd.f32 %v1120, %v1280
        %1282 = vmatprep.mubr.f32.mxu0 %v321
        %1283 = vmatmul.mubr.f32.gmra.mxu0 %v320
        %v1284 = vpop.f32.mrf.mxu0
        %v1285 = vadd.f32 %v1124, %v1284
        %v1286 = vpop.f32.mrf.mxu0
        %v1287 = vadd.f32 %v1126, %v1286
        %1288 = vmatprep.mubr.f32.mxu0 %v328
        %1289 = vmatmul.mubr.f32.gmra.mxu0 %v327
        %v1290 = vpop.f32.mrf.mxu0
        %v1291 = vadd.f32 %v1130, %v1290
        %v1292 = vpop.f32.mrf.mxu0
        %v1293 = vadd.f32 %v1132, %v1292
        %1294 = vmatprep.mubr.f32.mxu0 %v335
        %1295 = vmatmul.mubr.f32.gmra.mxu0 %v334
        %v1296 = vpop.f32.mrf.mxu0
        %v1297 = vadd.f32 %v1136, %v1296
        %v1298 = vpop.f32.mrf.mxu0
        %v1299 = vadd.f32 %v1138, %v1298
        %1300 = vmatprep.mubr.f32.mxu0 %v342
        %1301 = vmatmul.mubr.f32.gmra.mxu0 %v341
        %v1302 = vpop.f32.mrf.mxu0
        %v1303 = vadd.f32 %v1142, %v1302
        %v1304 = vpop.f32.mrf.mxu0
        %v1305 = vadd.f32 %v1144, %v1304
        %1306 = vmatprep.mubr.f32.mxu0 %v349
        %1307 = vmatmul.mubr.f32.gmra.mxu0 %v348
        %v1308 = vpop.f32.mrf.mxu0
        %v1309 = vadd.f32 %v1148, %v1308
        %v1310 = vpop.f32.mrf.mxu0
        %v1311 = vadd.f32 %v1150, %v1310
        %1312 = vmatprep.mubr.f32.mxu0 %v356
        %1313 = vmatmul.mubr.f32.gmra.mxu0 %v355
        %v1314 = vpop.f32.mrf.mxu0
        %v1315 = vadd.f32 %v1154, %v1314
        %v1316 = vpop.f32.mrf.mxu0
        %v1317 = vadd.f32 %v1156, %v1316
        %1318 = vmatprep.mubr.f32.mxu0 %v363
        %1319 = vmatmul.mubr.f32.gmra.mxu0 %v362
        %v1320 = vpop.f32.mrf.mxu0
        %v1321 = vadd.f32 %v1160, %v1320
        %v1322 = vpop.f32.mrf.mxu0
        %v1323 = vadd.f32 %v1162, %v1322
        %1324 = vmatprep.mubr.f32.mxu0 %v370
        %1325 = vmatmul.mubr.f32.gmra.mxu0 %v369
        %v1326 = vpop.f32.mrf.mxu0
        %v1327 = vadd.f32 %v1166, %v1326
        %v1328 = vpop.f32.mrf.mxu0
        %v1329 = vadd.f32 %v1168, %v1328
        %1330 = vmatprep.mubr.f32.mxu0 %v377
        %1331 = vmatmul.mubr.f32.gmra.mxu0 %v376
        %v1332 = vpop.f32.mrf.mxu0
        %v1333 = vadd.f32 %v1172, %v1332
        %v1334 = vpop.f32.mrf.mxu0
        %v1335 = vadd.f32 %v1174, %v1334
        %1336 = vmatprep.mubr.f32.mxu0 %v384
        %1337 = vmatmul.mubr.f32.gmra.mxu0 %v383
        %v1338 = vpop.f32.mrf.mxu0
        %v1339 = vadd.f32 %v1178, %v1338
        %v1340 = vpop.f32.mrf.mxu0
        %v1341 = vadd.f32 %v1180, %v1340
        %1342 = vmatprep.mubr.f32.mxu0 %v391
        %1343 = vmatmul.mubr.f32.gmra.mxu0 %v390
        %v1344 = vpop.f32.mrf.mxu0
        %v1345 = vadd.f32 %v1184, %v1344
        %v1346 = vpop.f32.mrf.mxu0
        %v1347 = vadd.f32 %v1186, %v1346
        %1348 = vmatprep.mubr.f32.mxu0 %v398
        %1349 = vmatmul.mubr.f32.gmra.mxu0 %v397
        %v1350 = vpop.f32.mrf.mxu0
        %v1351 = vadd.f32 %v1190, %v1350
        %v1352 = vpop.f32.mrf.mxu0
        %v1353 = vadd.f32 %v1192, %v1352
        %1354 = vmatprep.mubr.f32.mxu0 %v405
        %1355 = vmatmul.mubr.f32.gmra.mxu0 %v404
        %v1356 = vpop.f32.mrf.mxu0
        %v1357 = vadd.f32 %v1196, %v1356
        %v1358 = vpop.f32.mrf.mxu0
        %v1359 = vadd.f32 %v1198, %v1358
        %1360 = vmatprep.mubr.f32.mxu0 %v412
        %1361 = vmatmul.mubr.f32.gmra.mxu0 %v411
        %v1362 = vpop.f32.mrf.mxu0
        %v1363 = vadd.f32 %v1202, %v1362
        %v1364 = vpop.f32.mrf.mxu0
        %v1365 = vadd.f32 %v1204, %v1364
        %1366 = vdwg.mxu0
        %1367 = vmatprep.subr.mxu0 %v859
        %1368 = vmatpush1.msra.mxu0 %v858
        %1369 = vmatprep.subr.mxu0 %v855
        %1370 = vmatpush1.msra.mxu0 %v854
        %1371 = vmatprep.subr.mxu0 %v851
        %1372 = vmatpush1.msra.mxu0 %v850
        %1373 = vmatprep.subr.mxu0 %v847
        %1374 = vmatpush1.msra.mxu0 %v846
        %1375 = vmatprep.subr.mxu0 %v843
        %1376 = vmatpush1.msra.mxu0 %v842
        %1377 = vmatprep.subr.mxu0 %v839
        %1378 = vmatpush1.msra.mxu0 %v838
        %1379 = vmatprep.subr.mxu0 %v835
        %1380 = vmatpush1.msra.mxu0 %v834
        %1381 = vmatprep.subr.mxu0 %v831
        %1382 = vmatpush1.msra.mxu0 %v830
        %1383 = vmatprep.subr.mxu0 %v827
        %1384 = vmatpush1.msra.mxu0 %v826
        %1385 = vmatprep.subr.mxu0 %v823
        %1386 = vmatpush1.msra.mxu0 %v822
        %1387 = vmatprep.subr.mxu0 %v819
        %1388 = vmatpush1.msra.mxu0 %v818
        %1389 = vmatprep.subr.mxu0 %v815
        %1390 = vmatpush1.msra.mxu0 %v814
        %1391 = vmatprep.subr.mxu0 %v811
        %1392 = vmatpush1.msra.mxu0 %v810
        %1393 = vmatprep.subr.mxu0 %v807
        %1394 = vmatpush1.msra.mxu0 %v806
        %1395 = vmatprep.subr.mxu0 %v803
        %1396 = vmatpush1.msra.mxu0 %v802
        %1397 = vmatprep.subr.mxu0 %v799
        %1398 = vmatpush1.msra.mxu0 %v798
        %1399 = vmatprep.subr.mxu0 0.0
        %1400 = vmatpush2.msra.mxu0 0.0
        %1401 = vmatprep.subr.mxu0 0.0
        %1402 = vmatpush2.msra.mxu0 0.0
        %1403 = vmatprep.subr.mxu0 0.0
        %1404 = vmatpush2.msra.mxu0 0.0
        %1405 = vmatprep.subr.mxu0 0.0
        %1406 = vmatpush2.msra.mxu0 0.0
        %1407 = vmatprep.subr.mxu0 0.0
        %1408 = vmatpush2.msra.mxu0 0.0
        %1409 = vmatprep.subr.mxu0 0.0
        %1410 = vmatpush2.msra.mxu0 0.0
        %1411 = vmatprep.subr.mxu0 0.0
        %1412 = vmatpush2.msra.mxu0 0.0
        %1413 = vmatprep.subr.mxu0 0.0
        %1414 = vmatpush2.msra.mxu0 0.0
        %1415 = vmatprep.subr.mxu0 0.0
        %1416 = vmatpush2.msra.mxu0 0.0
        %1417 = vmatprep.subr.mxu0 0.0
        %1418 = vmatpush2.msra.mxu0 0.0
        %1419 = vmatprep.subr.mxu0 0.0
        %1420 = vmatpush2.msra.mxu0 0.0
        %1421 = vmatprep.subr.mxu0 0.0
        %1422 = vmatpush2.msra.mxu0 0.0
        %1423 = vmatprep.subr.mxu0 0.0
        %1424 = vmatpush2.msra.mxu0 0.0
        %1425 = vmatprep.subr.mxu0 0.0
        %1426 = vmatpush2.msra.mxu0 0.0
        %1427 = vmatprep.subr.mxu0 0.0
        %1428 = vmatpush2.msra.mxu0 0.0
        %1429 = vmatprep.subr.mxu0 0.0
        %1430 = vmatpush2.msra.mxu0 0.0
        %1431 = vmatprep.mubr.f32.mxu0 0.0
        %1432 = vmatmul.mubr.f32.gmra.mxu0 %v308
        %v1433 = vpop.f32.mrf.mxu0
        %v1434 = vadd.f32 %v1273, %v1433
        %v1435 = vpop.f32.mrf.mxu0
        %v1436 = vadd.f32 %v1275, %v1435
        %1437 = vmatprep.mubr.f32.mxu0 0.0
        %1438 = vmatmul.mubr.f32.gmra.mxu0 %v315
        %v1439 = vpop.f32.mrf.mxu0
        %v1440 = vadd.f32 %v1279, %v1439
        %v1441 = vpop.f32.mrf.mxu0
        %v1442 = vadd.f32 %v1281, %v1441
        %1443 = vmatprep.mubr.f32.mxu0 0.0
        %1444 = vmatmul.mubr.f32.gmra.mxu0 %v322
        %v1445 = vpop.f32.mrf.mxu0
        %v1446 = vadd.f32 %v1285, %v1445
        %v1447 = vpop.f32.mrf.mxu0
        %v1448 = vadd.f32 %v1287, %v1447
        %1449 = vmatprep.mubr.f32.mxu0 0.0
        %1450 = vmatmul.mubr.f32.gmra.mxu0 %v329
        %v1451 = vpop.f32.mrf.mxu0
        %v1452 = vadd.f32 %v1291, %v1451
        %v1453 = vpop.f32.mrf.mxu0
        %v1454 = vadd.f32 %v1293, %v1453
        %1455 = vmatprep.mubr.f32.mxu0 0.0
        %1456 = vmatmul.mubr.f32.gmra.mxu0 %v336
        %v1457 = vpop.f32.mrf.mxu0
        %v1458 = vadd.f32 %v1297, %v1457
        %v1459 = vpop.f32.mrf.mxu0
        %v1460 = vadd.f32 %v1299, %v1459
        %1461 = vmatprep.mubr.f32.mxu0 0.0
        %1462 = vmatmul.mubr.f32.gmra.mxu0 %v343
        %v1463 = vpop.f32.mrf.mxu0
        %v1464 = vadd.f32 %v1303, %v1463
        %v1465 = vpop.f32.mrf.mxu0
        %v1466 = vadd.f32 %v1305, %v1465
        %1467 = vmatprep.mubr.f32.mxu0 0.0
        %1468 = vmatmul.mubr.f32.gmra.mxu0 %v350
        %v1469 = vpop.f32.mrf.mxu0
        %v1470 = vadd.f32 %v1309, %v1469
        %v1471 = vpop.f32.mrf.mxu0
        %v1472 = vadd.f32 %v1311, %v1471
        %1473 = vmatprep.mubr.f32.mxu0 0.0
        %1474 = vmatmul.mubr.f32.gmra.mxu0 %v357
        %v1475 = vpop.f32.mrf.mxu0
        %v1476 = vadd.f32 %v1315, %v1475
        %v1477 = vpop.f32.mrf.mxu0
        %v1478 = vadd.f32 %v1317, %v1477
        %1479 = vmatprep.mubr.f32.mxu0 0.0
        %1480 = vmatmul.mubr.f32.gmra.mxu0 %v364
        %v1481 = vpop.f32.mrf.mxu0
        %v1482 = vadd.f32 %v1321, %v1481
        %v1483 = vpop.f32.mrf.mxu0
        %v1484 = vadd.f32 %v1323, %v1483
        %1485 = vmatprep.mubr.f32.mxu0 0.0
        %1486 = vmatmul.mubr.f32.gmra.mxu0 %v371
        %v1487 = vpop.f32.mrf.mxu0
        %v1488 = vadd.f32 %v1327, %v1487
        %v1489 = vpop.f32.mrf.mxu0
        %v1490 = vadd.f32 %v1329, %v1489
        %1491 = vmatprep.mubr.f32.mxu0 0.0
        %1492 = vmatmul.mubr.f32.gmra.mxu0 %v378
        %v1493 = vpop.f32.mrf.mxu0
        %v1494 = vadd.f32 %v1333, %v1493
        %v1495 = vpop.f32.mrf.mxu0
        %v1496 = vadd.f32 %v1335, %v1495
        %1497 = vmatprep.mubr.f32.mxu0 0.0
        %1498 = vmatmul.mubr.f32.gmra.mxu0 %v385
        %v1499 = vpop.f32.mrf.mxu0
        %v1500 = vadd.f32 %v1339, %v1499
        %v1501 = vpop.f32.mrf.mxu0
        %v1502 = vadd.f32 %v1341, %v1501
        %1503 = vmatprep.mubr.f32.mxu0 0.0
        %1504 = vmatmul.mubr.f32.gmra.mxu0 %v392
        %v1505 = vpop.f32.mrf.mxu0
        %v1506 = vadd.f32 %v1345, %v1505
        %v1507 = vpop.f32.mrf.mxu0
        %v1508 = vadd.f32 %v1347, %v1507
        %1509 = vmatprep.mubr.f32.mxu0 0.0
        %1510 = vmatmul.mubr.f32.gmra.mxu0 %v399
        %v1511 = vpop.f32.mrf.mxu0
        %v1512 = vadd.f32 %v1351, %v1511
        %v1513 = vpop.f32.mrf.mxu0
        %v1514 = vadd.f32 %v1353, %v1513
        %1515 = vmatprep.mubr.f32.mxu0 0.0
        %1516 = vmatmul.mubr.f32.gmra.mxu0 %v406
        %v1517 = vpop.f32.mrf.mxu0
        %v1518 = vadd.f32 %v1357, %v1517
        %v1519 = vpop.f32.mrf.mxu0
        %v1520 = vadd.f32 %v1359, %v1519
        %1521 = vmatprep.mubr.f32.mxu0 0.0
        %1522 = vmatmul.mubr.f32.gmra.mxu0 %v413
        %v1523 = vpop.f32.mrf.mxu0
        %v1524 = vadd.f32 %v1363, %v1523
        %v1525 = vpop.f32.mrf.mxu0
        %v1526 = vadd.f32 %v1365, %v1525
        %1527 = vdwg.mxu0
        %1528 = vmatprep.subr.mxu0 %v477
        %1529 = vmatpush1.msra.mxu0 %v476
        %1530 = vmatprep.subr.mxu0 %v473
        %1531 = vmatpush1.msra.mxu0 %v472
        %1532 = vmatprep.subr.mxu0 %v469
        %1533 = vmatpush1.msra.mxu0 %v468
        %1534 = vmatprep.subr.mxu0 %v465
        %1535 = vmatpush1.msra.mxu0 %v464
        %1536 = vmatprep.subr.mxu0 %v461
        %1537 = vmatpush1.msra.mxu0 %v460
        %1538 = vmatprep.subr.mxu0 %v457
        %1539 = vmatpush1.msra.mxu0 %v456
        %1540 = vmatprep.subr.mxu0 %v453
        %1541 = vmatpush1.msra.mxu0 %v452
        %1542 = vmatprep.subr.mxu0 %v449
        %1543 = vmatpush1.msra.mxu0 %v448
        %1544 = vmatprep.subr.mxu0 %v445
        %1545 = vmatpush1.msra.mxu0 %v444
        %1546 = vmatprep.subr.mxu0 %v441
        %1547 = vmatpush1.msra.mxu0 %v440
        %1548 = vmatprep.subr.mxu0 %v437
        %1549 = vmatpush1.msra.mxu0 %v436
        %1550 = vmatprep.subr.mxu0 %v433
        %1551 = vmatpush1.msra.mxu0 %v432
        %1552 = vmatprep.subr.mxu0 %v429
        %1553 = vmatpush1.msra.mxu0 %v428
        %1554 = vmatprep.subr.mxu0 %v425
        %1555 = vmatpush1.msra.mxu0 %v424
        %1556 = vmatprep.subr.mxu0 %v421
        %1557 = vmatpush1.msra.mxu0 %v420
        %1558 = vmatprep.subr.mxu0 %v417
        %1559 = vmatpush1.msra.mxu0 %v416
        %1560 = vmatprep.subr.mxu0 %v541
        %1561 = vmatpush2.msra.mxu0 %v540
        %1562 = vmatprep.subr.mxu0 %v537
        %1563 = vmatpush2.msra.mxu0 %v536
        %1564 = vmatprep.subr.mxu0 %v533
        %1565 = vmatpush2.msra.mxu0 %v532
        %1566 = vmatprep.subr.mxu0 %v529
        %1567 = vmatpush2.msra.mxu0 %v528
        %1568 = vmatprep.subr.mxu0 %v525
        %1569 = vmatpush2.msra.mxu0 %v524
        %1570 = vmatprep.subr.mxu0 %v521
        %1571 = vmatpush2.msra.mxu0 %v520
        %1572 = vmatprep.subr.mxu0 %v517
        %1573 = vmatpush2.msra.mxu0 %v516
        %1574 = vmatprep.subr.mxu0 %v513
        %1575 = vmatpush2.msra.mxu0 %v512
        %1576 = vmatprep.subr.mxu0 %v509
        %1577 = vmatpush2.msra.mxu0 %v508
        %1578 = vmatprep.subr.mxu0 %v505
        %1579 = vmatpush2.msra.mxu0 %v504
        %1580 = vmatprep.subr.mxu0 %v501
        %1581 = vmatpush2.msra.mxu0 %v500
        %1582 = vmatprep.subr.mxu0 %v497
        %1583 = vmatpush2.msra.mxu0 %v496
        %1584 = vmatprep.subr.mxu0 %v493
        %1585 = vmatpush2.msra.mxu0 %v492
        %1586 = vmatprep.subr.mxu0 %v489
        %1587 = vmatpush2.msra.mxu0 %v488
        %1588 = vmatprep.subr.mxu0 %v485
        %1589 = vmatpush2.msra.mxu0 %v484
        %1590 = vmatprep.subr.mxu0 %v481
        %1591 = vmatpush2.msra.mxu0 %v480
        %1592 = vmatprep.mubr.f32.mxu0 %v303
        %1593 = vmatmul.mubr.f32.gmra.mxu0 %v302
        %v1594 = vpop.f32.mrf.mxu0
        %v1595 = vadd.f32 %v875, %v1594
        %v1596 = vpop.f32.mrf.mxu0
        %v1597 = vadd.f32 %v879, %v1596
        %1598 = vmatprep.mubr.f32.mxu0 %v310
        %1599 = vmatmul.mubr.f32.gmra.mxu0 %v309
        %v1600 = vpop.f32.mrf.mxu0
        %v1601 = vadd.f32 %v875, %v1600
        %v1602 = vpop.f32.mrf.mxu0
        %v1603 = vadd.f32 %v879, %v1602
        %1604 = vmatprep.mubr.f32.mxu0 %v317
        %1605 = vmatmul.mubr.f32.gmra.mxu0 %v316
        %v1606 = vpop.f32.mrf.mxu0
        %v1607 = vadd.f32 %v875, %v1606
        %v1608 = vpop.f32.mrf.mxu0
        %v1609 = vadd.f32 %v879, %v1608
        %1610 = vmatprep.mubr.f32.mxu0 %v324
        %1611 = vmatmul.mubr.f32.gmra.mxu0 %v323
        %v1612 = vpop.f32.mrf.mxu0
        %v1613 = vadd.f32 %v875, %v1612
        %v1614 = vpop.f32.mrf.mxu0
        %v1615 = vadd.f32 %v879, %v1614
        %1616 = vmatprep.mubr.f32.mxu0 %v331
        %1617 = vmatmul.mubr.f32.gmra.mxu0 %v330
        %v1618 = vpop.f32.mrf.mxu0
        %v1619 = vadd.f32 %v875, %v1618
        %v1620 = vpop.f32.mrf.mxu0
        %v1621 = vadd.f32 %v879, %v1620
        %1622 = vmatprep.mubr.f32.mxu0 %v338
        %1623 = vmatmul.mubr.f32.gmra.mxu0 %v337
        %v1624 = vpop.f32.mrf.mxu0
        %v1625 = vadd.f32 %v875, %v1624
        %v1626 = vpop.f32.mrf.mxu0
        %v1627 = vadd.f32 %v879, %v1626
        %1628 = vmatprep.mubr.f32.mxu0 %v345
        %1629 = vmatmul.mubr.f32.gmra.mxu0 %v344
        %v1630 = vpop.f32.mrf.mxu0
        %v1631 = vadd.f32 %v875, %v1630
        %v1632 = vpop.f32.mrf.mxu0
        %v1633 = vadd.f32 %v879, %v1632
        %1634 = vmatprep.mubr.f32.mxu0 %v352
        %1635 = vmatmul.mubr.f32.gmra.mxu0 %v351
        %v1636 = vpop.f32.mrf.mxu0
        %v1637 = vadd.f32 %v875, %v1636
        %v1638 = vpop.f32.mrf.mxu0
        %v1639 = vadd.f32 %v879, %v1638
        %1640 = vmatprep.mubr.f32.mxu0 %v359
        %1641 = vmatmul.mubr.f32.gmra.mxu0 %v358
        %v1642 = vpop.f32.mrf.mxu0
        %v1643 = vadd.f32 %v875, %v1642
        %v1644 = vpop.f32.mrf.mxu0
        %v1645 = vadd.f32 %v879, %v1644
        %1646 = vmatprep.mubr.f32.mxu0 %v366
        %1647 = vmatmul.mubr.f32.gmra.mxu0 %v365
        %v1648 = vpop.f32.mrf.mxu0
        %v1649 = vadd.f32 %v875, %v1648
        %v1650 = vpop.f32.mrf.mxu0
        %v1651 = vadd.f32 %v879, %v1650
        %1652 = vmatprep.mubr.f32.mxu0 %v373
        %1653 = vmatmul.mubr.f32.gmra.mxu0 %v372
        %v1654 = vpop.f32.mrf.mxu0
        %v1655 = vadd.f32 %v875, %v1654
        %v1656 = vpop.f32.mrf.mxu0
        %v1657 = vadd.f32 %v879, %v1656
        %1658 = vmatprep.mubr.f32.mxu0 %v380
        %1659 = vmatmul.mubr.f32.gmra.mxu0 %v379
        %v1660 = vpop.f32.mrf.mxu0
        %v1661 = vadd.f32 %v875, %v1660
        %v1662 = vpop.f32.mrf.mxu0
        %v1663 = vadd.f32 %v879, %v1662
        %1664 = vmatprep.mubr.f32.mxu0 %v387
        %1665 = vmatmul.mubr.f32.gmra.mxu0 %v386
        %v1666 = vpop.f32.mrf.mxu0
        %v1667 = vadd.f32 %v875, %v1666
        %v1668 = vpop.f32.mrf.mxu0
        %v1669 = vadd.f32 %v879, %v1668
        %1670 = vmatprep.mubr.f32.mxu0 %v394
        %1671 = vmatmul.mubr.f32.gmra.mxu0 %v393
        %v1672 = vpop.f32.mrf.mxu0
        %v1673 = vadd.f32 %v875, %v1672
        %v1674 = vpop.f32.mrf.mxu0
        %v1675 = vadd.f32 %v879, %v1674
        %1676 = vmatprep.mubr.f32.mxu0 %v401
        %1677 = vmatmul.mubr.f32.gmra.mxu0 %v400
        %v1678 = vpop.f32.mrf.mxu0
        %v1679 = vadd.f32 %v875, %v1678
        %v1680 = vpop.f32.mrf.mxu0
        %v1681 = vadd.f32 %v879, %v1680
        %1682 = vmatprep.mubr.f32.mxu0 %v408
        %1683 = vmatmul.mubr.f32.gmra.mxu0 %v407
        %v1684 = vpop.f32.mrf.mxu0
        %v1685 = vadd.f32 %v875, %v1684
        %v1686 = vpop.f32.mrf.mxu0
        %v1687 = vadd.f32 %v879, %v1686
        %1688 = vdwg.mxu0
        %1689 = vmatprep.subr.mxu0 %v605
        %1690 = vmatpush1.msra.mxu0 %v604
        %1691 = vmatprep.subr.mxu0 %v601
        %1692 = vmatpush1.msra.mxu0 %v600
        %1693 = vmatprep.subr.mxu0 %v597
        %1694 = vmatpush1.msra.mxu0 %v596
        %1695 = vmatprep.subr.mxu0 %v593
        %1696 = vmatpush1.msra.mxu0 %v592
        %1697 = vmatprep.subr.mxu0 %v589
        %1698 = vmatpush1.msra.mxu0 %v588
        %1699 = vmatprep.subr.mxu0 %v585
        %1700 = vmatpush1.msra.mxu0 %v584
        %1701 = vmatprep.subr.mxu0 %v581
        %1702 = vmatpush1.msra.mxu0 %v580
        %1703 = vmatprep.subr.mxu0 %v577
        %1704 = vmatpush1.msra.mxu0 %v576
        %1705 = vmatprep.subr.mxu0 %v573
        %1706 = vmatpush1.msra.mxu0 %v572
        %1707 = vmatprep.subr.mxu0 %v569
        %1708 = vmatpush1.msra.mxu0 %v568
        %1709 = vmatprep.subr.mxu0 %v565
        %1710 = vmatpush1.msra.mxu0 %v564
        %1711 = vmatprep.subr.mxu0 %v561
        %1712 = vmatpush1.msra.mxu0 %v560
        %1713 = vmatprep.subr.mxu0 %v557
        %1714 = vmatpush1.msra.mxu0 %v556
        %1715 = vmatprep.subr.mxu0 %v553
        %1716 = vmatpush1.msra.mxu0 %v552
        %1717 = vmatprep.subr.mxu0 %v549
        %1718 = vmatpush1.msra.mxu0 %v548
        %1719 = vmatprep.subr.mxu0 %v545
        %1720 = vmatpush1.msra.mxu0 %v544
        %1721 = vmatprep.subr.mxu0 %v669
        %1722 = vmatpush2.msra.mxu0 %v668
        %1723 = vmatprep.subr.mxu0 %v665
        %1724 = vmatpush2.msra.mxu0 %v664
        %1725 = vmatprep.subr.mxu0 %v661
        %1726 = vmatpush2.msra.mxu0 %v660
        %1727 = vmatprep.subr.mxu0 %v657
        %1728 = vmatpush2.msra.mxu0 %v656
        %1729 = vmatprep.subr.mxu0 %v653
        %1730 = vmatpush2.msra.mxu0 %v652
        %1731 = vmatprep.subr.mxu0 %v649
        %1732 = vmatpush2.msra.mxu0 %v648
        %1733 = vmatprep.subr.mxu0 %v645
        %1734 = vmatpush2.msra.mxu0 %v644
        %1735 = vmatprep.subr.mxu0 %v641
        %1736 = vmatpush2.msra.mxu0 %v640
        %1737 = vmatprep.subr.mxu0 %v637
        %1738 = vmatpush2.msra.mxu0 %v636
        %1739 = vmatprep.subr.mxu0 %v633
        %1740 = vmatpush2.msra.mxu0 %v632
        %1741 = vmatprep.subr.mxu0 %v629
        %1742 = vmatpush2.msra.mxu0 %v628
        %1743 = vmatprep.subr.mxu0 %v625
        %1744 = vmatpush2.msra.mxu0 %v624
        %1745 = vmatprep.subr.mxu0 %v621
        %1746 = vmatpush2.msra.mxu0 %v620
        %1747 = vmatprep.subr.mxu0 %v617
        %1748 = vmatpush2.msra.mxu0 %v616
        %1749 = vmatprep.subr.mxu0 %v613
        %1750 = vmatpush2.msra.mxu0 %v612
        %1751 = vmatprep.subr.mxu0 %v609
        %1752 = vmatpush2.msra.mxu0 %v608
        %1753 = vmatprep.mubr.f32.mxu0 %v305
        %1754 = vmatmul.mubr.f32.gmra.mxu0 %v304
        %v1755 = vpop.f32.mrf.mxu0
        %v1756 = vadd.f32 %v1595, %v1755
        %v1757 = vpop.f32.mrf.mxu0
        %v1758 = vadd.f32 %v1597, %v1757
        %1759 = vmatprep.mubr.f32.mxu0 %v312
        %1760 = vmatmul.mubr.f32.gmra.mxu0 %v311
        %v1761 = vpop.f32.mrf.mxu0
        %v1762 = vadd.f32 %v1601, %v1761
        %v1763 = vpop.f32.mrf.mxu0
        %v1764 = vadd.f32 %v1603, %v1763
        %1765 = vmatprep.mubr.f32.mxu0 %v319
        %1766 = vmatmul.mubr.f32.gmra.mxu0 %v318
        %v1767 = vpop.f32.mrf.mxu0
        %v1768 = vadd.f32 %v1607, %v1767
        %v1769 = vpop.f32.mrf.mxu0
        %v1770 = vadd.f32 %v1609, %v1769
        %1771 = vmatprep.mubr.f32.mxu0 %v326
        %1772 = vmatmul.mubr.f32.gmra.mxu0 %v325
        %v1773 = vpop.f32.mrf.mxu0
        %v1774 = vadd.f32 %v1613, %v1773
        %v1775 = vpop.f32.mrf.mxu0
        %v1776 = vadd.f32 %v1615, %v1775
        %1777 = vmatprep.mubr.f32.mxu0 %v333
        %1778 = vmatmul.mubr.f32.gmra.mxu0 %v332
        %v1779 = vpop.f32.mrf.mxu0
        %v1780 = vadd.f32 %v1619, %v1779
        %v1781 = vpop.f32.mrf.mxu0
        %v1782 = vadd.f32 %v1621, %v1781
        %1783 = vmatprep.mubr.f32.mxu0 %v340
        %1784 = vmatmul.mubr.f32.gmra.mxu0 %v339
        %v1785 = vpop.f32.mrf.mxu0
        %v1786 = vadd.f32 %v1625, %v1785
        %v1787 = vpop.f32.mrf.mxu0
        %v1788 = vadd.f32 %v1627, %v1787
        %1789 = vmatprep.mubr.f32.mxu0 %v347
        %1790 = vmatmul.mubr.f32.gmra.mxu0 %v346
        %v1791 = vpop.f32.mrf.mxu0
        %v1792 = vadd.f32 %v1631, %v1791
        %v1793 = vpop.f32.mrf.mxu0
        %v1794 = vadd.f32 %v1633, %v1793
        %1795 = vmatprep.mubr.f32.mxu0 %v354
        %1796 = vmatmul.mubr.f32.gmra.mxu0 %v353
        %v1797 = vpop.f32.mrf.mxu0
        %v1798 = vadd.f32 %v1637, %v1797
        %v1799 = vpop.f32.mrf.mxu0
        %v1800 = vadd.f32 %v1639, %v1799
        %1801 = vmatprep.mubr.f32.mxu0 %v361
        %1802 = vmatmul.mubr.f32.gmra.mxu0 %v360
        %v1803 = vpop.f32.mrf.mxu0
        %v1804 = vadd.f32 %v1643, %v1803
        %v1805 = vpop.f32.mrf.mxu0
        %v1806 = vadd.f32 %v1645, %v1805
        %1807 = vmatprep.mubr.f32.mxu0 %v368
        %1808 = vmatmul.mubr.f32.gmra.mxu0 %v367
        %v1809 = vpop.f32.mrf.mxu0
        %v1810 = vadd.f32 %v1649, %v1809
        %v1811 = vpop.f32.mrf.mxu0
        %v1812 = vadd.f32 %v1651, %v1811
        %1813 = vmatprep.mubr.f32.mxu0 %v375
        %1814 = vmatmul.mubr.f32.gmra.mxu0 %v374
        %v1815 = vpop.f32.mrf.mxu0
        %v1816 = vadd.f32 %v1655, %v1815
        %v1817 = vpop.f32.mrf.mxu0
        %v1818 = vadd.f32 %v1657, %v1817
        %1819 = vmatprep.mubr.f32.mxu0 %v382
        %1820 = vmatmul.mubr.f32.gmra.mxu0 %v381
        %v1821 = vpop.f32.mrf.mxu0
        %v1822 = vadd.f32 %v1661, %v1821
        %v1823 = vpop.f32.mrf.mxu0
        %v1824 = vadd.f32 %v1663, %v1823
        %1825 = vmatprep.mubr.f32.mxu0 %v389
        %1826 = vmatmul.mubr.f32.gmra.mxu0 %v388
        %v1827 = vpop.f32.mrf.mxu0
        %v1828 = vadd.f32 %v1667, %v1827
        %v1829 = vpop.f32.mrf.mxu0
        %v1830 = vadd.f32 %v1669, %v1829
        %1831 = vmatprep.mubr.f32.mxu0 %v396
        %1832 = vmatmul.mubr.f32.gmra.mxu0 %v395
        %v1833 = vpop.f32.mrf.mxu0
        %v1834 = vadd.f32 %v1673, %v1833
        %v1835 = vpop.f32.mrf.mxu0
        %v1836 = vadd.f32 %v1675, %v1835
        %1837 = vmatprep.mubr.f32.mxu0 %v403
        %1838 = vmatmul.mubr.f32.gmra.mxu0 %v402
        %v1839 = vpop.f32.mrf.mxu0
        %v1840 = vadd.f32 %v1679, %v1839
        %v1841 = vpop.f32.mrf.mxu0
        %v1842 = vadd.f32 %v1681, %v1841
        %1843 = vmatprep.mubr.f32.mxu0 %v410
        %1844 = vmatmul.mubr.f32.gmra.mxu0 %v409
        %v1845 = vpop.f32.mrf.mxu0
        %v1846 = vadd.f32 %v1685, %v1845
        %v1847 = vpop.f32.mrf.mxu0
        %v1848 = vadd.f32 %v1687, %v1847
        %1849 = vdwg.mxu0
        %1850 = vmatprep.subr.mxu0 %v733
        %1851 = vmatpush1.msra.mxu0 %v732
        %1852 = vmatprep.subr.mxu0 %v729
        %1853 = vmatpush1.msra.mxu0 %v728
        %1854 = vmatprep.subr.mxu0 %v725
        %1855 = vmatpush1.msra.mxu0 %v724
        %1856 = vmatprep.subr.mxu0 %v721
        %1857 = vmatpush1.msra.mxu0 %v720
        %1858 = vmatprep.subr.mxu0 %v717
        %1859 = vmatpush1.msra.mxu0 %v716
        %1860 = vmatprep.subr.mxu0 %v713
        %1861 = vmatpush1.msra.mxu0 %v712
        %1862 = vmatprep.subr.mxu0 %v709
        %1863 = vmatpush1.msra.mxu0 %v708
        %1864 = vmatprep.subr.mxu0 %v705
        %1865 = vmatpush1.msra.mxu0 %v704
        %1866 = vmatprep.subr.mxu0 %v701
        %1867 = vmatpush1.msra.mxu0 %v700
        %1868 = vmatprep.subr.mxu0 %v697
        %1869 = vmatpush1.msra.mxu0 %v696
        %1870 = vmatprep.subr.mxu0 %v693
        %1871 = vmatpush1.msra.mxu0 %v692
        %1872 = vmatprep.subr.mxu0 %v689
        %1873 = vmatpush1.msra.mxu0 %v688
        %1874 = vmatprep.subr.mxu0 %v685
        %1875 = vmatpush1.msra.mxu0 %v684
        %1876 = vmatprep.subr.mxu0 %v681
        %1877 = vmatpush1.msra.mxu0 %v680
        %1878 = vmatprep.subr.mxu0 %v677
        %1879 = vmatpush1.msra.mxu0 %v676
        %1880 = vmatprep.subr.mxu0 %v673
        %1881 = vmatpush1.msra.mxu0 %v672
        %1882 = vmatprep.subr.mxu0 %v797
        %1883 = vmatpush2.msra.mxu0 %v796
        %1884 = vmatprep.subr.mxu0 %v793
        %1885 = vmatpush2.msra.mxu0 %v792
        %1886 = vmatprep.subr.mxu0 %v789
        %1887 = vmatpush2.msra.mxu0 %v788
        %1888 = vmatprep.subr.mxu0 %v785
        %1889 = vmatpush2.msra.mxu0 %v784
        %1890 = vmatprep.subr.mxu0 %v781
        %1891 = vmatpush2.msra.mxu0 %v780
        %1892 = vmatprep.subr.mxu0 %v777
        %1893 = vmatpush2.msra.mxu0 %v776
        %1894 = vmatprep.subr.mxu0 %v773
        %1895 = vmatpush2.msra.mxu0 %v772
        %1896 = vmatprep.subr.mxu0 %v769
        %1897 = vmatpush2.msra.mxu0 %v768
        %1898 = vmatprep.subr.mxu0 %v765
        %1899 = vmatpush2.msra.mxu0 %v764
        %1900 = vmatprep.subr.mxu0 %v761
        %1901 = vmatpush2.msra.mxu0 %v760
        %1902 = vmatprep.subr.mxu0 %v757
        %1903 = vmatpush2.msra.mxu0 %v756
        %1904 = vmatprep.subr.mxu0 %v753
        %1905 = vmatpush2.msra.mxu0 %v752
        %1906 = vmatprep.subr.mxu0 %v749
        %1907 = vmatpush2.msra.mxu0 %v748
        %1908 = vmatprep.subr.mxu0 %v745
        %1909 = vmatpush2.msra.mxu0 %v744
        %1910 = vmatprep.subr.mxu0 %v741
        %1911 = vmatpush2.msra.mxu0 %v740
        %1912 = vmatprep.subr.mxu0 %v737
        %1913 = vmatpush2.msra.mxu0 %v736
        %1914 = vmatprep.mubr.f32.mxu0 %v307
        %1915 = vmatmul.mubr.f32.gmra.mxu0 %v306
        %v1916 = vpop.f32.mrf.mxu0
        %v1917 = vadd.f32 %v1756, %v1916
        %v1918 = vpop.f32.mrf.mxu0
        %v1919 = vadd.f32 %v1758, %v1918
        %1920 = vmatprep.mubr.f32.mxu0 %v314
        %1921 = vmatmul.mubr.f32.gmra.mxu0 %v313
        %v1922 = vpop.f32.mrf.mxu0
        %v1923 = vadd.f32 %v1762, %v1922
        %v1924 = vpop.f32.mrf.mxu0
        %v1925 = vadd.f32 %v1764, %v1924
        %1926 = vmatprep.mubr.f32.mxu0 %v321
        %1927 = vmatmul.mubr.f32.gmra.mxu0 %v320
        %v1928 = vpop.f32.mrf.mxu0
        %v1929 = vadd.f32 %v1768, %v1928
        %v1930 = vpop.f32.mrf.mxu0
        %v1931 = vadd.f32 %v1770, %v1930
        %1932 = vmatprep.mubr.f32.mxu0 %v328
        %1933 = vmatmul.mubr.f32.gmra.mxu0 %v327
        %v1934 = vpop.f32.mrf.mxu0
        %v1935 = vadd.f32 %v1774, %v1934
        %v1936 = vpop.f32.mrf.mxu0
        %v1937 = vadd.f32 %v1776, %v1936
        %1938 = vmatprep.mubr.f32.mxu0 %v335
        %1939 = vmatmul.mubr.f32.gmra.mxu0 %v334
        %v1940 = vpop.f32.mrf.mxu0
        %v1941 = vadd.f32 %v1780, %v1940
        %v1942 = vpop.f32.mrf.mxu0
        %v1943 = vadd.f32 %v1782, %v1942
        %1944 = vmatprep.mubr.f32.mxu0 %v342
        %1945 = vmatmul.mubr.f32.gmra.mxu0 %v341
        %v1946 = vpop.f32.mrf.mxu0
        %v1947 = vadd.f32 %v1786, %v1946
        %v1948 = vpop.f32.mrf.mxu0
        %v1949 = vadd.f32 %v1788, %v1948
        %1950 = vmatprep.mubr.f32.mxu0 %v349
        %1951 = vmatmul.mubr.f32.gmra.mxu0 %v348
        %v1952 = vpop.f32.mrf.mxu0
        %v1953 = vadd.f32 %v1792, %v1952
        %v1954 = vpop.f32.mrf.mxu0
        %v1955 = vadd.f32 %v1794, %v1954
        %1956 = vmatprep.mubr.f32.mxu0 %v356
        %1957 = vmatmul.mubr.f32.gmra.mxu0 %v355
        %v1958 = vpop.f32.mrf.mxu0
        %v1959 = vadd.f32 %v1798, %v1958
        %v1960 = vpop.f32.mrf.mxu0
        %v1961 = vadd.f32 %v1800, %v1960
        %1962 = vmatprep.mubr.f32.mxu0 %v363
        %1963 = vmatmul.mubr.f32.gmra.mxu0 %v362
        %v1964 = vpop.f32.mrf.mxu0
        %v1965 = vadd.f32 %v1804, %v1964
        %v1966 = vpop.f32.mrf.mxu0
        %v1967 = vadd.f32 %v1806, %v1966
        %1968 = vmatprep.mubr.f32.mxu0 %v370
        %1969 = vmatmul.mubr.f32.gmra.mxu0 %v369
        %v1970 = vpop.f32.mrf.mxu0
        %v1971 = vadd.f32 %v1810, %v1970
        %v1972 = vpop.f32.mrf.mxu0
        %v1973 = vadd.f32 %v1812, %v1972
        %1974 = vmatprep.mubr.f32.mxu0 %v377
        %1975 = vmatmul.mubr.f32.gmra.mxu0 %v376
        %v1976 = vpop.f32.mrf.mxu0
        %v1977 = vadd.f32 %v1816, %v1976
        %v1978 = vpop.f32.mrf.mxu0
        %v1979 = vadd.f32 %v1818, %v1978
        %1980 = vmatprep.mubr.f32.mxu0 %v384
        %1981 = vmatmul.mubr.f32.gmra.mxu0 %v383
        %v1982 = vpop.f32.mrf.mxu0
        %v1983 = vadd.f32 %v1822, %v1982
        %v1984 = vpop.f32.mrf.mxu0
        %v1985 = vadd.f32 %v1824, %v1984
        %1986 = vmatprep.mubr.f32.mxu0 %v391
        %1987 = vmatmul.mubr.f32.gmra.mxu0 %v390
        %v1988 = vpop.f32.mrf.mxu0
        %v1989 = vadd.f32 %v1828, %v1988
        %v1990 = vpop.f32.mrf.mxu0
        %v1991 = vadd.f32 %v1830, %v1990
        %1992 = vmatprep.mubr.f32.mxu0 %v398
        %1993 = vmatmul.mubr.f32.gmra.mxu0 %v397
        %v1994 = vpop.f32.mrf.mxu0
        %v1995 = vadd.f32 %v1834, %v1994
        %v1996 = vpop.f32.mrf.mxu0
        %v1997 = vadd.f32 %v1836, %v1996
        %1998 = vmatprep.mubr.f32.mxu0 %v405
        %1999 = vmatmul.mubr.f32.gmra.mxu0 %v404
        %v2000 = vpop.f32.mrf.mxu0
        %v2001 = vadd.f32 %v1840, %v2000
        %v2002 = vpop.f32.mrf.mxu0
        %v2003 = vadd.f32 %v1842, %v2002
        %2004 = vmatprep.mubr.f32.mxu0 %v412
        %2005 = vmatmul.mubr.f32.gmra.mxu0 %v411
        %v2006 = vpop.f32.mrf.mxu0
        %v2007 = vadd.f32 %v1846, %v2006
        %v2008 = vpop.f32.mrf.mxu0
        %v2009 = vadd.f32 %v1848, %v2008
        %2010 = vdwg.mxu0
        %2011 = vmatprep.subr.mxu0 %v861
        %2012 = vmatpush1.msra.mxu0 %v860
        %2013 = vmatprep.subr.mxu0 %v857
        %2014 = vmatpush1.msra.mxu0 %v856
        %2015 = vmatprep.subr.mxu0 %v853
        %2016 = vmatpush1.msra.mxu0 %v852
        %2017 = vmatprep.subr.mxu0 %v849
        %2018 = vmatpush1.msra.mxu0 %v848
        %2019 = vmatprep.subr.mxu0 %v845
        %2020 = vmatpush1.msra.mxu0 %v844
        %2021 = vmatprep.subr.mxu0 %v841
        %2022 = vmatpush1.msra.mxu0 %v840
        %2023 = vmatprep.subr.mxu0 %v837
        %2024 = vmatpush1.msra.mxu0 %v836
        %2025 = vmatprep.subr.mxu0 %v833
        %2026 = vmatpush1.msra.mxu0 %v832
        %2027 = vmatprep.subr.mxu0 %v829
        %2028 = vmatpush1.msra.mxu0 %v828
        %2029 = vmatprep.subr.mxu0 %v825
        %2030 = vmatpush1.msra.mxu0 %v824
        %2031 = vmatprep.subr.mxu0 %v821
        %2032 = vmatpush1.msra.mxu0 %v820
        %2033 = vmatprep.subr.mxu0 %v817
        %2034 = vmatpush1.msra.mxu0 %v816
        %2035 = vmatprep.subr.mxu0 %v813
        %2036 = vmatpush1.msra.mxu0 %v812
        %2037 = vmatprep.subr.mxu0 %v809
        %2038 = vmatpush1.msra.mxu0 %v808
        %2039 = vmatprep.subr.mxu0 %v805
        %2040 = vmatpush1.msra.mxu0 %v804
        %2041 = vmatprep.subr.mxu0 %v801
        %2042 = vmatpush1.msra.mxu0 %v800
        %2043 = vmatprep.subr.mxu0 0.0
        %2044 = vmatpush2.msra.mxu0 0.0
        %2045 = vmatprep.subr.mxu0 0.0
        %2046 = vmatpush2.msra.mxu0 0.0
        %2047 = vmatprep.subr.mxu0 0.0
        %2048 = vmatpush2.msra.mxu0 0.0
        %2049 = vmatprep.subr.mxu0 0.0
        %2050 = vmatpush2.msra.mxu0 0.0
        %2051 = vmatprep.subr.mxu0 0.0
        %2052 = vmatpush2.msra.mxu0 0.0
        %2053 = vmatprep.subr.mxu0 0.0
        %2054 = vmatpush2.msra.mxu0 0.0
        %2055 = vmatprep.subr.mxu0 0.0
        %2056 = vmatpush2.msra.mxu0 0.0
        %2057 = vmatprep.subr.mxu0 0.0
        %2058 = vmatpush2.msra.mxu0 0.0
        %2059 = vmatprep.subr.mxu0 0.0
        %2060 = vmatpush2.msra.mxu0 0.0
        %2061 = vmatprep.subr.mxu0 0.0
        %2062 = vmatpush2.msra.mxu0 0.0
        %2063 = vmatprep.subr.mxu0 0.0
        %2064 = vmatpush2.msra.mxu0 0.0
        %2065 = vmatprep.subr.mxu0 0.0
        %2066 = vmatpush2.msra.mxu0 0.0
        %2067 = vmatprep.subr.mxu0 0.0
        %2068 = vmatpush2.msra.mxu0 0.0
        %2069 = vmatprep.subr.mxu0 0.0
        %2070 = vmatpush2.msra.mxu0 0.0
        %2071 = vmatprep.subr.mxu0 0.0
        %2072 = vmatpush2.msra.mxu0 0.0
        %2073 = vmatprep.subr.mxu0 0.0
        %2074 = vmatpush2.msra.mxu0 0.0
        %2075 = vmatprep.mubr.f32.mxu0 0.0
        %2076 = vmatmul.mubr.f32.gmra.mxu0 %v308
        %v2077 = vpop.f32.mrf.mxu0
        %v2078 = vadd.f32 %v1917, %v2077
        %v2079 = vpop.f32.mrf.mxu0
        %v2080 = vadd.f32 %v1919, %v2079
        %2081 = vmatprep.mubr.f32.mxu0 0.0
        %2082 = vmatmul.mubr.f32.gmra.mxu0 %v315
        %v2083 = vpop.f32.mrf.mxu0
        %v2084 = vadd.f32 %v1923, %v2083
        %v2085 = vpop.f32.mrf.mxu0
        %v2086 = vadd.f32 %v1925, %v2085
        %2087 = vmatprep.mubr.f32.mxu0 0.0
        %2088 = vmatmul.mubr.f32.gmra.mxu0 %v322
        %v2089 = vpop.f32.mrf.mxu0
        %v2090 = vadd.f32 %v1929, %v2089
        %v2091 = vpop.f32.mrf.mxu0
        %v2092 = vadd.f32 %v1931, %v2091
        %2093 = vmatprep.mubr.f32.mxu0 0.0
        %2094 = vmatmul.mubr.f32.gmra.mxu0 %v329
        %v2095 = vpop.f32.mrf.mxu0
        %v2096 = vadd.f32 %v1935, %v2095
        %v2097 = vpop.f32.mrf.mxu0
        %v2098 = vadd.f32 %v1937, %v2097
        %2099 = vmatprep.mubr.f32.mxu0 0.0
        %2100 = vmatmul.mubr.f32.gmra.mxu0 %v336
        %v2101 = vpop.f32.mrf.mxu0
        %v2102 = vadd.f32 %v1941, %v2101
        %v2103 = vpop.f32.mrf.mxu0
        %v2104 = vadd.f32 %v1943, %v2103
        %2105 = vmatprep.mubr.f32.mxu0 0.0
        %2106 = vmatmul.mubr.f32.gmra.mxu0 %v343
        %v2107 = vpop.f32.mrf.mxu0
        %v2108 = vadd.f32 %v1947, %v2107
        %v2109 = vpop.f32.mrf.mxu0
        %v2110 = vadd.f32 %v1949, %v2109
        %2111 = vmatprep.mubr.f32.mxu0 0.0
        %2112 = vmatmul.mubr.f32.gmra.mxu0 %v350
        %v2113 = vpop.f32.mrf.mxu0
        %v2114 = vadd.f32 %v1953, %v2113
        %v2115 = vpop.f32.mrf.mxu0
        %v2116 = vadd.f32 %v1955, %v2115
        %2117 = vmatprep.mubr.f32.mxu0 0.0
        %2118 = vmatmul.mubr.f32.gmra.mxu0 %v357
        %v2119 = vpop.f32.mrf.mxu0
        %v2120 = vadd.f32 %v1959, %v2119
        %v2121 = vpop.f32.mrf.mxu0
        %v2122 = vadd.f32 %v1961, %v2121
        %2123 = vmatprep.mubr.f32.mxu0 0.0
        %2124 = vmatmul.mubr.f32.gmra.mxu0 %v364
        %v2125 = vpop.f32.mrf.mxu0
        %v2126 = vadd.f32 %v1965, %v2125
        %v2127 = vpop.f32.mrf.mxu0
        %v2128 = vadd.f32 %v1967, %v2127
        %2129 = vmatprep.mubr.f32.mxu0 0.0
        %2130 = vmatmul.mubr.f32.gmra.mxu0 %v371
        %v2131 = vpop.f32.mrf.mxu0
        %v2132 = vadd.f32 %v1971, %v2131
        %v2133 = vpop.f32.mrf.mxu0
        %v2134 = vadd.f32 %v1973, %v2133
        %2135 = vmatprep.mubr.f32.mxu0 0.0
        %2136 = vmatmul.mubr.f32.gmra.mxu0 %v378
        %v2137 = vpop.f32.mrf.mxu0
        %v2138 = vadd.f32 %v1977, %v2137
        %v2139 = vpop.f32.mrf.mxu0
        %v2140 = vadd.f32 %v1979, %v2139
        %2141 = vmatprep.mubr.f32.mxu0 0.0
        %2142 = vmatmul.mubr.f32.gmra.mxu0 %v385
        %v2143 = vpop.f32.mrf.mxu0
        %v2144 = vadd.f32 %v1983, %v2143
        %v2145 = vpop.f32.mrf.mxu0
        %v2146 = vadd.f32 %v1985, %v2145
        %2147 = vmatprep.mubr.f32.mxu0 0.0
        %2148 = vmatmul.mubr.f32.gmra.mxu0 %v392
        %v2149 = vpop.f32.mrf.mxu0
        %v2150 = vadd.f32 %v1989, %v2149
        %v2151 = vpop.f32.mrf.mxu0
        %v2152 = vadd.f32 %v1991, %v2151
        %2153 = vmatprep.mubr.f32.mxu0 0.0
        %2154 = vmatmul.mubr.f32.gmra.mxu0 %v399
        %v2155 = vpop.f32.mrf.mxu0
        %v2156 = vadd.f32 %v1995, %v2155
        %v2157 = vpop.f32.mrf.mxu0
        %v2158 = vadd.f32 %v1997, %v2157
        %2159 = vmatprep.mubr.f32.mxu0 0.0
        %2160 = vmatmul.mubr.f32.gmra.mxu0 %v406
        %v2161 = vpop.f32.mrf.mxu0
        %v2162 = vadd.f32 %v2001, %v2161
        %v2163 = vpop.f32.mrf.mxu0
        %v2164 = vadd.f32 %v2003, %v2163
        %2165 = vmatprep.mubr.f32.mxu0 0.0
        %2166 = vmatmul.mubr.f32.gmra.mxu0 %v413
        %v2167 = vpop.f32.mrf.mxu0
        %v2168 = vadd.f32 %v2007, %v2167
        %v2169 = vpop.f32.mrf.mxu0
        %v2170 = vadd.f32 %v2009, %v2169
        %2171 = vdwg.mxu0
        %v2172 = vmax.f32 %v1434, 0.0
        %v2173 = vmax.f32 %v1436, 0.0
        %v2174 = vmax.f32 %v2078, 0.0
        %v2175 = vmax.f32 %v2080, 0.0
        %v2176 = vmax.f32 %v1440, 0.0
        %v2177 = vmax.f32 %v1442, 0.0
        %v2178 = vmax.f32 %v2084, 0.0
        %v2179 = vmax.f32 %v2086, 0.0
        %v2180 = vmax.f32 %v1446, 0.0
        %v2181 = vmax.f32 %v1448, 0.0
        %v2182 = vmax.f32 %v2090, 0.0
        %v2183 = vmax.f32 %v2092, 0.0
        %v2184 = vmax.f32 %v1452, 0.0
        %v2185 = vmax.f32 %v1454, 0.0
        %v2186 = vmax.f32 %v2096, 0.0
        %v2187 = vmax.f32 %v2098, 0.0
        %v2188 = vmax.f32 %v1458, 0.0
        %v2189 = vmax.f32 %v1460, 0.0
        %v2190 = vmax.f32 %v2102, 0.0
        %v2191 = vmax.f32 %v2104, 0.0
        %v2192 = vmax.f32 %v1464, 0.0
        %v2193 = vmax.f32 %v1466, 0.0
        %v2194 = vmax.f32 %v2108, 0.0
        %v2195 = vmax.f32 %v2110, 0.0
        %v2196 = vmax.f32 %v1470, 0.0
        %v2197 = vmax.f32 %v1472, 0.0
        %v2198 = vmax.f32 %v2114, 0.0
        %v2199 = vmax.f32 %v2116, 0.0
        %v2200 = vmax.f32 %v1476, 0.0
        %v2201 = vmax.f32 %v1478, 0.0
        %v2202 = vmax.f32 %v2120, 0.0
        %v2203 = vmax.f32 %v2122, 0.0
        %v2204 = vmax.f32 %v1482, 0.0
        %v2205 = vmax.f32 %v1484, 0.0
        %v2206 = vmax.f32 %v2126, 0.0
        %v2207 = vmax.f32 %v2128, 0.0
        %v2208 = vmax.f32 %v1488, 0.0
        %v2209 = vmax.f32 %v1490, 0.0
        %v2210 = vmax.f32 %v2132, 0.0
        %v2211 = vmax.f32 %v2134, 0.0
        %v2212 = vmax.f32 %v1494, 0.0
        %v2213 = vmax.f32 %v1496, 0.0
        %v2214 = vmax.f32 %v2138, 0.0
        %v2215 = vmax.f32 %v2140, 0.0
        %v2216 = vmax.f32 %v1500, 0.0
        %v2217 = vmax.f32 %v1502, 0.0
        %v2218 = vmax.f32 %v2144, 0.0
        %v2219 = vmax.f32 %v2146, 0.0
        %v2220 = vmax.f32 %v1506, 0.0
        %v2221 = vmax.f32 %v1508, 0.0
        %v2222 = vmax.f32 %v2150, 0.0
        %v2223 = vmax.f32 %v2152, 0.0
        %v2224 = vmax.f32 %v1512, 0.0
        %v2225 = vmax.f32 %v1514, 0.0
        %v2226 = vmax.f32 %v2156, 0.0
        %v2227 = vmax.f32 %v2158, 0.0
        %v2228 = vmax.f32 %v1518, 0.0
        %v2229 = vmax.f32 %v1520, 0.0
        %v2230 = vmax.f32 %v2162, 0.0
        %v2231 = vmax.f32 %v2164, 0.0
        %v2232 = vmax.f32 %v1524, 0.0
        %v2233 = vmax.f32 %v1526, 0.0
        %v2234 = vmax.f32 %v2168, 0.0
        %v2235 = vmax.f32 %v2170, 0.0
        %v2236 = vlaneseq
        %v2237 = vshrl.u32 %v2236, 7
        %v2238 = vadd.s32 %v2237, 8
        %v2239 = vadd.s32 %v2237, 16
        %v2240 = vadd.s32 %v2237, 24
        %v2241 = vadd.s32 %v2237, 32
        %v2242 = vadd.s32 %v2237, 40
        %v2243 = vadd.s32 %v2237, 48
        %v2244 = vadd.s32 %v2237, 56
        %v2245 = vadd.s32 %v2237, 64
        %v2246 = vadd.s32 %v2237, 72
        %v2247 = vadd.s32 %v2237, 80
        %v2248 = vadd.s32 %v2237, 88
        %v2249 = vadd.s32 %v2237, 96
        %v2250 = vadd.s32 %v2237, 104
        %v2251 = vadd.s32 %v2237, 112
        %v2252 = vadd.s32 %v2237, 120
        %s2253 = smul.u32 %s26, 128
        %v2254 = vstv %s2253
        %v2255 = vadd.s32 %v2237, %v2254
        %v2256 = vadd.s32 %v2238, %v2254
        %v2257 = vadd.s32 %v2239, %v2254
        %v2258 = vadd.s32 %v2240, %v2254
        %v2259 = vadd.s32 %v2241, %v2254
        %v2260 = vadd.s32 %v2242, %v2254
        %v2261 = vadd.s32 %v2243, %v2254
        %v2262 = vadd.s32 %v2244, %v2254
        %v2263 = vadd.s32 %v2245, %v2254
        %v2264 = vadd.s32 %v2246, %v2254
        %v2265 = vadd.s32 %v2247, %v2254
        %v2266 = vadd.s32 %v2248, %v2254
        %v2267 = vadd.s32 %v2249, %v2254
        %v2268 = vadd.s32 %v2250, %v2254
        %v2269 = vadd.s32 %v2251, %v2254
        %v2270 = vadd.s32 %v2252, %v2254
        %v2271 = vlaneseq
        %v2272 = vand.u32 %v2271, 127
        %v2273 = vadd.s32 %v2272, 128
        %v2274 = vadd.s32 %v2272, 256
        %v2275 = vadd.s32 %v2272, 384
        %v2276 = vmul.u32 %v2255, 512
        %v2277 = vmul.u32 %v2256, 512
        %v2278 = vmul.u32 %v2257, 512
        %v2279 = vmul.u32 %v2258, 512
        %v2280 = vmul.u32 %v2259, 512
        %v2281 = vmul.u32 %v2260, 512
        %v2282 = vmul.u32 %v2261, 512
        %v2283 = vmul.u32 %v2262, 512
        %v2284 = vmul.u32 %v2263, 512
        %v2285 = vmul.u32 %v2264, 512
        %v2286 = vmul.u32 %v2265, 512
        %v2287 = vmul.u32 %v2266, 512
        %v2288 = vmul.u32 %v2267, 512
        %v2289 = vmul.u32 %v2268, 512
        %v2290 = vmul.u32 %v2269, 512
        %v2291 = vmul.u32 %v2270, 512
        %v2292 = vadd.s32 %v2276, %v2272
        %v2293 = vadd.s32 %v2276, %v2273
        %v2294 = vadd.s32 %v2276, %v2274
        %v2295 = vadd.s32 %v2276, %v2275
        %v2296 = vadd.s32 %v2277, %v2272
        %v2297 = vadd.s32 %v2277, %v2273
        %v2298 = vadd.s32 %v2277, %v2274
        %v2299 = vadd.s32 %v2277, %v2275
        %v2300 = vadd.s32 %v2278, %v2272
        %v2301 = vadd.s32 %v2278, %v2273
        %v2302 = vadd.s32 %v2278, %v2274
        %v2303 = vadd.s32 %v2278, %v2275
        %v2304 = vadd.s32 %v2279, %v2272
        %v2305 = vadd.s32 %v2279, %v2273
        %v2306 = vadd.s32 %v2279, %v2274
        %v2307 = vadd.s32 %v2279, %v2275
        %v2308 = vadd.s32 %v2280, %v2272
        %v2309 = vadd.s32 %v2280, %v2273
        %v2310 = vadd.s32 %v2280, %v2274
        %v2311 = vadd.s32 %v2280, %v2275
        %v2312 = vadd.s32 %v2281, %v2272
        %v2313 = vadd.s32 %v2281, %v2273
        %v2314 = vadd.s32 %v2281, %v2274
        %v2315 = vadd.s32 %v2281, %v2275
        %v2316 = vadd.s32 %v2282, %v2272
        %v2317 = vadd.s32 %v2282, %v2273
        %v2318 = vadd.s32 %v2282, %v2274
        %v2319 = vadd.s32 %v2282, %v2275
        %v2320 = vadd.s32 %v2283, %v2272
        %v2321 = vadd.s32 %v2283, %v2273
        %v2322 = vadd.s32 %v2283, %v2274
        %v2323 = vadd.s32 %v2283, %v2275
        %v2324 = vadd.s32 %v2284, %v2272
        %v2325 = vadd.s32 %v2284, %v2273
        %v2326 = vadd.s32 %v2284, %v2274
        %v2327 = vadd.s32 %v2284, %v2275
        %v2328 = vadd.s32 %v2285, %v2272
        %v2329 = vadd.s32 %v2285, %v2273
        %v2330 = vadd.s32 %v2285, %v2274
        %v2331 = vadd.s32 %v2285, %v2275
        %v2332 = vadd.s32 %v2286, %v2272
        %v2333 = vadd.s32 %v2286, %v2273
        %v2334 = vadd.s32 %v2286, %v2274
        %v2335 = vadd.s32 %v2286, %v2275
        %v2336 = vadd.s32 %v2287, %v2272
        %v2337 = vadd.s32 %v2287, %v2273
        %v2338 = vadd.s32 %v2287, %v2274
        %v2339 = vadd.s32 %v2287, %v2275
        %v2340 = vadd.s32 %v2288, %v2272
        %v2341 = vadd.s32 %v2288, %v2273
        %v2342 = vadd.s32 %v2288, %v2274
        %v2343 = vadd.s32 %v2288, %v2275
        %v2344 = vadd.s32 %v2289, %v2272
        %v2345 = vadd.s32 %v2289, %v2273
        %v2346 = vadd.s32 %v2289, %v2274
        %v2347 = vadd.s32 %v2289, %v2275
        %v2348 = vadd.s32 %v2290, %v2272
        %v2349 = vadd.s32 %v2290, %v2273
        %v2350 = vadd.s32 %v2290, %v2274
        %v2351 = vadd.s32 %v2290, %v2275
        %v2352 = vadd.s32 %v2291, %v2272
        %v2353 = vadd.s32 %v2291, %v2273
        %v2354 = vadd.s32 %v2291, %v2274
        %v2355 = vadd.s32 %v2291, %v2275
        %s2356 = sld [smem:[#allocation3]]
        %s2357 = smul.u32 %s2356, 2654435769
        %v2358 = vstv %s2357
        %v2359 = vxor.u32 %v2292, %v2358
        %v2360 = vxor.u32 %v2293, %v2358
        %v2361 = vxor.u32 %v2294, %v2358
        %v2362 = vxor.u32 %v2295, %v2358
        %v2363 = vxor.u32 %v2296, %v2358
        %v2364 = vxor.u32 %v2297, %v2358
        %v2365 = vxor.u32 %v2298, %v2358
        %v2366 = vxor.u32 %v2299, %v2358
        %v2367 = vxor.u32 %v2300, %v2358
        %v2368 = vxor.u32 %v2301, %v2358
        %v2369 = vxor.u32 %v2302, %v2358
        %v2370 = vxor.u32 %v2303, %v2358
        %v2371 = vxor.u32 %v2304, %v2358
        %v2372 = vxor.u32 %v2305, %v2358
        %v2373 = vxor.u32 %v2306, %v2358
        %v2374 = vxor.u32 %v2307, %v2358
        %v2375 = vxor.u32 %v2308, %v2358
        %v2376 = vxor.u32 %v2309, %v2358
        %v2377 = vxor.u32 %v2310, %v2358
        %v2378 = vxor.u32 %v2311, %v2358
        %v2379 = vxor.u32 %v2312, %v2358
        %v2380 = vxor.u32 %v2313, %v2358
        %v2381 = vxor.u32 %v2314, %v2358
        %v2382 = vxor.u32 %v2315, %v2358
        %v2383 = vxor.u32 %v2316, %v2358
        %v2384 = vxor.u32 %v2317, %v2358
        %v2385 = vxor.u32 %v2318, %v2358
        %v2386 = vxor.u32 %v2319, %v2358
        %v2387 = vxor.u32 %v2320, %v2358
        %v2388 = vxor.u32 %v2321, %v2358
        %v2389 = vxor.u32 %v2322, %v2358
        %v2390 = vxor.u32 %v2323, %v2358
        %v2391 = vxor.u32 %v2324, %v2358
        %v2392 = vxor.u32 %v2325, %v2358
        %v2393 = vxor.u32 %v2326, %v2358
        %v2394 = vxor.u32 %v2327, %v2358
        %v2395 = vxor.u32 %v2328, %v2358
        %v2396 = vxor.u32 %v2329, %v2358
        %v2397 = vxor.u32 %v2330, %v2358
        %v2398 = vxor.u32 %v2331, %v2358
        %v2399 = vxor.u32 %v2332, %v2358
        %v2400 = vxor.u32 %v2333, %v2358
        %v2401 = vxor.u32 %v2334, %v2358
        %v2402 = vxor.u32 %v2335, %v2358
        %v2403 = vxor.u32 %v2336, %v2358
        %v2404 = vxor.u32 %v2337, %v2358
        %v2405 = vxor.u32 %v2338, %v2358
        %v2406 = vxor.u32 %v2339, %v2358
        %v2407 = vxor.u32 %v2340, %v2358
        %v2408 = vxor.u32 %v2341, %v2358
        %v2409 = vxor.u32 %v2342, %v2358
        %v2410 = vxor.u32 %v2343, %v2358
        %v2411 = vxor.u32 %v2344, %v2358
        %v2412 = vxor.u32 %v2345, %v2358
        %v2413 = vxor.u32 %v2346, %v2358
        %v2414 = vxor.u32 %v2347, %v2358
        %v2415 = vxor.u32 %v2348, %v2358
        %v2416 = vxor.u32 %v2349, %v2358
        %v2417 = vxor.u32 %v2350, %v2358
        %v2418 = vxor.u32 %v2351, %v2358
        %v2419 = vxor.u32 %v2352, %v2358
        %v2420 = vxor.u32 %v2353, %v2358
        %v2421 = vxor.u32 %v2354, %v2358
        %v2422 = vxor.u32 %v2355, %v2358
        %v2423 = vshrl.u32 %v2359, 16
        %v2424 = vshrl.u32 %v2360, 16
        %v2425 = vshrl.u32 %v2361, 16
        %v2426 = vshrl.u32 %v2362, 16
        %v2427 = vshrl.u32 %v2363, 16
        %v2428 = vshrl.u32 %v2364, 16
        %v2429 = vshrl.u32 %v2365, 16
        %v2430 = vshrl.u32 %v2366, 16
        %v2431 = vshrl.u32 %v2367, 16
        %v2432 = vshrl.u32 %v2368, 16
        %v2433 = vshrl.u32 %v2369, 16
        %v2434 = vshrl.u32 %v2370, 16
        %v2435 = vshrl.u32 %v2371, 16
        %v2436 = vshrl.u32 %v2372, 16
        %v2437 = vshrl.u32 %v2373, 16
        %v2438 = vshrl.u32 %v2374, 16
        %v2439 = vshrl.u32 %v2375, 16
        %v2440 = vshrl.u32 %v2376, 16
        %v2441 = vshrl.u32 %v2377, 16
        %v2442 = vshrl.u32 %v2378, 16
        %v2443 = vshrl.u32 %v2379, 16
        %v2444 = vshrl.u32 %v2380, 16
        %v2445 = vshrl.u32 %v2381, 16
        %v2446 = vshrl.u32 %v2382, 16
        %v2447 = vshrl.u32 %v2383, 16
        %v2448 = vshrl.u32 %v2384, 16
        %v2449 = vshrl.u32 %v2385, 16
        %v2450 = vshrl.u32 %v2386, 16
        %v2451 = vshrl.u32 %v2387, 16
        %v2452 = vshrl.u32 %v2388, 16
        %v2453 = vshrl.u32 %v2389, 16
        %v2454 = vshrl.u32 %v2390, 16
        %v2455 = vshrl.u32 %v2391, 16
        %v2456 = vshrl.u32 %v2392, 16
        %v2457 = vshrl.u32 %v2393, 16
        %v2458 = vshrl.u32 %v2394, 16
        %v2459 = vshrl.u32 %v2395, 16
        %v2460 = vshrl.u32 %v2396, 16
        %v2461 = vshrl.u32 %v2397, 16
        %v2462 = vshrl.u32 %v2398, 16
        %v2463 = vshrl.u32 %v2399, 16
        %v2464 = vshrl.u32 %v2400, 16
        %v2465 = vshrl.u32 %v2401, 16
        %v2466 = vshrl.u32 %v2402, 16
        %v2467 = vshrl.u32 %v2403, 16
        %v2468 = vshrl.u32 %v2404, 16
        %v2469 = vshrl.u32 %v2405, 16
        %v2470 = vshrl.u32 %v2406, 16
        %v2471 = vshrl.u32 %v2407, 16
        %v2472 = vshrl.u32 %v2408, 16
        %v2473 = vshrl.u32 %v2409, 16
        %v2474 = vshrl.u32 %v2410, 16
        %v2475 = vshrl.u32 %v2411, 16
        %v2476 = vshrl.u32 %v2412, 16
        %v2477 = vshrl.u32 %v2413, 16
        %v2478 = vshrl.u32 %v2414, 16
        %v2479 = vshrl.u32 %v2415, 16
        %v2480 = vshrl.u32 %v2416, 16
        %v2481 = vshrl.u32 %v2417, 16
        %v2482 = vshrl.u32 %v2418, 16
        %v2483 = vshrl.u32 %v2419, 16
        %v2484 = vshrl.u32 %v2420, 16
        %v2485 = vshrl.u32 %v2421, 16
        %v2486 = vshrl.u32 %v2422, 16
        %v2487 = vxor.u32 %v2359, %v2423
        %v2488 = vxor.u32 %v2360, %v2424
        %v2489 = vxor.u32 %v2361, %v2425
        %v2490 = vxor.u32 %v2362, %v2426
        %v2491 = vxor.u32 %v2363, %v2427
        %v2492 = vxor.u32 %v2364, %v2428
        %v2493 = vxor.u32 %v2365, %v2429
        %v2494 = vxor.u32 %v2366, %v2430
        %v2495 = vxor.u32 %v2367, %v2431
        %v2496 = vxor.u32 %v2368, %v2432
        %v2497 = vxor.u32 %v2369, %v2433
        %v2498 = vxor.u32 %v2370, %v2434
        %v2499 = vxor.u32 %v2371, %v2435
        %v2500 = vxor.u32 %v2372, %v2436
        %v2501 = vxor.u32 %v2373, %v2437
        %v2502 = vxor.u32 %v2374, %v2438
        %v2503 = vxor.u32 %v2375, %v2439
        %v2504 = vxor.u32 %v2376, %v2440
        %v2505 = vxor.u32 %v2377, %v2441
        %v2506 = vxor.u32 %v2378, %v2442
        %v2507 = vxor.u32 %v2379, %v2443
        %v2508 = vxor.u32 %v2380, %v2444
        %v2509 = vxor.u32 %v2381, %v2445
        %v2510 = vxor.u32 %v2382, %v2446
        %v2511 = vxor.u32 %v2383, %v2447
        %v2512 = vxor.u32 %v2384, %v2448
        %v2513 = vxor.u32 %v2385, %v2449
        %v2514 = vxor.u32 %v2386, %v2450
        %v2515 = vxor.u32 %v2387, %v2451
        %v2516 = vxor.u32 %v2388, %v2452
        %v2517 = vxor.u32 %v2389, %v2453
        %v2518 = vxor.u32 %v2390, %v2454
        %v2519 = vxor.u32 %v2391, %v2455
        %v2520 = vxor.u32 %v2392, %v2456
        %v2521 = vxor.u32 %v2393, %v2457
        %v2522 = vxor.u32 %v2394, %v2458
        %v2523 = vxor.u32 %v2395, %v2459
        %v2524 = vxor.u32 %v2396, %v2460
        %v2525 = vxor.u32 %v2397, %v2461
        %v2526 = vxor.u32 %v2398, %v2462
        %v2527 = vxor.u32 %v2399, %v2463
        %v2528 = vxor.u32 %v2400, %v2464
        %v2529 = vxor.u32 %v2401, %v2465
        %v2530 = vxor.u32 %v2402, %v2466
        %v2531 = vxor.u32 %v2403, %v2467
        %v2532 = vxor.u32 %v2404, %v2468
        %v2533 = vxor.u32 %v2405, %v2469
        %v2534 = vxor.u32 %v2406, %v2470
        %v2535 = vxor.u32 %v2407, %v2471
        %v2536 = vxor.u32 %v2408, %v2472
        %v2537 = vxor.u32 %v2409, %v2473
        %v2538 = vxor.u32 %v2410, %v2474
        %v2539 = vxor.u32 %v2411, %v2475
        %v2540 = vxor.u32 %v2412, %v2476
        %v2541 = vxor.u32 %v2413, %v2477
        %v2542 = vxor.u32 %v2414, %v2478
        %v2543 = vxor.u32 %v2415, %v2479
        %v2544 = vxor.u32 %v2416, %v2480
        %v2545 = vxor.u32 %v2417, %v2481
        %v2546 = vxor.u32 %v2418, %v2482
        %v2547 = vxor.u32 %v2419, %v2483
        %v2548 = vxor.u32 %v2420, %v2484
        %v2549 = vxor.u32 %v2421, %v2485
        %v2550 = vxor.u32 %v2422, %v2486
        %v2551 = vmul.u32 %v2487, 2146121005
        %v2552 = vmul.u32 %v2488, 2146121005
        %v2553 = vmul.u32 %v2489, 2146121005
        %v2554 = vmul.u32 %v2490, 2146121005
        %v2555 = vmul.u32 %v2491, 2146121005
        %v2556 = vmul.u32 %v2492, 2146121005
        %v2557 = vmul.u32 %v2493, 2146121005
        %v2558 = vmul.u32 %v2494, 2146121005
        %v2559 = vmul.u32 %v2495, 2146121005
        %v2560 = vmul.u32 %v2496, 2146121005
        %v2561 = vmul.u32 %v2497, 2146121005
        %v2562 = vmul.u32 %v2498, 2146121005
        %v2563 = vmul.u32 %v2499, 2146121005
        %v2564 = vmul.u32 %v2500, 2146121005
        %v2565 = vmul.u32 %v2501, 2146121005
        %v2566 = vmul.u32 %v2502, 2146121005
        %v2567 = vmul.u32 %v2503, 2146121005
        %v2568 = vmul.u32 %v2504, 2146121005
        %v2569 = vmul.u32 %v2505, 2146121005
        %v2570 = vmul.u32 %v2506, 2146121005
        %v2571 = vmul.u32 %v2507, 2146121005
        %v2572 = vmul.u32 %v2508, 2146121005
        %v2573 = vmul.u32 %v2509, 2146121005
        %v2574 = vmul.u32 %v2510, 2146121005
        %v2575 = vmul.u32 %v2511, 2146121005
        %v2576 = vmul.u32 %v2512, 2146121005
        %v2577 = vmul.u32 %v2513, 2146121005
        %v2578 = vmul.u32 %v2514, 2146121005
        %v2579 = vmul.u32 %v2515, 2146121005
        %v2580 = vmul.u32 %v2516, 2146121005
        %v2581 = vmul.u32 %v2517, 2146121005
        %v2582 = vmul.u32 %v2518, 2146121005
        %v2583 = vmul.u32 %v2519, 2146121005
        %v2584 = vmul.u32 %v2520, 2146121005
        %v2585 = vmul.u32 %v2521, 2146121005
        %v2586 = vmul.u32 %v2522, 2146121005
        %v2587 = vmul.u32 %v2523, 2146121005
        %v2588 = vmul.u32 %v2524, 2146121005
        %v2589 = vmul.u32 %v2525, 2146121005
        %v2590 = vmul.u32 %v2526, 2146121005
        %v2591 = vmul.u32 %v2527, 2146121005
        %v2592 = vmul.u32 %v2528, 2146121005
        %v2593 = vmul.u32 %v2529, 2146121005
        %v2594 = vmul.u32 %v2530, 2146121005
        %v2595 = vmul.u32 %v2531, 2146121005
        %v2596 = vmul.u32 %v2532, 2146121005
        %v2597 = vmul.u32 %v2533, 2146121005
        %v2598 = vmul.u32 %v2534, 2146121005
        %v2599 = vmul.u32 %v2535, 2146121005
        %v2600 = vmul.u32 %v2536, 2146121005
        %v2601 = vmul.u32 %v2537, 2146121005
        %v2602 = vmul.u32 %v2538, 2146121005
        %v2603 = vmul.u32 %v2539, 2146121005
        %v2604 = vmul.u32 %v2540, 2146121005
        %v2605 = vmul.u32 %v2541, 2146121005
        %v2606 = vmul.u32 %v2542, 2146121005
        %v2607 = vmul.u32 %v2543, 2146121005
        %v2608 = vmul.u32 %v2544, 2146121005
        %v2609 = vmul.u32 %v2545, 2146121005
        %v2610 = vmul.u32 %v2546, 2146121005
        %v2611 = vmul.u32 %v2547, 2146121005
        %v2612 = vmul.u32 %v2548, 2146121005
        %v2613 = vmul.u32 %v2549, 2146121005
        %v2614 = vmul.u32 %v2550, 2146121005
        %v2615 = vshrl.u32 %v2551, 15
        %v2616 = vshrl.u32 %v2552, 15
        %v2617 = vshrl.u32 %v2553, 15
        %v2618 = vshrl.u32 %v2554, 15
        %v2619 = vshrl.u32 %v2555, 15
        %v2620 = vshrl.u32 %v2556, 15
        %v2621 = vshrl.u32 %v2557, 15
        %v2622 = vshrl.u32 %v2558, 15
        %v2623 = vshrl.u32 %v2559, 15
        %v2624 = vshrl.u32 %v2560, 15
        %v2625 = vshrl.u32 %v2561, 15
        %v2626 = vshrl.u32 %v2562, 15
        %v2627 = vshrl.u32 %v2563, 15
        %v2628 = vshrl.u32 %v2564, 15
        %v2629 = vshrl.u32 %v2565, 15
        %v2630 = vshrl.u32 %v2566, 15
        %v2631 = vshrl.u32 %v2567, 15
        %v2632 = vshrl.u32 %v2568, 15
        %v2633 = vshrl.u32 %v2569, 15
        %v2634 = vshrl.u32 %v2570, 15
        %v2635 = vshrl.u32 %v2571, 15
        %v2636 = vshrl.u32 %v2572, 15
        %v2637 = vshrl.u32 %v2573, 15
        %v2638 = vshrl.u32 %v2574, 15
        %v2639 = vshrl.u32 %v2575, 15
        %v2640 = vshrl.u32 %v2576, 15
        %v2641 = vshrl.u32 %v2577, 15
        %v2642 = vshrl.u32 %v2578, 15
        %v2643 = vshrl.u32 %v2579, 15
        %v2644 = vshrl.u32 %v2580, 15
        %v2645 = vshrl.u32 %v2581, 15
        %v2646 = vshrl.u32 %v2582, 15
        %v2647 = vshrl.u32 %v2583, 15
        %v2648 = vshrl.u32 %v2584, 15
        %v2649 = vshrl.u32 %v2585, 15
        %v2650 = vshrl.u32 %v2586, 15
        %v2651 = vshrl.u32 %v2587, 15
        %v2652 = vshrl.u32 %v2588, 15
        %v2653 = vshrl.u32 %v2589, 15
        %v2654 = vshrl.u32 %v2590, 15
        %v2655 = vshrl.u32 %v2591, 15
        %v2656 = vshrl.u32 %v2592, 15
        %v2657 = vshrl.u32 %v2593, 15
        %v2658 = vshrl.u32 %v2594, 15
        %v2659 = vshrl.u32 %v2595, 15
        %v2660 = vshrl.u32 %v2596, 15
        %v2661 = vshrl.u32 %v2597, 15
        %v2662 = vshrl.u32 %v2598, 15
        %v2663 = vshrl.u32 %v2599, 15
        %v2664 = vshrl.u32 %v2600, 15
        %v2665 = vshrl.u32 %v2601, 15
        %v2666 = vshrl.u32 %v2602, 15
        %v2667 = vshrl.u32 %v2603, 15
        %v2668 = vshrl.u32 %v2604, 15
        %v2669 = vshrl.u32 %v2605, 15
        %v2670 = vshrl.u32 %v2606, 15
        %v2671 = vshrl.u32 %v2607, 15
        %v2672 = vshrl.u32 %v2608, 15
        %v2673 = vshrl.u32 %v2609, 15
        %v2674 = vshrl.u32 %v2610, 15
        %v2675 = vshrl.u32 %v2611, 15
        %v2676 = vshrl.u32 %v2612, 15
        %v2677 = vshrl.u32 %v2613, 15
        %v2678 = vshrl.u32 %v2614, 15
        %v2679 = vxor.u32 %v2551, %v2615
        %v2680 = vxor.u32 %v2552, %v2616
        %v2681 = vxor.u32 %v2553, %v2617
        %v2682 = vxor.u32 %v2554, %v2618
        %v2683 = vxor.u32 %v2555, %v2619
        %v2684 = vxor.u32 %v2556, %v2620
        %v2685 = vxor.u32 %v2557, %v2621
        %v2686 = vxor.u32 %v2558, %v2622
        %v2687 = vxor.u32 %v2559, %v2623
        %v2688 = vxor.u32 %v2560, %v2624
        %v2689 = vxor.u32 %v2561, %v2625
        %v2690 = vxor.u32 %v2562, %v2626
        %v2691 = vxor.u32 %v2563, %v2627
        %v2692 = vxor.u32 %v2564, %v2628
        %v2693 = vxor.u32 %v2565, %v2629
        %v2694 = vxor.u32 %v2566, %v2630
        %v2695 = vxor.u32 %v2567, %v2631
        %v2696 = vxor.u32 %v2568, %v2632
        %v2697 = vxor.u32 %v2569, %v2633
        %v2698 = vxor.u32 %v2570, %v2634
        %v2699 = vxor.u32 %v2571, %v2635
        %v2700 = vxor.u32 %v2572, %v2636
        %v2701 = vxor.u32 %v2573, %v2637
        %v2702 = vxor.u32 %v2574, %v2638
        %v2703 = vxor.u32 %v2575, %v2639
        %v2704 = vxor.u32 %v2576, %v2640
        %v2705 = vxor.u32 %v2577, %v2641
        %v2706 = vxor.u32 %v2578, %v2642
        %v2707 = vxor.u32 %v2579, %v2643
        %v2708 = vxor.u32 %v2580, %v2644
        %v2709 = vxor.u32 %v2581, %v2645
        %v2710 = vxor.u32 %v2582, %v2646
        %v2711 = vxor.u32 %v2583, %v2647
        %v2712 = vxor.u32 %v2584, %v2648
        %v2713 = vxor.u32 %v2585, %v2649
        %v2714 = vxor.u32 %v2586, %v2650
        %v2715 = vxor.u32 %v2587, %v2651
        %v2716 = vxor.u32 %v2588, %v2652
        %v2717 = vxor.u32 %v2589, %v2653
        %v2718 = vxor.u32 %v2590, %v2654
        %v2719 = vxor.u32 %v2591, %v2655
        %v2720 = vxor.u32 %v2592, %v2656
        %v2721 = vxor.u32 %v2593, %v2657
        %v2722 = vxor.u32 %v2594, %v2658
        %v2723 = vxor.u32 %v2595, %v2659
        %v2724 = vxor.u32 %v2596, %v2660
        %v2725 = vxor.u32 %v2597, %v2661
        %v2726 = vxor.u32 %v2598, %v2662
        %v2727 = vxor.u32 %v2599, %v2663
        %v2728 = vxor.u32 %v2600, %v2664
        %v2729 = vxor.u32 %v2601, %v2665
        %v2730 = vxor.u32 %v2602, %v2666
        %v2731 = vxor.u32 %v2603, %v2667
        %v2732 = vxor.u32 %v2604, %v2668
        %v2733 = vxor.u32 %v2605, %v2669
        %v2734 = vxor.u32 %v2606, %v2670
        %v2735 = vxor.u32 %v2607, %v2671
        %v2736 = vxor.u32 %v2608, %v2672
        %v2737 = vxor.u32 %v2609, %v2673
        %v2738 = vxor.u32 %v2610, %v2674
        %v2739 = vxor.u32 %v2611, %v2675
        %v2740 = vxor.u32 %v2612, %v2676
        %v2741 = vxor.u32 %v2613, %v2677
        %v2742 = vxor.u32 %v2614, %v2678
        %v2743 = vmul.u32 %v2679, 2221713035
        %v2744 = vmul.u32 %v2680, 2221713035
        %v2745 = vmul.u32 %v2681, 2221713035
        %v2746 = vmul.u32 %v2682, 2221713035
        %v2747 = vmul.u32 %v2683, 2221713035
        %v2748 = vmul.u32 %v2684, 2221713035
        %v2749 = vmul.u32 %v2685, 2221713035
        %v2750 = vmul.u32 %v2686, 2221713035
        %v2751 = vmul.u32 %v2687, 2221713035
        %v2752 = vmul.u32 %v2688, 2221713035
        %v2753 = vmul.u32 %v2689, 2221713035
        %v2754 = vmul.u32 %v2690, 2221713035
        %v2755 = vmul.u32 %v2691, 2221713035
        %v2756 = vmul.u32 %v2692, 2221713035
        %v2757 = vmul.u32 %v2693, 2221713035
        %v2758 = vmul.u32 %v2694, 2221713035
        %v2759 = vmul.u32 %v2695, 2221713035
        %v2760 = vmul.u32 %v2696, 2221713035
        %v2761 = vmul.u32 %v2697, 2221713035
        %v2762 = vmul.u32 %v2698, 2221713035
        %v2763 = vmul.u32 %v2699, 2221713035
        %v2764 = vmul.u32 %v2700, 2221713035
        %v2765 = vmul.u32 %v2701, 2221713035
        %v2766 = vmul.u32 %v2702, 2221713035
        %v2767 = vmul.u32 %v2703, 2221713035
        %v2768 = vmul.u32 %v2704, 2221713035
        %v2769 = vmul.u32 %v2705, 2221713035
        %v2770 = vmul.u32 %v2706, 2221713035
        %v2771 = vmul.u32 %v2707, 2221713035
        %v2772 = vmul.u32 %v2708, 2221713035
        %v2773 = vmul.u32 %v2709, 2221713035
        %v2774 = vmul.u32 %v2710, 2221713035
        %v2775 = vmul.u32 %v2711, 2221713035
        %v2776 = vmul.u32 %v2712, 2221713035
        %v2777 = vmul.u32 %v2713, 2221713035
        %v2778 = vmul.u32 %v2714, 2221713035
        %v2779 = vmul.u32 %v2715, 2221713035
        %v2780 = vmul.u32 %v2716, 2221713035
        %v2781 = vmul.u32 %v2717, 2221713035
        %v2782 = vmul.u32 %v2718, 2221713035
        %v2783 = vmul.u32 %v2719, 2221713035
        %v2784 = vmul.u32 %v2720, 2221713035
        %v2785 = vmul.u32 %v2721, 2221713035
        %v2786 = vmul.u32 %v2722, 2221713035
        %v2787 = vmul.u32 %v2723, 2221713035
        %v2788 = vmul.u32 %v2724, 2221713035
        %v2789 = vmul.u32 %v2725, 2221713035
        %v2790 = vmul.u32 %v2726, 2221713035
        %v2791 = vmul.u32 %v2727, 2221713035
        %v2792 = vmul.u32 %v2728, 2221713035
        %v2793 = vmul.u32 %v2729, 2221713035
        %v2794 = vmul.u32 %v2730, 2221713035
        %v2795 = vmul.u32 %v2731, 2221713035
        %v2796 = vmul.u32 %v2732, 2221713035
        %v2797 = vmul.u32 %v2733, 2221713035
        %v2798 = vmul.u32 %v2734, 2221713035
        %v2799 = vmul.u32 %v2735, 2221713035
        %v2800 = vmul.u32 %v2736, 2221713035
        %v2801 = vmul.u32 %v2737, 2221713035
        %v2802 = vmul.u32 %v2738, 2221713035
        %v2803 = vmul.u32 %v2739, 2221713035
        %v2804 = vmul.u32 %v2740, 2221713035
        %v2805 = vmul.u32 %v2741, 2221713035
        %v2806 = vmul.u32 %v2742, 2221713035
        %v2807 = vshrl.u32 %v2743, 16
        %v2808 = vshrl.u32 %v2744, 16
        %v2809 = vshrl.u32 %v2745, 16
        %v2810 = vshrl.u32 %v2746, 16
        %v2811 = vshrl.u32 %v2747, 16
        %v2812 = vshrl.u32 %v2748, 16
        %v2813 = vshrl.u32 %v2749, 16
        %v2814 = vshrl.u32 %v2750, 16
        %v2815 = vshrl.u32 %v2751, 16
        %v2816 = vshrl.u32 %v2752, 16
        %v2817 = vshrl.u32 %v2753, 16
        %v2818 = vshrl.u32 %v2754, 16
        %v2819 = vshrl.u32 %v2755, 16
        %v2820 = vshrl.u32 %v2756, 16
        %v2821 = vshrl.u32 %v2757, 16
        %v2822 = vshrl.u32 %v2758, 16
        %v2823 = vshrl.u32 %v2759, 16
        %v2824 = vshrl.u32 %v2760, 16
        %v2825 = vshrl.u32 %v2761, 16
        %v2826 = vshrl.u32 %v2762, 16
        %v2827 = vshrl.u32 %v2763, 16
        %v2828 = vshrl.u32 %v2764, 16
        %v2829 = vshrl.u32 %v2765, 16
        %v2830 = vshrl.u32 %v2766, 16
        %v2831 = vshrl.u32 %v2767, 16
        %v2832 = vshrl.u32 %v2768, 16
        %v2833 = vshrl.u32 %v2769, 16
        %v2834 = vshrl.u32 %v2770, 16
        %v2835 = vshrl.u32 %v2771, 16
        %v2836 = vshrl.u32 %v2772, 16
        %v2837 = vshrl.u32 %v2773, 16
        %v2838 = vshrl.u32 %v2774, 16
        %v2839 = vshrl.u32 %v2775, 16
        %v2840 = vshrl.u32 %v2776, 16
        %v2841 = vshrl.u32 %v2777, 16
        %v2842 = vshrl.u32 %v2778, 16
        %v2843 = vshrl.u32 %v2779, 16
        %v2844 = vshrl.u32 %v2780, 16
        %v2845 = vshrl.u32 %v2781, 16
        %v2846 = vshrl.u32 %v2782, 16
        %v2847 = vshrl.u32 %v2783, 16
        %v2848 = vshrl.u32 %v2784, 16
        %v2849 = vshrl.u32 %v2785, 16
        %v2850 = vshrl.u32 %v2786, 16
        %v2851 = vshrl.u32 %v2787, 16
        %v2852 = vshrl.u32 %v2788, 16
        %v2853 = vshrl.u32 %v2789, 16
        %v2854 = vshrl.u32 %v2790, 16
        %v2855 = vshrl.u32 %v2791, 16
        %v2856 = vshrl.u32 %v2792, 16
        %v2857 = vshrl.u32 %v2793, 16
        %v2858 = vshrl.u32 %v2794, 16
        %v2859 = vshrl.u32 %v2795, 16
        %v2860 = vshrl.u32 %v2796, 16
        %v2861 = vshrl.u32 %v2797, 16
        %v2862 = vshrl.u32 %v2798, 16
        %v2863 = vshrl.u32 %v2799, 16
        %v2864 = vshrl.u32 %v2800, 16
        %v2865 = vshrl.u32 %v2801, 16
        %v2866 = vshrl.u32 %v2802, 16
        %v2867 = vshrl.u32 %v2803, 16
        %v2868 = vshrl.u32 %v2804, 16
        %v2869 = vshrl.u32 %v2805, 16
        %v2870 = vshrl.u32 %v2806, 16
        %v2871 = vxor.u32 %v2743, %v2807
        %v2872 = vxor.u32 %v2744, %v2808
        %v2873 = vxor.u32 %v2745, %v2809
        %v2874 = vxor.u32 %v2746, %v2810
        %v2875 = vxor.u32 %v2747, %v2811
        %v2876 = vxor.u32 %v2748, %v2812
        %v2877 = vxor.u32 %v2749, %v2813
        %v2878 = vxor.u32 %v2750, %v2814
        %v2879 = vxor.u32 %v2751, %v2815
        %v2880 = vxor.u32 %v2752, %v2816
        %v2881 = vxor.u32 %v2753, %v2817
        %v2882 = vxor.u32 %v2754, %v2818
        %v2883 = vxor.u32 %v2755, %v2819
        %v2884 = vxor.u32 %v2756, %v2820
        %v2885 = vxor.u32 %v2757, %v2821
        %v2886 = vxor.u32 %v2758, %v2822
        %v2887 = vxor.u32 %v2759, %v2823
        %v2888 = vxor.u32 %v2760, %v2824
        %v2889 = vxor.u32 %v2761, %v2825
        %v2890 = vxor.u32 %v2762, %v2826
        %v2891 = vxor.u32 %v2763, %v2827
        %v2892 = vxor.u32 %v2764, %v2828
        %v2893 = vxor.u32 %v2765, %v2829
        %v2894 = vxor.u32 %v2766, %v2830
        %v2895 = vxor.u32 %v2767, %v2831
        %v2896 = vxor.u32 %v2768, %v2832
        %v2897 = vxor.u32 %v2769, %v2833
        %v2898 = vxor.u32 %v2770, %v2834
        %v2899 = vxor.u32 %v2771, %v2835
        %v2900 = vxor.u32 %v2772, %v2836
        %v2901 = vxor.u32 %v2773, %v2837
        %v2902 = vxor.u32 %v2774, %v2838
        %v2903 = vxor.u32 %v2775, %v2839
        %v2904 = vxor.u32 %v2776, %v2840
        %v2905 = vxor.u32 %v2777, %v2841
        %v2906 = vxor.u32 %v2778, %v2842
        %v2907 = vxor.u32 %v2779, %v2843
        %v2908 = vxor.u32 %v2780, %v2844
        %v2909 = vxor.u32 %v2781, %v2845
        %v2910 = vxor.u32 %v2782, %v2846
        %v2911 = vxor.u32 %v2783, %v2847
        %v2912 = vxor.u32 %v2784, %v2848
        %v2913 = vxor.u32 %v2785, %v2849
        %v2914 = vxor.u32 %v2786, %v2850
        %v2915 = vxor.u32 %v2787, %v2851
        %v2916 = vxor.u32 %v2788, %v2852
        %v2917 = vxor.u32 %v2789, %v2853
        %v2918 = vxor.u32 %v2790, %v2854
        %v2919 = vxor.u32 %v2791, %v2855
        %v2920 = vxor.u32 %v2792, %v2856
        %v2921 = vxor.u32 %v2793, %v2857
        %v2922 = vxor.u32 %v2794, %v2858
        %v2923 = vxor.u32 %v2795, %v2859
        %v2924 = vxor.u32 %v2796, %v2860
        %v2925 = vxor.u32 %v2797, %v2861
        %v2926 = vxor.u32 %v2798, %v2862
        %v2927 = vxor.u32 %v2799, %v2863
        %v2928 = vxor.u32 %v2800, %v2864
        %v2929 = vxor.u32 %v2801, %v2865
        %v2930 = vxor.u32 %v2802, %v2866
        %v2931 = vxor.u32 %v2803, %v2867
        %v2932 = vxor.u32 %v2804, %v2868
        %v2933 = vxor.u32 %v2805, %v2869
        %v2934 = vxor.u32 %v2806, %v2870
        %v2935 = vshrl.u32 %v2871, 1
        %v2936 = vshrl.u32 %v2872, 1
        %v2937 = vshrl.u32 %v2873, 1
        %v2938 = vshrl.u32 %v2874, 1
        %v2939 = vshrl.u32 %v2875, 1
        %v2940 = vshrl.u32 %v2876, 1
        %v2941 = vshrl.u32 %v2877, 1
        %v2942 = vshrl.u32 %v2878, 1
        %v2943 = vshrl.u32 %v2879, 1
        %v2944 = vshrl.u32 %v2880, 1
        %v2945 = vshrl.u32 %v2881, 1
        %v2946 = vshrl.u32 %v2882, 1
        %v2947 = vshrl.u32 %v2883, 1
        %v2948 = vshrl.u32 %v2884, 1
        %v2949 = vshrl.u32 %v2885, 1
        %v2950 = vshrl.u32 %v2886, 1
        %v2951 = vshrl.u32 %v2887, 1
        %v2952 = vshrl.u32 %v2888, 1
        %v2953 = vshrl.u32 %v2889, 1
        %v2954 = vshrl.u32 %v2890, 1
        %v2955 = vshrl.u32 %v2891, 1
        %v2956 = vshrl.u32 %v2892, 1
        %v2957 = vshrl.u32 %v2893, 1
        %v2958 = vshrl.u32 %v2894, 1
        %v2959 = vshrl.u32 %v2895, 1
        %v2960 = vshrl.u32 %v2896, 1
        %v2961 = vshrl.u32 %v2897, 1
        %v2962 = vshrl.u32 %v2898, 1
        %v2963 = vshrl.u32 %v2899, 1
        %v2964 = vshrl.u32 %v2900, 1
        %v2965 = vshrl.u32 %v2901, 1
        %v2966 = vshrl.u32 %v2902, 1
        %v2967 = vshrl.u32 %v2903, 1
        %v2968 = vshrl.u32 %v2904, 1
        %v2969 = vshrl.u32 %v2905, 1
        %v2970 = vshrl.u32 %v2906, 1
        %v2971 = vshrl.u32 %v2907, 1
        %v2972 = vshrl.u32 %v2908, 1
        %v2973 = vshrl.u32 %v2909, 1
        %v2974 = vshrl.u32 %v2910, 1
        %v2975 = vshrl.u32 %v2911, 1
        %v2976 = vshrl.u32 %v2912, 1
        %v2977 = vshrl.u32 %v2913, 1
        %v2978 = vshrl.u32 %v2914, 1
        %v2979 = vshrl.u32 %v2915, 1
        %v2980 = vshrl.u32 %v2916, 1
        %v2981 = vshrl.u32 %v2917, 1
        %v2982 = vshrl.u32 %v2918, 1
        %v2983 = vshrl.u32 %v2919, 1
        %v2984 = vshrl.u32 %v2920, 1
        %v2985 = vshrl.u32 %v2921, 1
        %v2986 = vshrl.u32 %v2922, 1
        %v2987 = vshrl.u32 %v2923, 1
        %v2988 = vshrl.u32 %v2924, 1
        %v2989 = vshrl.u32 %v2925, 1
        %v2990 = vshrl.u32 %v2926, 1
        %v2991 = vshrl.u32 %v2927, 1
        %v2992 = vshrl.u32 %v2928, 1
        %v2993 = vshrl.u32 %v2929, 1
        %v2994 = vshrl.u32 %v2930, 1
        %v2995 = vshrl.u32 %v2931, 1
        %v2996 = vshrl.u32 %v2932, 1
        %v2997 = vshrl.u32 %v2933, 1
        %v2998 = vshrl.u32 %v2934, 1
        %vm2999 = vcmp.lt.u32.totalorder %v2935, 1717986918
        %vm3000 = vcmp.lt.u32.totalorder %v2936, 1717986918
        %vm3001 = vcmp.lt.u32.totalorder %v2937, 1717986918
        %vm3002 = vcmp.lt.u32.totalorder %v2938, 1717986918
        %vm3003 = vcmp.lt.u32.totalorder %v2939, 1717986918
        %vm3004 = vcmp.lt.u32.totalorder %v2940, 1717986918
        %vm3005 = vcmp.lt.u32.totalorder %v2941, 1717986918
        %vm3006 = vcmp.lt.u32.totalorder %v2942, 1717986918
        %vm3007 = vcmp.lt.u32.totalorder %v2943, 1717986918
        %vm3008 = vcmp.lt.u32.totalorder %v2944, 1717986918
        %vm3009 = vcmp.lt.u32.totalorder %v2945, 1717986918
        %vm3010 = vcmp.lt.u32.totalorder %v2946, 1717986918
        %vm3011 = vcmp.lt.u32.totalorder %v2947, 1717986918
        %vm3012 = vcmp.lt.u32.totalorder %v2948, 1717986918
        %vm3013 = vcmp.lt.u32.totalorder %v2949, 1717986918
        %vm3014 = vcmp.lt.u32.totalorder %v2950, 1717986918
        %vm3015 = vcmp.lt.u32.totalorder %v2951, 1717986918
        %vm3016 = vcmp.lt.u32.totalorder %v2952, 1717986918
        %vm3017 = vcmp.lt.u32.totalorder %v2953, 1717986918
        %vm3018 = vcmp.lt.u32.totalorder %v2954, 1717986918
        %vm3019 = vcmp.lt.u32.totalorder %v2955, 1717986918
        %vm3020 = vcmp.lt.u32.totalorder %v2956, 1717986918
        %vm3021 = vcmp.lt.u32.totalorder %v2957, 1717986918
        %vm3022 = vcmp.lt.u32.totalorder %v2958, 1717986918
        %vm3023 = vcmp.lt.u32.totalorder %v2959, 1717986918
        %vm3024 = vcmp.lt.u32.totalorder %v2960, 1717986918
        %vm3025 = vcmp.lt.u32.totalorder %v2961, 1717986918
        %vm3026 = vcmp.lt.u32.totalorder %v2962, 1717986918
        %vm3027 = vcmp.lt.u32.totalorder %v2963, 1717986918
        %vm3028 = vcmp.lt.u32.totalorder %v2964, 1717986918
        %vm3029 = vcmp.lt.u32.totalorder %v2965, 1717986918
        %vm3030 = vcmp.lt.u32.totalorder %v2966, 1717986918
        %vm3031 = vcmp.lt.u32.totalorder %v2967, 1717986918
        %vm3032 = vcmp.lt.u32.totalorder %v2968, 1717986918
        %vm3033 = vcmp.lt.u32.totalorder %v2969, 1717986918
        %vm3034 = vcmp.lt.u32.totalorder %v2970, 1717986918
        %vm3035 = vcmp.lt.u32.totalorder %v2971, 1717986918
        %vm3036 = vcmp.lt.u32.totalorder %v2972, 1717986918
        %vm3037 = vcmp.lt.u32.totalorder %v2973, 1717986918
        %vm3038 = vcmp.lt.u32.totalorder %v2974, 1717986918
        %vm3039 = vcmp.lt.u32.totalorder %v2975, 1717986918
        %vm3040 = vcmp.lt.u32.totalorder %v2976, 1717986918
        %vm3041 = vcmp.lt.u32.totalorder %v2977, 1717986918
        %vm3042 = vcmp.lt.u32.totalorder %v2978, 1717986918
        %vm3043 = vcmp.lt.u32.totalorder %v2979, 1717986918
        %vm3044 = vcmp.lt.u32.totalorder %v2980, 1717986918
        %vm3045 = vcmp.lt.u32.totalorder %v2981, 1717986918
        %vm3046 = vcmp.lt.u32.totalorder %v2982, 1717986918
        %vm3047 = vcmp.lt.u32.totalorder %v2983, 1717986918
        %vm3048 = vcmp.lt.u32.totalorder %v2984, 1717986918
        %vm3049 = vcmp.lt.u32.totalorder %v2985, 1717986918
        %vm3050 = vcmp.lt.u32.totalorder %v2986, 1717986918
        %vm3051 = vcmp.lt.u32.totalorder %v2987, 1717986918
        %vm3052 = vcmp.lt.u32.totalorder %v2988, 1717986918
        %vm3053 = vcmp.lt.u32.totalorder %v2989, 1717986918
        %vm3054 = vcmp.lt.u32.totalorder %v2990, 1717986918
        %vm3055 = vcmp.lt.u32.totalorder %v2991, 1717986918
        %vm3056 = vcmp.lt.u32.totalorder %v2992, 1717986918
        %vm3057 = vcmp.lt.u32.totalorder %v2993, 1717986918
        %vm3058 = vcmp.lt.u32.totalorder %v2994, 1717986918
        %vm3059 = vcmp.lt.u32.totalorder %v2995, 1717986918
        %vm3060 = vcmp.lt.u32.totalorder %v2996, 1717986918
        %vm3061 = vcmp.lt.u32.totalorder %v2997, 1717986918
        %vm3062 = vcmp.lt.u32.totalorder %v2998, 1717986918
        %v3063 = vmul.f32 %v2172, 1.25
        %v3064 = vmul.f32 %v2173, 1.25
        %v3065 = vmul.f32 %v2174, 1.25
        %v3066 = vmul.f32 %v2175, 1.25
        %v3067 = vmul.f32 %v2176, 1.25
        %v3068 = vmul.f32 %v2177, 1.25
        %v3069 = vmul.f32 %v2178, 1.25
        %v3070 = vmul.f32 %v2179, 1.25
        %v3071 = vmul.f32 %v2180, 1.25
        %v3072 = vmul.f32 %v2181, 1.25
        %v3073 = vmul.f32 %v2182, 1.25
        %v3074 = vmul.f32 %v2183, 1.25
        %v3075 = vmul.f32 %v2184, 1.25
        %v3076 = vmul.f32 %v2185, 1.25
        %v3077 = vmul.f32 %v2186, 1.25
        %v3078 = vmul.f32 %v2187, 1.25
        %v3079 = vmul.f32 %v2188, 1.25
        %v3080 = vmul.f32 %v2189, 1.25
        %v3081 = vmul.f32 %v2190, 1.25
        %v3082 = vmul.f32 %v2191, 1.25
        %v3083 = vmul.f32 %v2192, 1.25
        %v3084 = vmul.f32 %v2193, 1.25
        %v3085 = vmul.f32 %v2194, 1.25
        %v3086 = vmul.f32 %v2195, 1.25
        %v3087 = vmul.f32 %v2196, 1.25
        %v3088 = vmul.f32 %v2197, 1.25
        %v3089 = vmul.f32 %v2198, 1.25
        %v3090 = vmul.f32 %v2199, 1.25
        %v3091 = vmul.f32 %v2200, 1.25
        %v3092 = vmul.f32 %v2201, 1.25
        %v3093 = vmul.f32 %v2202, 1.25
        %v3094 = vmul.f32 %v2203, 1.25
        %v3095 = vmul.f32 %v2204, 1.25
        %v3096 = vmul.f32 %v2205, 1.25
        %v3097 = vmul.f32 %v2206, 1.25
        %v3098 = vmul.f32 %v2207, 1.25
        %v3099 = vmul.f32 %v2208, 1.25
        %v3100 = vmul.f32 %v2209, 1.25
        %v3101 = vmul.f32 %v2210, 1.25
        %v3102 = vmul.f32 %v2211, 1.25
        %v3103 = vmul.f32 %v2212, 1.25
        %v3104 = vmul.f32 %v2213, 1.25
        %v3105 = vmul.f32 %v2214, 1.25
        %v3106 = vmul.f32 %v2215, 1.25
        %v3107 = vmul.f32 %v2216, 1.25
        %v3108 = vmul.f32 %v2217, 1.25
        %v3109 = vmul.f32 %v2218, 1.25
        %v3110 = vmul.f32 %v2219, 1.25
        %v3111 = vmul.f32 %v2220, 1.25
        %v3112 = vmul.f32 %v2221, 1.25
        %v3113 = vmul.f32 %v2222, 1.25
        %v3114 = vmul.f32 %v2223, 1.25
        %v3115 = vmul.f32 %v2224, 1.25
        %v3116 = vmul.f32 %v2225, 1.25
        %v3117 = vmul.f32 %v2226, 1.25
        %v3118 = vmul.f32 %v2227, 1.25
        %v3119 = vmul.f32 %v2228, 1.25
        %v3120 = vmul.f32 %v2229, 1.25
        %v3121 = vmul.f32 %v2230, 1.25
        %v3122 = vmul.f32 %v2231, 1.25
        %v3123 = vmul.f32 %v2232, 1.25
        %v3124 = vmul.f32 %v2233, 1.25
        %v3125 = vmul.f32 %v2234, 1.25
        %v3126 = vmul.f32 %v2235, 1.25
        %v3127 = vsel %vm2999, %v3063, 0.0
        %v3128 = vsel %vm3000, %v3064, 0.0
        %v3129 = vsel %vm3001, %v3065, 0.0
        %v3130 = vsel %vm3002, %v3066, 0.0
        %v3131 = vsel %vm3003, %v3067, 0.0
        %v3132 = vsel %vm3004, %v3068, 0.0
        %v3133 = vsel %vm3005, %v3069, 0.0
        %v3134 = vsel %vm3006, %v3070, 0.0
        %v3135 = vsel %vm3007, %v3071, 0.0
        %v3136 = vsel %vm3008, %v3072, 0.0
        %v3137 = vsel %vm3009, %v3073, 0.0
        %v3138 = vsel %vm3010, %v3074, 0.0
        %v3139 = vsel %vm3011, %v3075, 0.0
        %v3140 = vsel %vm3012, %v3076, 0.0
        %v3141 = vsel %vm3013, %v3077, 0.0
        %v3142 = vsel %vm3014, %v3078, 0.0
        %v3143 = vsel %vm3015, %v3079, 0.0
        %v3144 = vsel %vm3016, %v3080, 0.0
        %v3145 = vsel %vm3017, %v3081, 0.0
        %v3146 = vsel %vm3018, %v3082, 0.0
        %v3147 = vsel %vm3019, %v3083, 0.0
        %v3148 = vsel %vm3020, %v3084, 0.0
        %v3149 = vsel %vm3021, %v3085, 0.0
        %v3150 = vsel %vm3022, %v3086, 0.0
        %v3151 = vsel %vm3023, %v3087, 0.0
        %v3152 = vsel %vm3024, %v3088, 0.0
        %v3153 = vsel %vm3025, %v3089, 0.0
        %v3154 = vsel %vm3026, %v3090, 0.0
        %v3155 = vsel %vm3027, %v3091, 0.0
        %v3156 = vsel %vm3028, %v3092, 0.0
        %v3157 = vsel %vm3029, %v3093, 0.0
        %v3158 = vsel %vm3030, %v3094, 0.0
        %v3159 = vsel %vm3031, %v3095, 0.0
        %v3160 = vsel %vm3032, %v3096, 0.0
        %v3161 = vsel %vm3033, %v3097, 0.0
        %v3162 = vsel %vm3034, %v3098, 0.0
        %v3163 = vsel %vm3035, %v3099, 0.0
        %v3164 = vsel %vm3036, %v3100, 0.0
        %v3165 = vsel %vm3037, %v3101, 0.0
        %v3166 = vsel %vm3038, %v3102, 0.0
        %v3167 = vsel %vm3039, %v3103, 0.0
        %v3168 = vsel %vm3040, %v3104, 0.0
        %v3169 = vsel %vm3041, %v3105, 0.0
        %v3170 = vsel %vm3042, %v3106, 0.0
        %v3171 = vsel %vm3043, %v3107, 0.0
        %v3172 = vsel %vm3044, %v3108, 0.0
        %v3173 = vsel %vm3045, %v3109, 0.0
        %v3174 = vsel %vm3046, %v3110, 0.0
        %v3175 = vsel %vm3047, %v3111, 0.0
        %v3176 = vsel %vm3048, %v3112, 0.0
        %v3177 = vsel %vm3049, %v3113, 0.0
        %v3178 = vsel %vm3050, %v3114, 0.0
        %v3179 = vsel %vm3051, %v3115, 0.0
        %v3180 = vsel %vm3052, %v3116, 0.0
        %v3181 = vsel %vm3053, %v3117, 0.0
        %v3182 = vsel %vm3054, %v3118, 0.0
        %v3183 = vsel %vm3055, %v3119, 0.0
        %v3184 = vsel %vm3056, %v3120, 0.0
        %v3185 = vsel %vm3057, %v3121, 0.0
        %v3186 = vsel %vm3058, %v3122, 0.0
        %v3187 = vsel %vm3059, %v3123, 0.0
        %v3188 = vsel %vm3060, %v3124, 0.0
        %v3189 = vsel %vm3061, %v3125, 0.0
        %v3190 = vsel %vm3062, %v3126, 0.0
        %v3191 = vld [vmem:[#allocation10] sm:$0xff]
        %v3192 = vld [vmem:[#allocation10 + $0x8] sm:$0xff]
        %v3193 = vld [vmem:[#allocation10 + $0x10] sm:$0xff]
        %v3194 = vld [vmem:[#allocation10 + $0x18] sm:$0xff]
        %v3195 = vld [vmem:[#allocation10 + $0x20] sm:$0xff]
        %v3196 = vld [vmem:[#allocation10 + $0x28] sm:$0xff]
        %v3197 = vld [vmem:[#allocation10 + $0x30] sm:$0xff]
        %v3198 = vld [vmem:[#allocation10 + $0x38] sm:$0xff]
        %v3199 = vld [vmem:[#allocation10 + $0x40] sm:$0xff]
        %v3200 = vld [vmem:[#allocation10 + $0x48] sm:$0xff]
        %v3201 = vld [vmem:[#allocation10 + $0x50] sm:$0xff]
        %v3202 = vld [vmem:[#allocation10 + $0x58] sm:$0xff]
        %v3203 = vld [vmem:[#allocation10 + $0x60] sm:$0xff]
        %v3204 = vld [vmem:[#allocation10 + $0x68] sm:$0xff]
        %v3205 = vld [vmem:[#allocation10 + $0x70] sm:$0xff]
        %v3206 = vld [vmem:[#allocation10 + $0x78] sm:$0xff]
        %v3207 = vld [vmem:[#allocation10 + $0x80] sm:$0xff]
        %v3208 = vld [vmem:[#allocation10 + $0x88] sm:$0xff]
        %v3209 = vld [vmem:[#allocation10 + $0x90] sm:$0xff]
        %v3210 = vld [vmem:[#allocation10 + $0x98] sm:$0xff]
        %v3211 = vld [vmem:[#allocation10 + $0xa0] sm:$0xff]
        %v3212 = vld [vmem:[#allocation10 + $0xa8] sm:$0xff]
        %v3213 = vld [vmem:[#allocation10 + $0xb0] sm:$0xff]
        %v3214 = vld [vmem:[#allocation10 + $0xb8] sm:$0xff]
        %v3215 = vld [vmem:[#allocation10 + $0xc0] sm:$0xff]
        %v3216 = vld [vmem:[#allocation10 + $0xc8] sm:$0xff]
        %v3217 = vld [vmem:[#allocation10 + $0xd0] sm:$0xff]
        %v3218 = vld [vmem:[#allocation10 + $0xd8] sm:$0xff]
        %v3219 = vld [vmem:[#allocation10 + $0xe0] sm:$0xff]
        %v3220 = vld [vmem:[#allocation10 + $0xe8] sm:$0xff]
        %v3221 = vld [vmem:[#allocation10 + $0xf0] sm:$0xff]
        %v3222 = vld [vmem:[#allocation10 + $0xf8] sm:$0xff]
        %v3223 = vld [vmem:[#allocation10 + $0x100] sm:$0xff]
        %v3224 = vld [vmem:[#allocation10 + $0x108] sm:$0xff]
        %v3225 = vld [vmem:[#allocation10 + $0x110] sm:$0xff]
        %v3226 = vld [vmem:[#allocation10 + $0x118] sm:$0xff]
        %v3227 = vld [vmem:[#allocation10 + $0x120] sm:$0xff]
        %v3228 = vld [vmem:[#allocation10 + $0x128] sm:$0xff]
        %v3229 = vld [vmem:[#allocation10 + $0x130] sm:$0xff]
        %v3230 = vld [vmem:[#allocation10 + $0x138] sm:$0xff]
        %v3231 = vld [vmem:[#allocation10 + $0x140] sm:$0xff]
        %v3232 = vld [vmem:[#allocation10 + $0x148] sm:$0xff]
        %v3233 = vld [vmem:[#allocation10 + $0x150] sm:$0xff]
        %v3234 = vld [vmem:[#allocation10 + $0x158] sm:$0xff]
        %v3235 = vld [vmem:[#allocation10 + $0x160] sm:$0xff]
        %v3236 = vld [vmem:[#allocation10 + $0x168] sm:$0xff]
        %v3237 = vld [vmem:[#allocation10 + $0x170] sm:$0xff]
        %v3238 = vld [vmem:[#allocation10 + $0x178] sm:$0xff]
        %v3239 = vld [vmem:[#allocation10 + $0x180] sm:$0xff]
        %v3240 = vld [vmem:[#allocation10 + $0x188] sm:$0xff]
        %v3241 = vld [vmem:[#allocation10 + $0x190] sm:$0xff]
        %v3242 = vld [vmem:[#allocation10 + $0x198] sm:$0xff]
        %v3243 = vld [vmem:[#allocation10 + $0x1a0] sm:$0xff]
        %v3244 = vld [vmem:[#allocation10 + $0x1a8] sm:$0xff]
        %v3245 = vld [vmem:[#allocation10 + $0x1b0] sm:$0xff]
        %v3246 = vld [vmem:[#allocation10 + $0x1b8] sm:$0xff]
        %v3247 = vld [vmem:[#allocation10 + $0x1c0] sm:$0xff]
        %v3248 = vld [vmem:[#allocation10 + $0x1c8] sm:$0xff]
        %v3249 = vld [vmem:[#allocation10 + $0x1d0] sm:$0xff]
        %v3250 = vld [vmem:[#allocation10 + $0x1d8] sm:$0xff]
        %v3251 = vld [vmem:[#allocation10 + $0x1e0] sm:$0xff]
        %v3252 = vld [vmem:[#allocation10 + $0x1e8] sm:$0xff]
        %v3253 = vld [vmem:[#allocation10 + $0x1f0] sm:$0xff]
        %v3254 = vld [vmem:[#allocation10 + $0x1f8] sm:$0xff]
        %v3255 = vld [vmem:[#allocation12] sm:$0x1]
        %v3257 = vlaneseq
        %v3258 = vshrl.u32 %v3257, 7
        %v3259 = vsub.s32 0, %v3258
        %v3260 = vrot.slane %v3255, %v3259
        %3262 = vmatprep.subr.mxu0 0.0
        %3263 = vmatpush1.msra.mxu0 %v3206
        %3264 = vmatprep.subr.mxu0 0.0
        %3265 = vmatpush1.msra.mxu0 %v3205
        %3266 = vmatprep.subr.mxu0 0.0
        %3267 = vmatpush1.msra.mxu0 %v3204
        %3268 = vmatprep.subr.mxu0 0.0
        %3269 = vmatpush1.msra.mxu0 %v3203
        %3270 = vmatprep.subr.mxu0 0.0
        %3271 = vmatpush1.msra.mxu0 %v3202
        %3272 = vmatprep.subr.mxu0 0.0
        %3273 = vmatpush1.msra.mxu0 %v3201
        %3274 = vmatprep.subr.mxu0 0.0
        %3275 = vmatpush1.msra.mxu0 %v3200
        %3276 = vmatprep.subr.mxu0 0.0
        %3277 = vmatpush1.msra.mxu0 %v3199
        %3278 = vmatprep.subr.mxu0 0.0
        %3279 = vmatpush1.msra.mxu0 %v3198
        %3280 = vmatprep.subr.mxu0 0.0
        %3281 = vmatpush1.msra.mxu0 %v3197
        %3282 = vmatprep.subr.mxu0 0.0
        %3283 = vmatpush1.msra.mxu0 %v3196
        %3284 = vmatprep.subr.mxu0 0.0
        %3285 = vmatpush1.msra.mxu0 %v3195
        %3286 = vmatprep.subr.mxu0 0.0
        %3287 = vmatpush1.msra.mxu0 %v3194
        %3288 = vmatprep.subr.mxu0 0.0
        %3289 = vmatpush1.msra.mxu0 %v3193
        %3290 = vmatprep.subr.mxu0 0.0
        %3291 = vmatpush1.msra.mxu0 %v3192
        %3292 = vmatprep.subr.mxu0 0.0
        %3293 = vmatpush1.msra.mxu0 %v3191
        %3294 = vmatprep.subr.mxu0 0.0
        %3295 = vmatpush2.msra.mxu0 %v3222
        %3296 = vmatprep.subr.mxu0 0.0
        %3297 = vmatpush2.msra.mxu0 %v3221
        %3298 = vmatprep.subr.mxu0 0.0
        %3299 = vmatpush2.msra.mxu0 %v3220
        %3300 = vmatprep.subr.mxu0 0.0
        %3301 = vmatpush2.msra.mxu0 %v3219
        %3302 = vmatprep.subr.mxu0 0.0
        %3303 = vmatpush2.msra.mxu0 %v3218
        %3304 = vmatprep.subr.mxu0 0.0
        %3305 = vmatpush2.msra.mxu0 %v3217
        %3306 = vmatprep.subr.mxu0 0.0
        %3307 = vmatpush2.msra.mxu0 %v3216
        %3308 = vmatprep.subr.mxu0 0.0
        %3309 = vmatpush2.msra.mxu0 %v3215
        %3310 = vmatprep.subr.mxu0 0.0
        %3311 = vmatpush2.msra.mxu0 %v3214
        %3312 = vmatprep.subr.mxu0 0.0
        %3313 = vmatpush2.msra.mxu0 %v3213
        %3314 = vmatprep.subr.mxu0 0.0
        %3315 = vmatpush2.msra.mxu0 %v3212
        %3316 = vmatprep.subr.mxu0 0.0
        %3317 = vmatpush2.msra.mxu0 %v3211
        %3318 = vmatprep.subr.mxu0 0.0
        %3319 = vmatpush2.msra.mxu0 %v3210
        %3320 = vmatprep.subr.mxu0 0.0
        %3321 = vmatpush2.msra.mxu0 %v3209
        %3322 = vmatprep.subr.mxu0 0.0
        %3323 = vmatpush2.msra.mxu0 %v3208
        %3324 = vmatprep.subr.mxu0 0.0
        %3325 = vmatpush2.msra.mxu0 %v3207
        %3326 = vmatprep.mubr.f32.mxu0 %v3128
        %3327 = vmatmul.mubr.f32.gmra.mxu0 %v3127
        %v3328 = vpop.f32.mrf.mxu0
        %v3329 = vadd.f32 %v3260, %v3328
        %v3330 = vpop.f32.mrf.mxu0
        %3331 = vmatprep.mubr.f32.mxu0 %v3132
        %3332 = vmatmul.mubr.f32.gmra.mxu0 %v3131
        %v3333 = vpop.f32.mrf.mxu0
        %v3334 = vadd.f32 %v3260, %v3333
        %v3335 = vpop.f32.mrf.mxu0
        %3336 = vmatprep.mubr.f32.mxu0 %v3136
        %3337 = vmatmul.mubr.f32.gmra.mxu0 %v3135
        %v3338 = vpop.f32.mrf.mxu0
        %v3339 = vadd.f32 %v3260, %v3338
        %v3340 = vpop.f32.mrf.mxu0
        %3341 = vmatprep.mubr.f32.mxu0 %v3140
        %3342 = vmatmul.mubr.f32.gmra.mxu0 %v3139
        %v3343 = vpop.f32.mrf.mxu0
        %v3344 = vadd.f32 %v3260, %v3343
        %v3345 = vpop.f32.mrf.mxu0
        %3346 = vmatprep.mubr.f32.mxu0 %v3144
        %3347 = vmatmul.mubr.f32.gmra.mxu0 %v3143
        %v3348 = vpop.f32.mrf.mxu0
        %v3349 = vadd.f32 %v3260, %v3348
        %v3350 = vpop.f32.mrf.mxu0
        %3351 = vmatprep.mubr.f32.mxu0 %v3148
        %3352 = vmatmul.mubr.f32.gmra.mxu0 %v3147
        %v3353 = vpop.f32.mrf.mxu0
        %v3354 = vadd.f32 %v3260, %v3353
        %v3355 = vpop.f32.mrf.mxu0
        %3356 = vmatprep.mubr.f32.mxu0 %v3152
        %3357 = vmatmul.mubr.f32.gmra.mxu0 %v3151
        %v3358 = vpop.f32.mrf.mxu0
        %v3359 = vadd.f32 %v3260, %v3358
        %v3360 = vpop.f32.mrf.mxu0
        %3361 = vmatprep.mubr.f32.mxu0 %v3156
        %3362 = vmatmul.mubr.f32.gmra.mxu0 %v3155
        %v3363 = vpop.f32.mrf.mxu0
        %v3364 = vadd.f32 %v3260, %v3363
        %v3365 = vpop.f32.mrf.mxu0
        %3366 = vmatprep.mubr.f32.mxu0 %v3160
        %3367 = vmatmul.mubr.f32.gmra.mxu0 %v3159
        %v3368 = vpop.f32.mrf.mxu0
        %v3369 = vadd.f32 %v3260, %v3368
        %v3370 = vpop.f32.mrf.mxu0
        %3371 = vmatprep.mubr.f32.mxu0 %v3164
        %3372 = vmatmul.mubr.f32.gmra.mxu0 %v3163
        %v3373 = vpop.f32.mrf.mxu0
        %v3374 = vadd.f32 %v3260, %v3373
        %v3375 = vpop.f32.mrf.mxu0
        %3376 = vmatprep.mubr.f32.mxu0 %v3168
        %3377 = vmatmul.mubr.f32.gmra.mxu0 %v3167
        %v3378 = vpop.f32.mrf.mxu0
        %v3379 = vadd.f32 %v3260, %v3378
        %v3380 = vpop.f32.mrf.mxu0
        %3381 = vmatprep.mubr.f32.mxu0 %v3172
        %3382 = vmatmul.mubr.f32.gmra.mxu0 %v3171
        %v3383 = vpop.f32.mrf.mxu0
        %v3384 = vadd.f32 %v3260, %v3383
        %v3385 = vpop.f32.mrf.mxu0
        %3386 = vmatprep.mubr.f32.mxu0 %v3176
        %3387 = vmatmul.mubr.f32.gmra.mxu0 %v3175
        %v3388 = vpop.f32.mrf.mxu0
        %v3389 = vadd.f32 %v3260, %v3388
        %v3390 = vpop.f32.mrf.mxu0
        %3391 = vmatprep.mubr.f32.mxu0 %v3180
        %3392 = vmatmul.mubr.f32.gmra.mxu0 %v3179
        %v3393 = vpop.f32.mrf.mxu0
        %v3394 = vadd.f32 %v3260, %v3393
        %v3395 = vpop.f32.mrf.mxu0
        %3396 = vmatprep.mubr.f32.mxu0 %v3184
        %3397 = vmatmul.mubr.f32.gmra.mxu0 %v3183
        %v3398 = vpop.f32.mrf.mxu0
        %v3399 = vadd.f32 %v3260, %v3398
        %v3400 = vpop.f32.mrf.mxu0
        %3401 = vmatprep.mubr.f32.mxu0 %v3188
        %3402 = vmatmul.mubr.f32.gmra.mxu0 %v3187
        %v3403 = vpop.f32.mrf.mxu0
        %v3404 = vadd.f32 %v3260, %v3403
        %v3405 = vpop.f32.mrf.mxu0
        %3406 = vdwg.mxu0
        %3407 = vmatprep.subr.mxu0 0.0
        %3408 = vmatpush1.msra.mxu0 %v3238
        %3409 = vmatprep.subr.mxu0 0.0
        %3410 = vmatpush1.msra.mxu0 %v3237
        %3411 = vmatprep.subr.mxu0 0.0
        %3412 = vmatpush1.msra.mxu0 %v3236
        %3413 = vmatprep.subr.mxu0 0.0
        %3414 = vmatpush1.msra.mxu0 %v3235
        %3415 = vmatprep.subr.mxu0 0.0
        %3416 = vmatpush1.msra.mxu0 %v3234
        %3417 = vmatprep.subr.mxu0 0.0
        %3418 = vmatpush1.msra.mxu0 %v3233
        %3419 = vmatprep.subr.mxu0 0.0
        %3420 = vmatpush1.msra.mxu0 %v3232
        %3421 = vmatprep.subr.mxu0 0.0
        %3422 = vmatpush1.msra.mxu0 %v3231
        %3423 = vmatprep.subr.mxu0 0.0
        %3424 = vmatpush1.msra.mxu0 %v3230
        %3425 = vmatprep.subr.mxu0 0.0
        %3426 = vmatpush1.msra.mxu0 %v3229
        %3427 = vmatprep.subr.mxu0 0.0
        %3428 = vmatpush1.msra.mxu0 %v3228
        %3429 = vmatprep.subr.mxu0 0.0
        %3430 = vmatpush1.msra.mxu0 %v3227
        %3431 = vmatprep.subr.mxu0 0.0
        %3432 = vmatpush1.msra.mxu0 %v3226
        %3433 = vmatprep.subr.mxu0 0.0
        %3434 = vmatpush1.msra.mxu0 %v3225
        %3435 = vmatprep.subr.mxu0 0.0
        %3436 = vmatpush1.msra.mxu0 %v3224
        %3437 = vmatprep.subr.mxu0 0.0
        %3438 = vmatpush1.msra.mxu0 %v3223
        %3439 = vmatprep.subr.mxu0 0.0
        %3440 = vmatpush2.msra.mxu0 %v3254
        %3441 = vmatprep.subr.mxu0 0.0
        %3442 = vmatpush2.msra.mxu0 %v3253
        %3443 = vmatprep.subr.mxu0 0.0
        %3444 = vmatpush2.msra.mxu0 %v3252
        %3445 = vmatprep.subr.mxu0 0.0
        %3446 = vmatpush2.msra.mxu0 %v3251
        %3447 = vmatprep.subr.mxu0 0.0
        %3448 = vmatpush2.msra.mxu0 %v3250
        %3449 = vmatprep.subr.mxu0 0.0
        %3450 = vmatpush2.msra.mxu0 %v3249
        %3451 = vmatprep.subr.mxu0 0.0
        %3452 = vmatpush2.msra.mxu0 %v3248
        %3453 = vmatprep.subr.mxu0 0.0
        %3454 = vmatpush2.msra.mxu0 %v3247
        %3455 = vmatprep.subr.mxu0 0.0
        %3456 = vmatpush2.msra.mxu0 %v3246
        %3457 = vmatprep.subr.mxu0 0.0
        %3458 = vmatpush2.msra.mxu0 %v3245
        %3459 = vmatprep.subr.mxu0 0.0
        %3460 = vmatpush2.msra.mxu0 %v3244
        %3461 = vmatprep.subr.mxu0 0.0
        %3462 = vmatpush2.msra.mxu0 %v3243
        %3463 = vmatprep.subr.mxu0 0.0
        %3464 = vmatpush2.msra.mxu0 %v3242
        %3465 = vmatprep.subr.mxu0 0.0
        %3466 = vmatpush2.msra.mxu0 %v3241
        %3467 = vmatprep.subr.mxu0 0.0
        %3468 = vmatpush2.msra.mxu0 %v3240
        %3469 = vmatprep.subr.mxu0 0.0
        %3470 = vmatpush2.msra.mxu0 %v3239
        %3471 = vmatprep.mubr.f32.mxu0 %v3130
        %3472 = vmatmul.mubr.f32.gmra.mxu0 %v3129
        %v3473 = vpop.f32.mrf.mxu0
        %v3474 = vadd.f32 %v3329, %v3473
        %v3475 = vpop.f32.mrf.mxu0
        %3476 = vmatprep.mubr.f32.mxu0 %v3134
        %3477 = vmatmul.mubr.f32.gmra.mxu0 %v3133
        %v3478 = vpop.f32.mrf.mxu0
        %v3479 = vadd.f32 %v3334, %v3478
        %v3480 = vpop.f32.mrf.mxu0
        %3481 = vmatprep.mubr.f32.mxu0 %v3138
        %3482 = vmatmul.mubr.f32.gmra.mxu0 %v3137
        %v3483 = vpop.f32.mrf.mxu0
        %v3484 = vadd.f32 %v3339, %v3483
        %v3485 = vpop.f32.mrf.mxu0
        %3486 = vmatprep.mubr.f32.mxu0 %v3142
        %3487 = vmatmul.mubr.f32.gmra.mxu0 %v3141
        %v3488 = vpop.f32.mrf.mxu0
        %v3489 = vadd.f32 %v3344, %v3488
        %v3490 = vpop.f32.mrf.mxu0
        %3491 = vmatprep.mubr.f32.mxu0 %v3146
        %3492 = vmatmul.mubr.f32.gmra.mxu0 %v3145
        %v3493 = vpop.f32.mrf.mxu0
        %v3494 = vadd.f32 %v3349, %v3493
        %v3495 = vpop.f32.mrf.mxu0
        %3496 = vmatprep.mubr.f32.mxu0 %v3150
        %3497 = vmatmul.mubr.f32.gmra.mxu0 %v3149
        %v3498 = vpop.f32.mrf.mxu0
        %v3499 = vadd.f32 %v3354, %v3498
        %v3500 = vpop.f32.mrf.mxu0
        %3501 = vmatprep.mubr.f32.mxu0 %v3154
        %3502 = vmatmul.mubr.f32.gmra.mxu0 %v3153
        %v3503 = vpop.f32.mrf.mxu0
        %v3504 = vadd.f32 %v3359, %v3503
        %v3505 = vpop.f32.mrf.mxu0
        %3506 = vmatprep.mubr.f32.mxu0 %v3158
        %3507 = vmatmul.mubr.f32.gmra.mxu0 %v3157
        %v3508 = vpop.f32.mrf.mxu0
        %v3509 = vadd.f32 %v3364, %v3508
        %v3510 = vpop.f32.mrf.mxu0
        %3511 = vmatprep.mubr.f32.mxu0 %v3162
        %3512 = vmatmul.mubr.f32.gmra.mxu0 %v3161
        %v3513 = vpop.f32.mrf.mxu0
        %v3514 = vadd.f32 %v3369, %v3513
        %v3515 = vpop.f32.mrf.mxu0
        %3516 = vmatprep.mubr.f32.mxu0 %v3166
        %3517 = vmatmul.mubr.f32.gmra.mxu0 %v3165
        %v3518 = vpop.f32.mrf.mxu0
        %v3519 = vadd.f32 %v3374, %v3518
        %v3520 = vpop.f32.mrf.mxu0
        %3521 = vmatprep.mubr.f32.mxu0 %v3170
        %3522 = vmatmul.mubr.f32.gmra.mxu0 %v3169
        %v3523 = vpop.f32.mrf.mxu0
        %v3524 = vadd.f32 %v3379, %v3523
        %v3525 = vpop.f32.mrf.mxu0
        %3526 = vmatprep.mubr.f32.mxu0 %v3174
        %3527 = vmatmul.mubr.f32.gmra.mxu0 %v3173
        %v3528 = vpop.f32.mrf.mxu0
        %v3529 = vadd.f32 %v3384, %v3528
        %v3530 = vpop.f32.mrf.mxu0
        %3531 = vmatprep.mubr.f32.mxu0 %v3178
        %3532 = vmatmul.mubr.f32.gmra.mxu0 %v3177
        %v3533 = vpop.f32.mrf.mxu0
        %v3534 = vadd.f32 %v3389, %v3533
        %v3535 = vpop.f32.mrf.mxu0
        %3536 = vmatprep.mubr.f32.mxu0 %v3182
        %3537 = vmatmul.mubr.f32.gmra.mxu0 %v3181
        %v3538 = vpop.f32.mrf.mxu0
        %v3539 = vadd.f32 %v3394, %v3538
        %v3540 = vpop.f32.mrf.mxu0
        %3541 = vmatprep.mubr.f32.mxu0 %v3186
        %3542 = vmatmul.mubr.f32.gmra.mxu0 %v3185
        %v3543 = vpop.f32.mrf.mxu0
        %v3544 = vadd.f32 %v3399, %v3543
        %v3545 = vpop.f32.mrf.mxu0
        %3546 = vmatprep.mubr.f32.mxu0 %v3190
        %3547 = vmatmul.mubr.f32.gmra.mxu0 %v3189
        %v3548 = vpop.f32.mrf.mxu0
        %v3549 = vadd.f32 %v3404, %v3548
        %v3550 = vpop.f32.mrf.mxu0
        %3551 = vdwg.mxu0
        %v3552 = vxor.u32 %v3474, 2147483648
        %v3553 = vxor.u32 %v3479, 2147483648
        %v3554 = vxor.u32 %v3484, 2147483648
        %v3555 = vxor.u32 %v3489, 2147483648
        %v3556 = vxor.u32 %v3494, 2147483648
        %v3557 = vxor.u32 %v3499, 2147483648
        %v3558 = vxor.u32 %v3504, 2147483648
        %v3559 = vxor.u32 %v3509, 2147483648
        %v3560 = vxor.u32 %v3514, 2147483648
        %v3561 = vxor.u32 %v3519, 2147483648
        %v3562 = vxor.u32 %v3524, 2147483648
        %v3563 = vxor.u32 %v3529, 2147483648
        %v3564 = vxor.u32 %v3534, 2147483648
        %v3565 = vxor.u32 %v3539, 2147483648
        %v3566 = vxor.u32 %v3544, 2147483648
        %v3567 = vxor.u32 %v3549, 2147483648
        %v3568 = vmul.f32 %v3552, 1.442695
        %v3569 = vpow.pop %v3568
        %v3570 = vmul.f32 %v3553, 1.442695
        %v3571 = vpow.pop %v3570
        %v3572 = vmul.f32 %v3554, 1.442695
        %v3573 = vpow.pop %v3572
        %v3574 = vmul.f32 %v3555, 1.442695
        %v3575 = vpow.pop %v3574
        %v3576 = vmul.f32 %v3556, 1.442695
        %v3577 = vpow.pop %v3576
        %v3578 = vmul.f32 %v3557, 1.442695
        %v3579 = vpow.pop %v3578
        %v3580 = vmul.f32 %v3558, 1.442695
        %v3581 = vpow.pop %v3580
        %v3582 = vmul.f32 %v3559, 1.442695
        %v3583 = vpow.pop %v3582
        %v3584 = vmul.f32 %v3560, 1.442695
        %v3585 = vpow.pop %v3584
        %v3586 = vmul.f32 %v3561, 1.442695
        %v3587 = vpow.pop %v3586
        %v3588 = vmul.f32 %v3562, 1.442695
        %v3589 = vpow.pop %v3588
        %v3590 = vmul.f32 %v3563, 1.442695
        %v3591 = vpow.pop %v3590
        %v3592 = vmul.f32 %v3564, 1.442695
        %v3593 = vpow.pop %v3592
        %v3594 = vmul.f32 %v3565, 1.442695
        %v3595 = vpow.pop %v3594
        %v3596 = vmul.f32 %v3566, 1.442695
        %v3597 = vpow.pop %v3596
        %v3598 = vmul.f32 %v3567, 1.442695
        %v3599 = vpow.pop %v3598
        %v3600 = vadd.f32 %v3569, 1.0
        %v3601 = vadd.f32 %v3571, 1.0
        %v3602 = vadd.f32 %v3573, 1.0
        %v3603 = vadd.f32 %v3575, 1.0
        %v3604 = vadd.f32 %v3577, 1.0
        %v3605 = vadd.f32 %v3579, 1.0
        %v3606 = vadd.f32 %v3581, 1.0
        %v3607 = vadd.f32 %v3583, 1.0
        %v3608 = vadd.f32 %v3585, 1.0
        %v3609 = vadd.f32 %v3587, 1.0
        %v3610 = vadd.f32 %v3589, 1.0
        %v3611 = vadd.f32 %v3591, 1.0
        %v3612 = vadd.f32 %v3593, 1.0
        %v3613 = vadd.f32 %v3595, 1.0
        %v3614 = vadd.f32 %v3597, 1.0
        %v3615 = vadd.f32 %v3599, 1.0
        %v3616 = vrcp.pop %v3600
        %v3617 = vmul.f32 1.0, %v3616
        %v3618 = vrcp.pop %v3601
        %v3619 = vmul.f32 1.0, %v3618
        %v3620 = vrcp.pop %v3602
        %v3621 = vmul.f32 1.0, %v3620
        %v3622 = vrcp.pop %v3603
        %v3623 = vmul.f32 1.0, %v3622
        %v3624 = vrcp.pop %v3604
        %v3625 = vmul.f32 1.0, %v3624
        %v3626 = vrcp.pop %v3605
        %v3627 = vmul.f32 1.0, %v3626
        %v3628 = vrcp.pop %v3606
        %v3629 = vmul.f32 1.0, %v3628
        %v3630 = vrcp.pop %v3607
        %v3631 = vmul.f32 1.0, %v3630
        %v3632 = vrcp.pop %v3608
        %v3633 = vmul.f32 1.0, %v3632
        %v3634 = vrcp.pop %v3609
        %v3635 = vmul.f32 1.0, %v3634
        %v3636 = vrcp.pop %v3610
        %v3637 = vmul.f32 1.0, %v3636
        %v3638 = vrcp.pop %v3611
        %v3639 = vmul.f32 1.0, %v3638
        %v3640 = vrcp.pop %v3612
        %v3641 = vmul.f32 1.0, %v3640
        %v3642 = vrcp.pop %v3613
        %v3643 = vmul.f32 1.0, %v3642
        %v3644 = vrcp.pop %v3614
        %v3645 = vmul.f32 1.0, %v3644
        %v3646 = vrcp.pop %v3615
        %v3647 = vmul.f32 1.0, %v3646
        %v3648 = vmul.f32 %v3617, 10000.0
        %v3649 = vmul.f32 %v3619, 10000.0
        %v3650 = vmul.f32 %v3621, 10000.0
        %v3651 = vmul.f32 %v3623, 10000.0
        %v3652 = vmul.f32 %v3625, 10000.0
        %v3653 = vmul.f32 %v3627, 10000.0
        %v3654 = vmul.f32 %v3629, 10000.0
        %v3655 = vmul.f32 %v3631, 10000.0
        %v3656 = vmul.f32 %v3633, 10000.0
        %v3657 = vmul.f32 %v3635, 10000.0
        %v3658 = vmul.f32 %v3637, 10000.0
        %v3659 = vmul.f32 %v3639, 10000.0
        %v3660 = vmul.f32 %v3641, 10000.0
        %v3661 = vmul.f32 %v3643, 10000.0
        %v3662 = vmul.f32 %v3645, 10000.0
        %v3663 = vmul.f32 %v3647, 10000.0
        %v3664 = vround.ne.pseudo %v3648
        %v3665 = vround.ne.pseudo %v3649
        %v3666 = vround.ne.pseudo %v3650
        %v3667 = vround.ne.pseudo %v3651
        %v3668 = vround.ne.pseudo %v3652
        %v3669 = vround.ne.pseudo %v3653
        %v3670 = vround.ne.pseudo %v3654
        %v3671 = vround.ne.pseudo %v3655
        %v3672 = vround.ne.pseudo %v3656
        %v3673 = vround.ne.pseudo %v3657
        %v3674 = vround.ne.pseudo %v3658
        %v3675 = vround.ne.pseudo %v3659
        %v3676 = vround.ne.pseudo %v3660
        %v3677 = vround.ne.pseudo %v3661
        %v3678 = vround.ne.pseudo %v3662
        %v3679 = vround.ne.pseudo %v3663
        %v3680 = vrcp.pop 10000.0
        %v3681 = vmul.f32 %v3664, %v3680
        %v3682 = vmul.f32 %v3665, %v3680
        %v3683 = vmul.f32 %v3666, %v3680
        %v3684 = vmul.f32 %v3667, %v3680
        %v3685 = vmul.f32 %v3668, %v3680
        %v3686 = vmul.f32 %v3669, %v3680
        %v3687 = vmul.f32 %v3670, %v3680
        %v3688 = vmul.f32 %v3671, %v3680
        %v3689 = vmul.f32 %v3672, %v3680
        %v3690 = vmul.f32 %v3673, %v3680
        %v3691 = vmul.f32 %v3674, %v3680
        %v3692 = vmul.f32 %v3675, %v3680
        %v3693 = vmul.f32 %v3676, %v3680
        %v3694 = vmul.f32 %v3677, %v3680
        %v3695 = vmul.f32 %v3678, %v3680
        %v3696 = vmul.f32 %v3679, %v3680
        %3697 = vst [vmem:[%s299] sm:$0xff] %v3681
        %3698 = vst [vmem:[%s299 + $0x8] sm:$0xff] %v3682
        %3699 = vst [vmem:[%s299 + $0x10] sm:$0xff] %v3683
        %3700 = vst [vmem:[%s299 + $0x18] sm:$0xff] %v3684
        %3701 = vst [vmem:[%s299 + $0x20] sm:$0xff] %v3685
        %3702 = vst [vmem:[%s299 + $0x28] sm:$0xff] %v3686
        %3703 = vst [vmem:[%s299 + $0x30] sm:$0xff] %v3687
        %3704 = vst [vmem:[%s299 + $0x38] sm:$0xff] %v3688
        %3705 = vst [vmem:[%s299 + $0x40] sm:$0xff] %v3689
        %3706 = vst [vmem:[%s299 + $0x48] sm:$0xff] %v3690
        %3707 = vst [vmem:[%s299 + $0x50] sm:$0xff] %v3691
        %3708 = vst [vmem:[%s299 + $0x58] sm:$0xff] %v3692
        %3709 = vst [vmem:[%s299 + $0x60] sm:$0xff] %v3693
        %3710 = vst [vmem:[%s299 + $0x68] sm:$0xff] %v3694
        %3711 = vst [vmem:[%s299 + $0x70] sm:$0xff] %v3695
        %3712 = vst [vmem:[%s299 + $0x78] sm:$0xff] %v3696
        %s3713 = sand.u32 %s144, 1
        %s3714 = scalar_lea.sflag [#allocation6], %s3713
        %s3715 = sand.u32 %s144, 1
        %s3716 = smul.addr %s3715, 128
        %s3717 = scalar_lea.vmem [#allocation13], %s3716
        // Predicated region
        $region61: #{tpu_custom_call.1} parent=39 // pred_check
          %p3718 = pneg %p154
        $region62: #{tpu_custom_call.1} parent=39 // pred_check_branch
          %3720 = sbr.rel (%p3718) target = $region64
        $region63: #{tpu_custom_call.1} parent=39 // pred_region
          %s3721 = smul.u32 16, %s26
          %s3723 = ssub.s32 2048, 2048
          %3724 = vsyncadd %s3714, %s3723
          %s3725 = smul.addr %s3721, 128
          %s3726 = scalar_lea.hbm %s6, %s3725
          %s3727 = sshll.u32 %s3717, 4
          %s3728 = int_to_ptr.vmem [resolvable:$true] %s3727
          %3733 = dma.vmem_to_hbm [thread:$0]  %s3728, 2048, %s3726, %s3714, 128, 128, 8
        $region64: #{tpu_custom_call.1} parent=39 // pred_fallthru
          _
      $region40: #{tpu_custom_call.1} parent=5 // pred_fallthru
        _
      %p3734 = scmp.le.s32.totalorder 2, %s21
      // Predicated region
      $region65: #{tpu_custom_call.1} parent=5 // pred_check
        %p3735 = pneg %p3734
      $region66: #{tpu_custom_call.1} parent=5 // pred_check_branch
        %3737 = sbr.rel (%p3735) target = $region68
      $region67: #{tpu_custom_call.1} parent=5 // pred_region
        %s3738 = ssub.s32 %s21, 2
        // Predicated region
        $region69: #{tpu_custom_call.1} parent=67 // pred_check
          %p3739 = pneg %p160
        $region70: #{tpu_custom_call.1} parent=67 // pred_check_branch
          %3741 = sbr.rel (%p3739) target = $region72
        $region71: #{tpu_custom_call.1} parent=67 // pred_region
          %s3742 = sand.u32 %s145, 1
          %s3743 = scalar_lea.sflag [#allocation6], %s3742
          %s3744 = sand.u32 %s145, 1
          %s3745 = smul.addr %s3744, 128
          %s3746 = scalar_lea.vmem [#allocation13], %s3745
          %3747 = dma.done %s3743, 2048
        $region72: #{tpu_custom_call.1} parent=67 // pred_fallthru
          _
      $region68: #{tpu_custom_call.1} parent=5 // pred_fallthru
        _
    $region6: #{tpu_custom_call.1} parent=1 // loop_footer
      %s25 = sadd.s32 1, %s21
    $region7: #{tpu_custom_call.1} parent=1 // loop_footer_branch
      %20 = sbr.rel target = $region3
    $region8: #{tpu_custom_call.1} parent=1 // loop_exit
      _
    %3748 = vsyncpa [#allocation5], 1
    %s3749 = scalar_lea.sflag [#allocation5], 1
    %3750 = vsyncpa %s3749, 1
    %3751 = vsyncpa [#allocation8], 1
    %3752 = vsyncpa [#allocation11], 1
    %3753 = vsyncpa [#allocation6], 1
    %s3754 = scalar_lea.sflag [#allocation6], 1
    %3755 = vsyncpa %s3754, 1

</llo_original>
